<compile_context>
chip_gen: v6e
topology: v6e:2x2x1
jax: 0.10.0
libtpu: 0.0.40
codegen_flags: <defaults>
</compile_context>

<pallas_src>
import functools

import jax
import jax.numpy as jnp
import numpy as np
from jax.experimental import pallas as pl
from jax.experimental.pallas import tpu as pltpu

LANE = 128
VMEM_BUDGET = 40 * 1024 * 1024     # conservative: fits under v7x 64 MiB physical
VMEM_LIMIT = 48 * 1024 * 1024      # raised scoped limit (v5e default is 16 MiB)


def _round_up(x, m):
    return ((x + m - 1) // m) * m


# ---------------------------------------------------------------------------
# Phase 1: conv3x3 (stride 1) over TH output rows per step + per-block partial
# BatchNorm statistics.  Grid: (N, Ho_p // TH).
# ---------------------------------------------------------------------------
def conv_stats_kernel(x_ref, halo_ref, w_ref, conv_ref, stats_ref, xbuf,
                      *, th, wo, ho, needs_mask):
    # x_ref    : (1, TH, Wp, Cin_p)    padded input rows [hb*TH, hb*TH+TH)
    # halo_ref : (1, 2,  Wp, Cin_p)    padded input rows [hb*TH+TH, +2)
    # w_ref    : (3, 3, Cin_p, Cout_p) resident (constant block index)
    # conv_ref : (1, 1, TH*Wo, Cout_p) conv output block (compute/store dtype)
    # stats_ref: (1, 1, 2, Cout_p) f32 row 0: sum, row 1: sum of squares
    # xbuf     : VMEM (TH+2, Wp, Cin_p) scratch holding the full halo'd block
    cin_p = w_ref.shape[-2]
    cout_p = w_ref.shape[-1]

    # Assemble the TH+2 input rows once; all taps then read shifted windows
    # straight from this VMEM ref (shifted vld, no value relayout).
    xbuf[:th] = x_ref[0]
    xbuf[th:] = halo_ref[0]

    acc = jnp.zeros((th * wo, cout_p), jnp.float32)
    for kh in range(3):                               # static 3x3 unroll
        for kw in range(3):
            patch = xbuf[kh:kh + th, kw:kw + wo, :]   # (TH, Wo, Cin_p)
            patch = patch.reshape(th * wo, cin_p)
            acc = acc + jnp.dot(patch, w_ref[kh, kw],
                                preferred_element_type=jnp.float32)

    conv_ref[0, 0] = acc.astype(conv_ref.dtype)

    if needs_mask:
        # Rows beyond the true Ho (H was padded up to a multiple of TH) must
        # not contribute to the BatchNorm statistics.
        row = (jax.lax.broadcasted_iota(jnp.int32, (th * wo, 1), 0) // wo
               + pl.program_id(1) * th)
        masked = jnp.where(row < ho, acc, 0.0)
    else:
        masked = acc
    s = jnp.sum(masked, axis=0, keepdims=True)
    sq = jnp.sum(masked * acc, axis=0, keepdims=True)
    stats_ref[0, 0] = jnp.concatenate([s, sq], axis=0)        # one (2,C) store


# ---------------------------------------------------------------------------
# Phase 2: y = conv * scale + shift ; ReLU.  Large lane-dense (TM, Cout_p)
# tiles over the flattened conv intermediate.
# ---------------------------------------------------------------------------
def bn_relu_kernel(x_ref, scale_ref, shift_ref, o_ref, *, relu):
    y = x_ref[...].astype(jnp.float32) * scale_ref[...] + shift_ref[...]
    if relu:
        y = jnp.maximum(y, 0.0)
    o_ref[...] = y.astype(o_ref.dtype)


def basic_conv(x_nchw, w_oihw, gamma=None, beta=None, *, eps=1e-5,
               padding_mode="same", relu=True, bn=True,
               compute_dtype=jnp.bfloat16):
    """Matches BasicConv(in, out, kernel_size=3, stride=1, bias=False) forward."""
    N, Cin, H, W = x_nchw.shape
    Cout, Cin_w, KH, KW = w_oihw.shape
    assert Cin_w == Cin
    assert KH == 3 and KW == 3, "specialised for the module default k=3"
    # TODO(synk): stride != 1 and kernel_size != 3 are not implemented
    # (module defaults are stride=1, kernel_size=3).
    pad = (KH - 1) // 2 if padding_mode == "same" else 0

    out_dtype = x_nchw.dtype
    Ho = H + 2 * pad - (KH - 1)
    Wo = W + 2 * pad - (KW - 1)
    Wp = Wo + (KW - 1)

    Cin_p = _round_up(Cin, LANE)
    Cout_p = _round_up(Cout, LANE)
    cbytes = jnp.dtype(compute_dtype).itemsize

    # ---- choose TH (output rows per phase-1 step) under the VMEM budget ----
    def p1_vmem(th):
        return (2 * th * Wp * Cin_p * cbytes           # main block (dbl buffer)
                + 2 * 2 * Wp * Cin_p * cbytes          # halo block
                + 2 * KH * KW * Cin_p * Cout_p * cbytes  # weights
                + 2 * th * Wo * Cout_p * cbytes        # conv out block
                + 2 * 2 * Cout_p * 4                   # stats block
                + (th + 2) * Wp * Cin_p * cbytes       # xbuf scratch
                + th * Wo * Cout_p * 4)                # f32 accumulator

    TH = -(-256 // Wo)                          # target MXU M-dim >= 256
    TH = min(TH, max(1, 2048 // Wo), 32)        # cap accumulator / block rows
    TH = _round_up(max(TH, 2), 2)               # halo block index needs TH even
    if TH > Ho:
        TH = _round_up(Ho, 2)
    while TH > 2 and p1_vmem(TH) > VMEM_BUDGET:
        TH = max(2, _round_up(TH // 2, 2))
    n_hb = -(-Ho // TH)
    TH = _round_up(-(-Ho // n_hb), 2)           # rebalance -> fewer padded rows
    Ho_p = TH * n_hb

    # ---- layout glue: NCHW -> NHWC, halo + channel padding, dtype casts ----
    x = jnp.transpose(x_nchw, (0, 2, 3, 1)).astype(compute_dtype)
    x = jnp.pad(x, ((0, 0), (pad, pad + (Ho_p - Ho)), (pad, pad),
                    (0, Cin_p - Cin)))                          # (N,Ho_p+2,Wp,Cin_p)
    w = jnp.transpose(w_oihw, (2, 3, 1, 0)).astype(compute_dtype)  # HWIO
    w = jnp.pad(w, ((0, 0), (0, 0), (0, Cin_p - Cin), (0, Cout_p - Cout)))

    conv_flops = 2 * N * Ho_p * Wo * KH * KW * Cin_p * Cout_p
    conv_bytes = (N * n_hb * (TH + 2) * Wp * Cin_p * cbytes
                  + KH * KW * Cin_p * Cout_p * cbytes
                  + N * Ho_p * Wo * Cout_p * cbytes
                  + N * n_hb * 2 * Cout_p * 4)

    conv_out, stats = pl.pallas_call(
        functools.partial(conv_stats_kernel, th=TH, wo=Wo, ho=Ho,
                          needs_mask=(Ho_p != Ho)),
        out_shape=(
            jax.ShapeDtypeStruct((N, n_hb, TH * Wo, Cout_p), compute_dtype),
            jax.ShapeDtypeStruct((N, n_hb, 2, Cout_p), jnp.float32)),
        grid=(N, n_hb),
        in_specs=[
            pl.BlockSpec((1, TH, Wp, Cin_p), lambda n, hb: (n, hb, 0, 0)),
            pl.BlockSpec((1, 2, Wp, Cin_p),
                         lambda n, hb: (n, (hb + 1) * (TH // 2), 0, 0)),
            pl.BlockSpec((KH, KW, Cin_p, Cout_p), lambda n, hb: (0, 0, 0, 0)),
        ],
        out_specs=(
            pl.BlockSpec((1, 1, TH * Wo, Cout_p), lambda n, hb: (n, hb, 0, 0)),
            pl.BlockSpec((1, 1, 2, Cout_p), lambda n, hb: (n, hb, 0, 0)),
        ),
        scratch_shapes=[pltpu.VMEM((TH + 2, Wp, Cin_p), compute_dtype)],
        compiler_params=pltpu.CompilerParams(
            dimension_semantics=("parallel", "parallel"),
            vmem_limit_bytes=VMEM_LIMIT),
        cost_estimate=pl.CostEstimate(flops=conv_flops, transcendentals=0,
                                      bytes_accessed=conv_bytes),
    )(x, x, w)

    # ---- finalize global BatchNorm statistics (tiny reduction, f32) ----
    cnt = float(N * Ho * Wo)
    if bn:
        if gamma is None:
            gamma = jnp.ones((Cout,), jnp.float32)
        if beta is None:
            beta = jnp.zeros((Cout,), jnp.float32)
        ssum = jnp.sum(stats, axis=(0, 1))                  # (2, Cout_p)
        mean = ssum[0] / cnt
        # TODO(synk): E[x^2]-mean^2 can cancel for large-mean activations;
        # switch to a shifted second moment if this ever feeds training.
        var = jnp.maximum(ssum[1] / cnt - mean * mean, 0.0)   # biased, as in BN
        inv_std = jax.lax.rsqrt(var + eps)
        gamma_p = jnp.pad(gamma.astype(jnp.float32), (0, Cout_p - Cout))
        beta_p = jnp.pad(beta.astype(jnp.float32), (0, Cout_p - Cout))
        scale = (gamma_p * inv_std).reshape(1, Cout_p)
        shift = (beta_p - mean * gamma_p * inv_std).reshape(1, Cout_p)
    else:
        scale = jnp.ones((1, Cout_p), jnp.float32)
        shift = jnp.zeros((1, Cout_p), jnp.float32)

    # ---- Phase 2: normalize + affine + ReLU over the flattened rows ----
    M_p = N * Ho_p * Wo
    out_item = jnp.dtype(out_dtype).itemsize
    tm_cap = max(8, ((12 << 20) // (2 * Cout_p * (cbytes + out_item))) // 8 * 8)
    TM = max(8, min(4096, tm_cap, _round_up(M_p, 8)))
    conv_flat = conv_out.reshape(M_p, Cout_p)               # free reshape

    y_flat = pl.pallas_call(
        functools.partial(bn_relu_kernel, relu=relu),
        out_shape=jax.ShapeDtypeStruct((M_p, Cout_p), out_dtype),
        grid=(pl.cdiv(M_p, TM),),
        in_specs=[
            pl.BlockSpec((TM, Cout_p), lambda i: (i, 0)),
            pl.BlockSpec((1, Cout_p), lambda i: (0, 0)),
            pl.BlockSpec((1, Cout_p), lambda i: (0, 0)),
        ],
        out_specs=pl.BlockSpec((TM, Cout_p), lambda i: (i, 0)),
        compiler_params=pltpu.CompilerParams(
            dimension_semantics=("parallel",),
            vmem_limit_bytes=VMEM_LIMIT),
        cost_estimate=pl.CostEstimate(
            flops=2 * M_p * Cout_p, transcendentals=0,
            bytes_accessed=M_p * Cout_p * (cbytes + out_item) + 2 * Cout_p * 4),
    )(conv_flat, scale, shift)

    y = y_flat.reshape(N, Ho_p, Wo, Cout_p)[:, :Ho, :, :Cout]
    return jnp.transpose(y, (0, 3, 1, 2))                   # back to NCHW


def reference(x_nchw, w_oihw, gamma, beta, eps=1e-5):
    """Pure-JAX reference (same semantics as the PyTorch module in train mode)."""
    conv = jax.lax.conv_general_dilated(
        x_nchw, w_oihw, window_strides=(1, 1), padding="SAME",
        dimension_numbers=("NCHW", "OIHW", "NCHW"))
    mean = conv.mean(axis=(0, 2, 3), keepdims=True)
    var = conv.var(axis=(0, 2, 3), keepdims=True)           # biased, like BN
    y = (conv - mean) / jnp.sqrt(var + eps)
    y = y * gamma.reshape(1, -1, 1, 1) + beta.reshape(1, -1, 1, 1)
    return jnp.maximum(y, 0.0)


if __name__ == "__main__":
    # BasicConv(in_channels=4, out_channels=8, kernel_size=3) on 2x4x16x16.
    N, Cin, H, W = 2, 4, 16, 16
    Cout, K = 8, 3

    key = jax.random.PRNGKey(0)
    kx, kw_, kg, kb = jax.random.split(key, 4)

    x = jax.random.normal(kx, (N, Cin, H, W), dtype=jnp.float32)
    bound = 1.0 / np.sqrt(Cin * K * K)
    w = jax.random.uniform(kw_, (Cout, Cin, K, K), dtype=jnp.float32,
                           minval=-bound, maxval=bound)
    gamma = 1.0 + 0.1 * jax.random.normal(kg, (Cout,), dtype=jnp.float32)
    beta = 0.1 * jax.random.normal(kb, (Cout,), dtype=jnp.float32)

    ref = jax.block_until_ready(reference(x, w, gamma, beta))

    # Fast path: bf16 MXU feeds + bf16 intermediate (f32 accumulation/stats).
    out_fast = jax.block_until_ready(basic_conv(x, w, gamma, beta))
    np.testing.assert_allclose(np.asarray(out_fast), np.asarray(ref),
                               rtol=5e-2, atol=5e-2)

    # Exact path: f32 feeds / f32 intermediate must match tightly.
    out_exact = jax.block_until_ready(
        basic_conv(x, w, gamma, beta, compute_dtype=jnp.float32))
    np.testing.assert_allclose(np.asarray(out_exact), np.asarray(ref),
                               rtol=2e-4, atol=2e-4)

    print("KERNEL_OK")
</pallas_src>

<mosaic_0001>
module attributes {stable_mosaic.version = 11 : i64} {
  func.func @conv_stats_kernel(%arg0: i32, %arg1: i32, %arg2: memref<1x16x18x128xbf16, #tpu.memory_space<vmem>>, %arg3: memref<1x2x18x128xbf16, #tpu.memory_space<vmem>>, %arg4: memref<3x3x128x128xbf16, #tpu.memory_space<vmem>>, %arg5: memref<1x1x256x128xbf16, #tpu.memory_space<vmem>>, %arg6: memref<1x1x2x128xf32, #tpu.memory_space<vmem>>, %arg7: memref<18x18x128xbf16, #tpu.memory_space<vmem>>) attributes {dimension_semantics = [#tpu.dimension_semantics<parallel>, #tpu.dimension_semantics<parallel>], iteration_bounds = array<i64: 2, 1>, scalar_prefetch = 0 : i64, scratch_operands = 1 : i64, tpu.core_type = #tpu.core_type<tc>, window_params = [{transform_indices = @transform_0, window_bounds = array<i64: 1, 16, 18, 128>}, {transform_indices = @transform_1, window_bounds = array<i64: 1, 2, 18, 128>}, {pipeline_mode = #tpu.pipeline_mode<synchronous>, transform_indices = @transform_2, window_bounds = array<i64: 3, 3, 128, 128>}, {transform_indices = @transform_3, window_bounds = array<i64: 1, 1, 256, 128>}, {transform_indices = @transform_4, window_bounds = array<i64: 1, 1, 2, 128>}]} {
    %c0 = arith.constant 0 : index
    %c0_0 = arith.constant 0 : index
    %c0_1 = arith.constant 0 : index
    %c0_2 = arith.constant 0 : index
    %0 = vector.load %arg2[%c0, %c0_0, %c0_1, %c0_2] : memref<1x16x18x128xbf16, #tpu.memory_space<vmem>>, vector<1x16x18x128xbf16>
    %1 = vector.shape_cast %0 : vector<1x16x18x128xbf16> to vector<16x18x128xbf16>
    %c0_3 = arith.constant 0 : index
    %c0_4 = arith.constant 0 : index
    %c0_5 = arith.constant 0 : index
    %2 = vector.load %arg7[%c0_3, %c0_4, %c0_5] : memref<18x18x128xbf16, #tpu.memory_space<vmem>>, vector<16x18x128xbf16>
    tpu.vector_store %arg7[%c0_3, %c0_4, %c0_5], %1 {strides = array<i32>} : memref<18x18x128xbf16, #tpu.memory_space<vmem>>, vector<16x18x128xbf16>,
    %c0_6 = arith.constant 0 : index
    %c0_7 = arith.constant 0 : index
    %c0_8 = arith.constant 0 : index
    %c0_9 = arith.constant 0 : index
    %3 = vector.load %arg3[%c0_6, %c0_7, %c0_8, %c0_9] : memref<1x2x18x128xbf16, #tpu.memory_space<vmem>>, vector<1x2x18x128xbf16>
    %4 = vector.shape_cast %3 : vector<1x2x18x128xbf16> to vector<2x18x128xbf16>
    %c16 = arith.constant 16 : index
    %c0_10 = arith.constant 0 : index
    %c0_11 = arith.constant 0 : index
    %5 = vector.load %arg7[%c16, %c0_10, %c0_11] : memref<18x18x128xbf16, #tpu.memory_space<vmem>>, vector<2x18x128xbf16>
    tpu.vector_store %arg7[%c16, %c0_10, %c0_11], %4 {strides = array<i32>} : memref<18x18x128xbf16, #tpu.memory_space<vmem>>, vector<2x18x128xbf16>,
    %cst = arith.constant 0.000000e+00 : f32
    %6 = vector.broadcast %cst : f32 to vector<256x128xf32>
    %c0_12 = arith.constant 0 : index
    %c0_13 = arith.constant 0 : index
    %c0_14 = arith.constant 0 : index
    %7 = vector.load %arg7[%c0_12, %c0_13, %c0_14] : memref<18x18x128xbf16, #tpu.memory_space<vmem>>, vector<16x16x128xbf16>
    %8 = vector.shape_cast %7 : vector<16x16x128xbf16> to vector<256x128xbf16>
    %c0_15 = arith.constant 0 : index
    %c0_16 = arith.constant 0 : index
    %c0_17 = arith.constant 0 : index
    %c0_18 = arith.constant 0 : index
    %9 = vector.load %arg4[%c0_15, %c0_16, %c0_17, %c0_18] : memref<3x3x128x128xbf16, #tpu.memory_space<vmem>>, vector<1x1x128x128xbf16>
    %10 = vector.shape_cast %9 : vector<1x1x128x128xbf16> to vector<128x128xbf16>
    %cst_19 = arith.constant dense<0.000000e+00> : vector<256x128xf32>
    %11 = tpu.matmul %8, %10, %cst_19 {dimension_numbers = #tpu.dot_dimension_numbers<[1], [0], [0], [1], [0, 0, 1, 1], [], []>} : vector<256x128xbf16>, vector<128x128xbf16>, vector<256x128xf32> -> vector<256x128xf32>
    %12 = arith.addf %6, %11 : vector<256x128xf32>
    %c0_20 = arith.constant 0 : index
    %c1 = arith.constant 1 : index
    %c0_21 = arith.constant 0 : index
    %13 = vector.load %arg7[%c0_20, %c1, %c0_21] : memref<18x18x128xbf16, #tpu.memory_space<vmem>>, vector<16x16x128xbf16>
    %14 = vector.shape_cast %13 : vector<16x16x128xbf16> to vector<256x128xbf16>
    %c0_22 = arith.constant 0 : index
    %c1_23 = arith.constant 1 : index
    %c0_24 = arith.constant 0 : index
    %c0_25 = arith.constant 0 : index
    %15 = vector.load %arg4[%c0_22, %c1_23, %c0_24, %c0_25] : memref<3x3x128x128xbf16, #tpu.memory_space<vmem>>, vector<1x1x128x128xbf16>
    %16 = vector.shape_cast %15 : vector<1x1x128x128xbf16> to vector<128x128xbf16>
    %cst_26 = arith.constant dense<0.000000e+00> : vector<256x128xf32>
    %17 = tpu.matmul %14, %16, %cst_26 {dimension_numbers = #tpu.dot_dimension_numbers<[1], [0], [0], [1], [0, 0, 1, 1], [], []>} : vector<256x128xbf16>, vector<128x128xbf16>, vector<256x128xf32> -> vector<256x128xf32>
    %18 = arith.addf %12, %17 : vector<256x128xf32>
    %c0_27 = arith.constant 0 : index
    %c2 = arith.constant 2 : index
    %c0_28 = arith.constant 0 : index
    %19 = vector.load %arg7[%c0_27, %c2, %c0_28] : memref<18x18x128xbf16, #tpu.memory_space<vmem>>, vector<16x16x128xbf16>
    %20 = vector.shape_cast %19 : vector<16x16x128xbf16> to vector<256x128xbf16>
    %c0_29 = arith.constant 0 : index
    %c2_30 = arith.constant 2 : index
    %c0_31 = arith.constant 0 : index
    %c0_32 = arith.constant 0 : index
    %21 = vector.load %arg4[%c0_29, %c2_30, %c0_31, %c0_32] : memref<3x3x128x128xbf16, #tpu.memory_space<vmem>>, vector<1x1x128x128xbf16>
    %22 = vector.shape_cast %21 : vector<1x1x128x128xbf16> to vector<128x128xbf16>
    %cst_33 = arith.constant dense<0.000000e+00> : vector<256x128xf32>
    %23 = tpu.matmul %20, %22, %cst_33 {dimension_numbers = #tpu.dot_dimension_numbers<[1], [0], [0], [1], [0, 0, 1, 1], [], []>} : vector<256x128xbf16>, vector<128x128xbf16>, vector<256x128xf32> -> vector<256x128xf32>
    %24 = arith.addf %18, %23 : vector<256x128xf32>
    %c1_34 = arith.constant 1 : index
    %c0_35 = arith.constant 0 : index
    %c0_36 = arith.constant 0 : index
    %25 = vector.load %arg7[%c1_34, %c0_35, %c0_36] : memref<18x18x128xbf16, #tpu.memory_space<vmem>>, vector<16x16x128xbf16>
    %26 = vector.shape_cast %25 : vector<16x16x128xbf16> to vector<256x128xbf16>
    %c1_37 = arith.constant 1 : index
    %c0_38 = arith.constant 0 : index
    %c0_39 = arith.constant 0 : index
    %c0_40 = arith.constant 0 : index
    %27 = vector.load %arg4[%c1_37, %c0_38, %c0_39, %c0_40] : memref<3x3x128x128xbf16, #tpu.memory_space<vmem>>, vector<1x1x128x128xbf16>
    %28 = vector.shape_cast %27 : vector<1x1x128x128xbf16> to vector<128x128xbf16>
    %cst_41 = arith.constant dense<0.000000e+00> : vector<256x128xf32>
    %29 = tpu.matmul %26, %28, %cst_41 {dimension_numbers = #tpu.dot_dimension_numbers<[1], [0], [0], [1], [0, 0, 1, 1], [], []>} : vector<256x128xbf16>, vector<128x128xbf16>, vector<256x128xf32> -> vector<256x128xf32>
    %30 = arith.addf %24, %29 : vector<256x128xf32>
    %c1_42 = arith.constant 1 : index
    %c1_43 = arith.constant 1 : index
    %c0_44 = arith.constant 0 : index
    %31 = vector.load %arg7[%c1_42, %c1_43, %c0_44] : memref<18x18x128xbf16, #tpu.memory_space<vmem>>, vector<16x16x128xbf16>
    %32 = vector.shape_cast %31 : vector<16x16x128xbf16> to vector<256x128xbf16>
    %c1_45 = arith.constant 1 : index
    %c1_46 = arith.constant 1 : index
    %c0_47 = arith.constant 0 : index
    %c0_48 = arith.constant 0 : index
    %33 = vector.load %arg4[%c1_45, %c1_46, %c0_47, %c0_48] : memref<3x3x128x128xbf16, #tpu.memory_space<vmem>>, vector<1x1x128x128xbf16>
    %34 = vector.shape_cast %33 : vector<1x1x128x128xbf16> to vector<128x128xbf16>
    %cst_49 = arith.constant dense<0.000000e+00> : vector<256x128xf32>
    %35 = tpu.matmul %32, %34, %cst_49 {dimension_numbers = #tpu.dot_dimension_numbers<[1], [0], [0], [1], [0, 0, 1, 1], [], []>} : vector<256x128xbf16>, vector<128x128xbf16>, vector<256x128xf32> -> vector<256x128xf32>
    %36 = arith.addf %30, %35 : vector<256x128xf32>
    %c1_50 = arith.constant 1 : index
    %c2_51 = arith.constant 2 : index
    %c0_52 = arith.constant 0 : index
    %37 = vector.load %arg7[%c1_50, %c2_51, %c0_52] : memref<18x18x128xbf16, #tpu.memory_space<vmem>>, vector<16x16x128xbf16>
    %38 = vector.shape_cast %37 : vector<16x16x128xbf16> to vector<256x128xbf16>
    %c1_53 = arith.constant 1 : index
    %c2_54 = arith.constant 2 : index
    %c0_55 = arith.constant 0 : index
    %c0_56 = arith.constant 0 : index
    %39 = vector.load %arg4[%c1_53, %c2_54, %c0_55, %c0_56] : memref<3x3x128x128xbf16, #tpu.memory_space<vmem>>, vector<1x1x128x128xbf16>
    %40 = vector.shape_cast %39 : vector<1x1x128x128xbf16> to vector<128x128xbf16>
    %cst_57 = arith.constant dense<0.000000e+00> : vector<256x128xf32>
    %41 = tpu.matmul %38, %40, %cst_57 {dimension_numbers = #tpu.dot_dimension_numbers<[1], [0], [0], [1], [0, 0, 1, 1], [], []>} : vector<256x128xbf16>, vector<128x128xbf16>, vector<256x128xf32> -> vector<256x128xf32>
    %42 = arith.addf %36, %41 : vector<256x128xf32>
    %c2_58 = arith.constant 2 : index
    %c0_59 = arith.constant 0 : index
    %c0_60 = arith.constant 0 : index
    %43 = vector.load %arg7[%c2_58, %c0_59, %c0_60] : memref<18x18x128xbf16, #tpu.memory_space<vmem>>, vector<16x16x128xbf16>
    %44 = vector.shape_cast %43 : vector<16x16x128xbf16> to vector<256x128xbf16>
    %c2_61 = arith.constant 2 : index
    %c0_62 = arith.constant 0 : index
    %c0_63 = arith.constant 0 : index
    %c0_64 = arith.constant 0 : index
    %45 = vector.load %arg4[%c2_61, %c0_62, %c0_63, %c0_64] : memref<3x3x128x128xbf16, #tpu.memory_space<vmem>>, vector<1x1x128x128xbf16>
    %46 = vector.shape_cast %45 : vector<1x1x128x128xbf16> to vector<128x128xbf16>
    %cst_65 = arith.constant dense<0.000000e+00> : vector<256x128xf32>
    %47 = tpu.matmul %44, %46, %cst_65 {dimension_numbers = #tpu.dot_dimension_numbers<[1], [0], [0], [1], [0, 0, 1, 1], [], []>} : vector<256x128xbf16>, vector<128x128xbf16>, vector<256x128xf32> -> vector<256x128xf32>
    %48 = arith.addf %42, %47 : vector<256x128xf32>
    %c2_66 = arith.constant 2 : index
    %c1_67 = arith.constant 1 : index
    %c0_68 = arith.constant 0 : index
    %49 = vector.load %arg7[%c2_66, %c1_67, %c0_68] : memref<18x18x128xbf16, #tpu.memory_space<vmem>>, vector<16x16x128xbf16>
    %50 = vector.shape_cast %49 : vector<16x16x128xbf16> to vector<256x128xbf16>
    %c2_69 = arith.constant 2 : index
    %c1_70 = arith.constant 1 : index
    %c0_71 = arith.constant 0 : index
    %c0_72 = arith.constant 0 : index
    %51 = vector.load %arg4[%c2_69, %c1_70, %c0_71, %c0_72] : memref<3x3x128x128xbf16, #tpu.memory_space<vmem>>, vector<1x1x128x128xbf16>
    %52 = vector.shape_cast %51 : vector<1x1x128x128xbf16> to vector<128x128xbf16>
    %cst_73 = arith.constant dense<0.000000e+00> : vector<256x128xf32>
    %53 = tpu.matmul %50, %52, %cst_73 {dimension_numbers = #tpu.dot_dimension_numbers<[1], [0], [0], [1], [0, 0, 1, 1], [], []>} : vector<256x128xbf16>, vector<128x128xbf16>, vector<256x128xf32> -> vector<256x128xf32>
    %54 = arith.addf %48, %53 : vector<256x128xf32>
    %c2_74 = arith.constant 2 : index
    %c2_75 = arith.constant 2 : index
    %c0_76 = arith.constant 0 : index
    %55 = vector.load %arg7[%c2_74, %c2_75, %c0_76] : memref<18x18x128xbf16, #tpu.memory_space<vmem>>, vector<16x16x128xbf16>
    %56 = vector.shape_cast %55 : vector<16x16x128xbf16> to vector<256x128xbf16>
    %c2_77 = arith.constant 2 : index
    %c2_78 = arith.constant 2 : index
    %c0_79 = arith.constant 0 : index
    %c0_80 = arith.constant 0 : index
    %57 = vector.load %arg4[%c2_77, %c2_78, %c0_79, %c0_80] : memref<3x3x128x128xbf16, #tpu.memory_space<vmem>>, vector<1x1x128x128xbf16>
    %58 = vector.shape_cast %57 : vector<1x1x128x128xbf16> to vector<128x128xbf16>
    %cst_81 = arith.constant dense<0.000000e+00> : vector<256x128xf32>
    %59 = tpu.matmul %56, %58, %cst_81 {dimension_numbers = #tpu.dot_dimension_numbers<[1], [0], [0], [1], [0, 0, 1, 1], [], []>} : vector<256x128xbf16>, vector<128x128xbf16>, vector<256x128xf32> -> vector<256x128xf32>
    %60 = arith.addf %54, %59 : vector<256x128xf32>
    %61 = arith.truncf %60 : vector<256x128xf32> to vector<256x128xbf16>
    %c0_82 = arith.constant 0 : index
    %c0_83 = arith.constant 0 : index
    %c0_84 = arith.constant 0 : index
    %c0_85 = arith.constant 0 : index
    %62 = vector.load %arg5[%c0_82, %c0_83, %c0_84, %c0_85] : memref<1x1x256x128xbf16, #tpu.memory_space<vmem>>, vector<1x1x256x128xbf16>
    %63 = vector.shape_cast %62 : vector<1x1x256x128xbf16> to vector<256x128xbf16>
    %64 = vector.shape_cast %61 : vector<256x128xbf16> to vector<1x1x256x128xbf16>
    tpu.vector_store %arg5[%c0_82, %c0_83, %c0_84, %c0_85], %64 {strides = array<i32>} : memref<1x1x256x128xbf16, #tpu.memory_space<vmem>>, vector<1x1x256x128xbf16>,
    %cst_86 = arith.constant dense<0.000000e+00> : vector<128xf32>
    %65 = vector.multi_reduction <add>, %60, %cst_86 [0] : vector<256x128xf32> to vector<128xf32>
    %66 = vector.shape_cast %65 : vector<128xf32> to vector<1x128xf32>
    %67 = arith.mulf %60, %60 : vector<256x128xf32>
    %cst_87 = arith.constant dense<0.000000e+00> : vector<128xf32>
    %68 = vector.multi_reduction <add>, %67, %cst_87 [0] : vector<256x128xf32> to vector<128xf32>
    %69 = vector.shape_cast %68 : vector<128xf32> to vector<1x128xf32>
    %70 = tpu.concatenate %66, %69 in 0 : vector<1x128xf32>, vector<1x128xf32> -> vector<2x128xf32>
    %c0_88 = arith.constant 0 : index
    %c0_89 = arith.constant 0 : index
    %c0_90 = arith.constant 0 : index
    %c0_91 = arith.constant 0 : index
    %71 = vector.load %arg6[%c0_88, %c0_89, %c0_90, %c0_91] : memref<1x1x2x128xf32, #tpu.memory_space<vmem>>, vector<1x1x2x128xf32>
    %72 = vector.shape_cast %71 : vector<1x1x2x128xf32> to vector<2x128xf32>
    %73 = vector.shape_cast %70 : vector<2x128xf32> to vector<1x1x2x128xf32>
    tpu.vector_store %arg6[%c0_88, %c0_89, %c0_90, %c0_91], %73 {strides = array<i32>} : memref<1x1x2x128xf32, #tpu.memory_space<vmem>>, vector<1x1x2x128xf32>,
    return
  }
  func.func @transform_0(%arg0: i32, %arg1: i32) -> (i32, i32, i32, i32) {
    %c0_i32 = arith.constant 0 : i32
    %c0_i32_0 = arith.constant 0 : i32
    %c0_i32_1 = arith.constant 0 : i32
    return %arg0, %arg1, %c0_i32, %c0_i32_0 : i32, i32, i32, i32
  }
  func.func @transform_1(%arg0: i32, %arg1: i32) -> (i32, i32, i32, i32) {
    %c1_i32 = arith.constant 1 : i32
    %0 = arith.addi %arg1, %c1_i32 : i32
    %c8_i32 = arith.constant 8 : i32
    %1 = arith.muli %0, %c8_i32 : i32
    %c0_i32 = arith.constant 0 : i32
    %c0_i32_0 = arith.constant 0 : i32
    %c0_i32_1 = arith.constant 0 : i32
    return %arg0, %1, %c0_i32, %c0_i32_0 : i32, i32, i32, i32
  }
  func.func @transform_2(%arg0: i32, %arg1: i32) -> (i32, i32, i32, i32) {
    %c0_i32 = arith.constant 0 : i32
    %c0_i32_0 = arith.constant 0 : i32
    %c0_i32_1 = arith.constant 0 : i32
    %c0_i32_2 = arith.constant 0 : i32
    %c0_i32_3 = arith.constant 0 : i32
    return %c0_i32, %c0_i32_0, %c0_i32_1, %c0_i32_2 : i32, i32, i32, i32
  }
  func.func @transform_3(%arg0: i32, %arg1: i32) -> (i32, i32, i32, i32) {
    %c0_i32 = arith.constant 0 : i32
    %c0_i32_0 = arith.constant 0 : i32
    %c0_i32_1 = arith.constant 0 : i32
    return %arg0, %arg1, %c0_i32, %c0_i32_0 : i32, i32, i32, i32
  }
  func.func @transform_4(%arg0: i32, %arg1: i32) -> (i32, i32, i32, i32) {
    %c0_i32 = arith.constant 0 : i32
    %c0_i32_0 = arith.constant 0 : i32
    %c0_i32_1 = arith.constant 0 : i32
    return %arg0, %arg1, %c0_i32, %c0_i32_0 : i32, i32, i32, i32
  }
}

</mosaic_0001>

<llo_original>
// kernel: tpu_custom_call.1
$region0: #{tpu_custom_call.1}
  #allocation0 [shape = 'u32[]', space=smem, size = 0x4, offset = 0x4, fixed_abs, tag = 'smem constant byte address 0x4 - core index']
  #allocation1 [shape = 'u32[144,128]{1,0:T(1,128)}', space=vmem, size = 0x12000, scoped, tag = 'internal scratch']
  #allocation2 [shape = 'bf16[18,18,128]{2,1,0:T(8,128)(2,1)}', space=vmem, size = 0x1b000, scoped, tag = 'scratch operand']
  %s0 = inlined_call_operand.vmem [shape: bf16[2,18,18,128], index: 0, kind: input, shape index: {}]
  %s1 = inlined_call_operand.vmem [shape: bf16[2,18,18,128], index: 1, kind: input, shape index: {}]
  %s2 = inlined_call_operand.vmem [shape: bf16[3,3,128,128], index: 2, kind: input, shape index: {}]
  %s3 = inlined_call_operand.hbm [shape: bf16[2,1,256,128], index: 3, kind: output, shape index: {0}]
  %s4 = inlined_call_operand.hbm [shape: f32[2,1,2,128], index: 4, kind: output, shape index: {1}]
  %5 = xla_tuple %s3, %s4
  %s6 = sld [smem:[#allocation0]]
  $region53: #{tpu_custom_call.1} parent=0
    _
  %s8 = ssub.s32 1, %s6
  %s9 = scalar_select 0, %s8, %s6
  $region1: #{tpu_custom_call.1} parent=0
    #allocation3 [shape = 'u8[131072]{0}', space=vmem, size = 0x20000, scoped, tag = 'output window, operand 0']
    #allocation4 [shape = 's32[2]{0}', space=sflag, size = 0x8, scoped, tag = 'scoped memory for tpu_custom_call.1']
    #allocation5 [shape = 'u8[2048]{0}', space=vmem, size = 0x800, scoped, tag = 'output window, operand 1']
    #allocation6 [shape = 's32[2]{0}', space=sflag, size = 0x8, scoped, tag = 'scoped memory for tpu_custom_call.1']
    %10 = vsyncpa [#allocation4], 0
    %s11 = scalar_lea.sflag [#allocation4], 1
    %12 = vsyncpa %s11, 0
    %13 = vsyncpa [#allocation6], 0
    %s14 = scalar_lea.sflag [#allocation6], 1
    %15 = vsyncpa %s14, 0
    loop: start=0, step=1, limit=4
    $region2: #{tpu_custom_call.1} parent=1 // loop_pre_header
      _
    $region3: #{tpu_custom_call.1} parent=1 // loop_header
      %s17 = sphi 0, %s21
      %p18 = scmp.ge.s32.totalorder %s17, 4
      %s24 = sphi 0, %s36
      %s25 = sphi 0, %s32
      %s26 = sphi 0, %s24
      %s27 = sphi 0, %s25
      %s28 = sphi 0, %s26
      %s29 = sphi 0, %s27
      %s41 = sphi 0, %s43
      %s44 = sphi 0, %s41
      %s45 = sphi 0, %s44
      %s61 = sphi 0, %s45
      %s73 = sphi 0, %s75
      %s76 = sphi 0, %s73
      %s77 = sphi 0, %s76
      %s93 = sphi 0, %s77
      %s97 = sphi 0, %s97
      %s99 = sphi 0, %s97
      %s100 = sphi 0, %s99
      %s114 = sphi 0, %s100
      %s122 = sphi 0, %s124
      %s125 = sphi 0, %s122
      %s126 = sphi 0, %s125
      %s142 = sphi 0, %s126
      %s150 = sphi 0, %s152
      %s153 = sphi 0, %s150
      %s154 = sphi 0, %s153
      %s170 = sphi 0, %s154
    $region4: #{tpu_custom_call.1} parent=1 // loop_header_branch
      %20 = sbr.rel (%p18) target = $region8
    $region5: #{tpu_custom_call.1} parent=1 // loop_body
      %s22 = ssub.s32 %s17, 1
      %s23 = ssub.s32 %s17, 2
      %s30 = sadd.s32 1, %s25
      %p31 = scmp.ge.s32.totalorder %s30, 1
      %s32 = scalar_select %p31, 0, %s30
      %s33 = sadd.s32 1, %s24
      %s34 = scalar_select %p31, %s33, %s24
      %p35 = scmp.ge.s32.totalorder %s34, 2
      %s36 = scalar_select %p35, 0, %s34
      %s37 = ssub.s32 %s24, %s36
      %s38 = ssub.s32 %s25, %s32
      %s39 = sor.u32 %s37, %s38
      %p40 = scmp.eq.s32.totalorder %s39, 0
      %s42 = sadd.s32 %s41, 1
      %s43 = scalar_select %p40, %s41, %s42
      %p46 = pneg %p40
      %p47 = scmp.eq.s32.totalorder %s17, 1
      %p48 = por %p46, %p47
      %p49 = scmp.ne.s32.totalorder %s41, %s44
      %p50 = scmp.eq.s32.totalorder %s17, 0
      %p51 = por %p49, %p50
      %p52 = scmp.ne.s32.totalorder %s41, %s44
      %p53 = scmp.eq.s32.totalorder %s22, 1
      %p54 = por %p52, %p53
      %p55 = scmp.ne.s32.totalorder %s44, %s45
      %p56 = scmp.eq.s32.totalorder %s22, 0
      %p57 = por %p55, %p56
      %p58 = scmp.ne.s32.totalorder %s44, %s45
      %p59 = scmp.eq.s32.totalorder %s23, 1
      %p60 = por %p58, %p59
      %p62 = scmp.ne.s32.totalorder %s45, %s61
      %p63 = scmp.eq.s32.totalorder %s23, 0
      %p64 = por %p62, %p63
      %s65 = sadd.s32 %s25, 1
      %s66 = smul.u32 %s65, 8
      %s67 = sadd.s32 %s32, 1
      %s68 = smul.u32 %s67, 8
      %s69 = ssub.s32 %s24, %s36
      %s70 = ssub.s32 %s66, %s68
      %s71 = sor.u32 %s69, %s70
      %p72 = scmp.eq.s32.totalorder %s71, 0
      %s74 = sadd.s32 %s73, 1
      %s75 = scalar_select %p72, %s73, %s74
      %p78 = pneg %p72
      %p79 = scmp.eq.s32.totalorder %s17, 1
      %p80 = por %p78, %p79
      %p81 = scmp.ne.s32.totalorder %s73, %s76
      %p82 = scmp.eq.s32.totalorder %s17, 0
      %p83 = por %p81, %p82
      %p84 = scmp.ne.s32.totalorder %s73, %s76
      %p85 = scmp.eq.s32.totalorder %s22, 1
      %p86 = por %p84, %p85
      %p87 = scmp.ne.s32.totalorder %s76, %s77
      %p88 = scmp.eq.s32.totalorder %s22, 0
      %p89 = por %p87, %p88
      %p90 = scmp.ne.s32.totalorder %s76, %s77
      %p91 = scmp.eq.s32.totalorder %s23, 1
      %p92 = por %p90, %p91
      %p94 = scmp.ne.s32.totalorder %s77, %s93
      %p95 = scmp.eq.s32.totalorder %s23, 0
      %p96 = por %p94, %p95
      %s98 = sadd.s32 %s97, 1
      %p101 = scmp.eq.s32.totalorder %s17, 1
      %p102 = scmp.ne.s32.totalorder %s97, %s99
      %p103 = scmp.eq.s32.totalorder %s17, 0
      %p104 = por %p102, %p103
      %p105 = scmp.ne.s32.totalorder %s97, %s99
      %p106 = scmp.eq.s32.totalorder %s22, 1
      %p107 = por %p105, %p106
      %p108 = scmp.ne.s32.totalorder %s99, %s100
      %p109 = scmp.eq.s32.totalorder %s22, 0
      %p110 = por %p108, %p109
      %p111 = scmp.ne.s32.totalorder %s99, %s100
      %p112 = scmp.eq.s32.totalorder %s23, 1
      %p113 = por %p111, %p112
      %p115 = scmp.ne.s32.totalorder %s100, %s114
      %p116 = scmp.eq.s32.totalorder %s23, 0
      %p117 = por %p115, %p116
      %s118 = ssub.s32 %s24, %s36
      %s119 = ssub.s32 %s25, %s32
      %s120 = sor.u32 %s118, %s119
      %p121 = scmp.eq.s32.totalorder %s120, 0
      %s123 = sadd.s32 %s122, 1
      %s124 = scalar_select %p121, %s122, %s123
      %p127 = pneg %p121
      %p128 = scmp.eq.s32.totalorder %s17, 1
      %p129 = por %p127, %p128
      %p130 = scmp.ne.s32.totalorder %s122, %s125
      %p131 = scmp.eq.s32.totalorder %s17, 0
      %p132 = por %p130, %p131
      %p133 = scmp.ne.s32.totalorder %s122, %s125
      %p134 = scmp.eq.s32.totalorder %s22, 1
      %p135 = por %p133, %p134
      %p136 = scmp.ne.s32.totalorder %s125, %s126
      %p137 = scmp.eq.s32.totalorder %s22, 0
      %p138 = por %p136, %p137
      %p139 = scmp.ne.s32.totalorder %s125, %s126
      %p140 = scmp.eq.s32.totalorder %s23, 1
      %p141 = por %p139, %p140
      %p143 = scmp.ne.s32.totalorder %s126, %s142
      %p144 = scmp.eq.s32.totalorder %s23, 0
      %p145 = por %p143, %p144
      %s146 = ssub.s32 %s24, %s36
      %s147 = ssub.s32 %s25, %s32
      %s148 = sor.u32 %s146, %s147
      %p149 = scmp.eq.s32.totalorder %s148, 0
      %s151 = sadd.s32 %s150, 1
      %s152 = scalar_select %p149, %s150, %s151
      %p155 = pneg %p149
      %p156 = scmp.eq.s32.totalorder %s17, 1
      %p157 = por %p155, %p156
      %p158 = scmp.ne.s32.totalorder %s150, %s153
      %p159 = scmp.eq.s32.totalorder %s17, 0
      %p160 = por %p158, %p159
      %p161 = scmp.ne.s32.totalorder %s150, %s153
      %p162 = scmp.eq.s32.totalorder %s22, 1
      %p163 = por %p161, %p162
      %p164 = scmp.ne.s32.totalorder %s153, %s154
      %p165 = scmp.eq.s32.totalorder %s22, 0
      %p166 = por %p164, %p165
      %p167 = scmp.ne.s32.totalorder %s153, %s154
      %p168 = scmp.eq.s32.totalorder %s23, 1
      %p169 = por %p167, %p168
      %p171 = scmp.ne.s32.totalorder %s154, %s170
      %p172 = scmp.eq.s32.totalorder %s23, 0
      %p173 = por %p171, %p172
      %p174 = scmp.le.s32.totalorder 1, %s17
      %p175 = scmp.lt.s32.totalorder %s17, 3
      %p176 = pnand %p174, %p175
      %p177 = pneg %p176
      // Predicated region
      $region9: #{tpu_custom_call.1} parent=5 // pred_check
        _
      $region10: #{tpu_custom_call.1} parent=5 // pred_check_branch
        %179 = sbr.rel (%p176) target = $region12
      $region11: #{tpu_custom_call.1} parent=5 // pred_region
        %s180 = ssub.s32 %s17, 1
        // Predicated region
        $region13: #{tpu_custom_call.1} parent=11 // pred_check
          %p181 = pneg %p110
        $region14: #{tpu_custom_call.1} parent=11 // pred_check_branch
          %183 = sbr.rel (%p181) target = $region16
        $region15: #{tpu_custom_call.1} parent=11 // pred_region
          _
        $region16: #{tpu_custom_call.1} parent=11 // pred_fallthru
          _
      $region12: #{tpu_custom_call.1} parent=5 // pred_fallthru
        _
      %p184 = scmp.lt.s32.totalorder %s17, 2
      // Predicated region
      $region17: #{tpu_custom_call.1} parent=5 // pred_check
        %p185 = pneg %p184
      $region18: #{tpu_custom_call.1} parent=5 // pred_check_branch
        %187 = sbr.rel (%p185) target = $region20
      $region19: #{tpu_custom_call.1} parent=5 // pred_region
        // Predicated region
        $region21: #{tpu_custom_call.1} parent=19 // pred_check
          %p188 = pneg %p51
        $region22: #{tpu_custom_call.1} parent=19 // pred_check_branch
          %190 = sbr.rel (%p188) target = $region24
        $region23: #{tpu_custom_call.1} parent=19 // pred_region
          %s191 = smul.u32 16, %s25
          %s192 = ssub.s32 18, %s191
          %p193 = scmp.lt.s32.totalorder %s192, 16
          %s194 = scalar_select %p193, %s192, 16
          %s195 = smul.u32 64, %s194
          %s196 = smul.u32 %s195, 3
          %p197 = scmp.lt.s32.totalorder %s24, 1
          %s198 = scalar_select %p197, %s24, 1
          %p199 = scmp.lt.s32.totalorder %s191, 17
          %s200 = scalar_select %p199, %s191, 17
          %s201 = smul.addr %s200, 3
          %s202 = smul.addr %s198, 54
          %s203 = sadd.s32 %s201, %s202
          %s204 = smul.addr %s203, 4
          %s205 = scalar_lea.vmem %s0, %s204
          %s206 = smul.u32 16, %s25
          %s207 = ssub.s32 18, %s206
          %p208 = scmp.lt.s32.totalorder %s207, 16
          %s209 = scalar_select %p208, %s207, 16
          %s210 = smul.u32 64, %s209
          %s211 = smul.u32 %s210, 3
        $region24: #{tpu_custom_call.1} parent=19 // pred_fallthru
          _
        // Predicated region
        $region25: #{tpu_custom_call.1} parent=19 // pred_check
          %p212 = pneg %p83
        $region26: #{tpu_custom_call.1} parent=19 // pred_check_branch
          %214 = sbr.rel (%p212) target = $region28
        $region27: #{tpu_custom_call.1} parent=19 // pred_region
          %s215 = sadd.s32 %s25, 1
          %s216 = smul.u32 %s215, 8
          %s217 = smul.u32 2, %s216
          %p218 = scmp.lt.s32.totalorder %s24, 1
          %s219 = scalar_select %p218, %s24, 1
          %p220 = scmp.lt.s32.totalorder %s217, 17
          %s221 = scalar_select %p220, %s217, 17
          %s222 = smul.addr %s221, 3
          %s223 = smul.addr %s219, 54
          %s224 = sadd.s32 %s222, %s223
          %s225 = smul.addr %s224, 4
          %s226 = scalar_lea.vmem %s1, %s225
          %s227 = sadd.s32 %s25, 1
          %s228 = smul.u32 %s227, 8
          %s229 = smul.u32 2, %s228
        $region28: #{tpu_custom_call.1} parent=19 // pred_fallthru
          _
      $region20: #{tpu_custom_call.1} parent=5 // pred_fallthru
        _
      %p230 = scmp.le.s32.totalorder 1, %s17
      %p231 = scmp.lt.s32.totalorder %s17, 3
      %p232 = pnand %p230, %p231
      %p233 = pneg %p232
      // Predicated region
      $region29: #{tpu_custom_call.1} parent=5 // pred_check
        _
      $region30: #{tpu_custom_call.1} parent=5 // pred_check_branch
        %235 = sbr.rel (%p232) target = $region32
      $region31: #{tpu_custom_call.1} parent=5 // pred_region
        %s236 = ssub.s32 %s17, 1
        %s237 = smul.u32 16, %s27
        %s238 = ssub.s32 18, %s237
        %p239 = scmp.lt.s32.totalorder %s238, 16
        %s240 = scalar_select %p239, %s238, 16
        %s241 = smul.u32 64, %s240
        %s242 = smul.u32 %s241, 3
        %p243 = scmp.lt.s32.totalorder %s26, 1
        %s244 = scalar_select %p243, %s26, 1
        %p245 = scmp.lt.s32.totalorder %s237, 17
        %s246 = scalar_select %p245, %s237, 17
        %s247 = smul.addr %s246, 3
        %s248 = smul.addr %s244, 54
        %s249 = sadd.s32 %s247, %s248
        %s250 = smul.addr %s249, 4
        %s251 = scalar_lea.vmem %s0, %s250
        %p252 = pneg %p57
        %p253 = pneg %p54
        %s254 = sadd.s32 %s27, 1
        %s255 = smul.u32 %s254, 8
        %s256 = smul.u32 2, %s255
        %p257 = scmp.lt.s32.totalorder %s26, 1
        %s258 = scalar_select %p257, %s26, 1
        %p259 = scmp.lt.s32.totalorder %s256, 17
        %s260 = scalar_select %p259, %s256, 17
        %s261 = smul.addr %s260, 3
        %s262 = smul.addr %s258, 54
        %s263 = sadd.s32 %s261, %s262
        %s264 = smul.addr %s263, 4
        %s265 = scalar_lea.vmem %s1, %s264
        %p266 = pneg %p89
        %p267 = pneg %p86
        %p268 = pneg %p110
        %p269 = pneg %p107
        %p270 = pneg %p138
        %p271 = pneg %p135
        %s272 = sand.u32 %s125, 1
        %s273 = scalar_lea.sflag [#allocation4], %s272
        %s274 = sand.u32 %s125, 1
        %s275 = smul.addr %s274, 128
        %s276 = scalar_lea.vmem [#allocation3], %s275
        %p277 = pneg %p166
        %p278 = pneg %p163
        %s279 = sand.u32 %s153, 1
        %s280 = scalar_lea.sflag [#allocation6], %s279
        %s281 = sand.u32 %s153, 1
        %s282 = smul.addr %s281, 2
        %s283 = scalar_lea.vmem [#allocation5], %s282
        %s284 = smul.u32 16, %s27
        %s285 = ssub.s32 18, %s284
        %p286 = scmp.lt.s32.totalorder %s285, 16
        %s287 = scalar_select %p286, %s285, 16
        %s288 = smul.u32 64, %s287
        %s289 = smul.u32 %s288, 3
        %p290 = scmp.lt.s32.totalorder %s26, 1
        %s291 = scalar_select %p290, %s26, 1
        %p292 = scmp.lt.s32.totalorder %s284, 17
        %s293 = scalar_select %p292, %s284, 17
        %s294 = smul.addr %s293, 3
        %s295 = smul.addr %s291, 54
        %s296 = sadd.s32 %s294, %s295
        %s297 = smul.addr %s296, 4
        %s298 = scalar_lea.vmem %s0, %s297
        %s299 = smul.u32 16, %s27
        %s300 = ssub.s32 18, %s299
        %p301 = scmp.lt.s32.totalorder %s300, 16
        %s302 = scalar_select %p301, %s300, 16
        %s303 = smul.u32 64, %s302
        %s304 = smul.u32 %s303, 3
        %s305 = sadd.s32 %s27, 1
        %s306 = smul.u32 %s305, 8
        %s307 = smul.u32 2, %s306
        %p308 = scmp.lt.s32.totalorder %s26, 1
        %s309 = scalar_select %p308, %s26, 1
        %p310 = scmp.lt.s32.totalorder %s307, 17
        %s311 = scalar_select %p310, %s307, 17
        %s312 = smul.addr %s311, 3
        %s313 = smul.addr %s309, 54
        %s314 = sadd.s32 %s312, %s313
        %s315 = smul.addr %s314, 4
        %s316 = scalar_lea.vmem %s1, %s315
        %s317 = sadd.s32 %s27, 1
        %s318 = smul.u32 %s317, 8
        %s319 = smul.u32 2, %s318
        %v321 = vld [vmem:[%s298] sm:$0xf]
        %v322 = vld [vmem:[%s298 + $0x4] sm:$0xf]
        %v323 = vld [vmem:[%s298 + $0x8] sm:$0x1]
        %v324 = vld [vmem:[%s298 + $0xc] sm:$0xf]
        %v325 = vld [vmem:[%s298 + $0x10] sm:$0xf]
        %v326 = vld [vmem:[%s298 + $0x14] sm:$0x1]
        %v327 = vld [vmem:[%s298 + $0x18] sm:$0xf]
        %v328 = vld [vmem:[%s298 + $0x1c] sm:$0xf]
        %v329 = vld [vmem:[%s298 + $0x20] sm:$0x1]
        %v330 = vld [vmem:[%s298 + $0x24] sm:$0xf]
        %v331 = vld [vmem:[%s298 + $0x28] sm:$0xf]
        %v332 = vld [vmem:[%s298 + $0x2c] sm:$0x1]
        %v333 = vld [vmem:[%s298 + $0x30] sm:$0xf]
        %v334 = vld [vmem:[%s298 + $0x34] sm:$0xf]
        %v335 = vld [vmem:[%s298 + $0x38] sm:$0x1]
        %v336 = vld [vmem:[%s298 + $0x3c] sm:$0xf]
        %v337 = vld [vmem:[%s298 + $0x40] sm:$0xf]
        %v338 = vld [vmem:[%s298 + $0x44] sm:$0x1]
        %v339 = vld [vmem:[%s298 + $0x48] sm:$0xf]
        %v340 = vld [vmem:[%s298 + $0x4c] sm:$0xf]
        %v341 = vld [vmem:[%s298 + $0x50] sm:$0x1]
        %v342 = vld [vmem:[%s298 + $0x54] sm:$0xf]
        %v343 = vld [vmem:[%s298 + $0x58] sm:$0xf]
        %v344 = vld [vmem:[%s298 + $0x5c] sm:$0x1]
        %v345 = vld [vmem:[%s298 + $0x60] sm:$0xf]
        %v346 = vld [vmem:[%s298 + $0x64] sm:$0xf]
        %v347 = vld [vmem:[%s298 + $0x68] sm:$0x1]
        %v348 = vld [vmem:[%s298 + $0x6c] sm:$0xf]
        %v349 = vld [vmem:[%s298 + $0x70] sm:$0xf]
        %v350 = vld [vmem:[%s298 + $0x74] sm:$0x1]
        %v351 = vld [vmem:[%s298 + $0x78] sm:$0xf]
        %v352 = vld [vmem:[%s298 + $0x7c] sm:$0xf]
        %v353 = vld [vmem:[%s298 + $0x80] sm:$0x1]
        %v354 = vld [vmem:[%s298 + $0x84] sm:$0xf]
        %v355 = vld [vmem:[%s298 + $0x88] sm:$0xf]
        %v356 = vld [vmem:[%s298 + $0x8c] sm:$0x1]
        %v357 = vld [vmem:[%s298 + $0x90] sm:$0xf]
        %v358 = vld [vmem:[%s298 + $0x94] sm:$0xf]
        %v359 = vld [vmem:[%s298 + $0x98] sm:$0x1]
        %v360 = vld [vmem:[%s298 + $0x9c] sm:$0xf]
        %v361 = vld [vmem:[%s298 + $0xa0] sm:$0xf]
        %v362 = vld [vmem:[%s298 + $0xa4] sm:$0x1]
        %v363 = vld [vmem:[%s298 + $0xa8] sm:$0xf]
        %v364 = vld [vmem:[%s298 + $0xac] sm:$0xf]
        %v365 = vld [vmem:[%s298 + $0xb0] sm:$0x1]
        %v366 = vld [vmem:[%s298 + $0xb4] sm:$0xf]
        %v367 = vld [vmem:[%s298 + $0xb8] sm:$0xf]
        %v368 = vld [vmem:[%s298 + $0xbc] sm:$0x1]
        %369 = vst [vmem:[#allocation2] sm:$0xf] %v321
        %370 = vst [vmem:[#allocation2 + $0x4] sm:$0xf] %v322
        %371 = vst [vmem:[#allocation2 + $0x8] sm:$0x1] %v323
        %372 = vst [vmem:[#allocation2 + $0xc] sm:$0xf] %v324
        %373 = vst [vmem:[#allocation2 + $0x10] sm:$0xf] %v325
        %374 = vst [vmem:[#allocation2 + $0x14] sm:$0x1] %v326
        %375 = vst [vmem:[#allocation2 + $0x18] sm:$0xf] %v327
        %376 = vst [vmem:[#allocation2 + $0x1c] sm:$0xf] %v328
        %377 = vst [vmem:[#allocation2 + $0x20] sm:$0x1] %v329
        %378 = vst [vmem:[#allocation2 + $0x24] sm:$0xf] %v330
        %379 = vst [vmem:[#allocation2 + $0x28] sm:$0xf] %v331
        %380 = vst [vmem:[#allocation2 + $0x2c] sm:$0x1] %v332
        %381 = vst [vmem:[#allocation2 + $0x30] sm:$0xf] %v333
        %382 = vst [vmem:[#allocation2 + $0x34] sm:$0xf] %v334
        %383 = vst [vmem:[#allocation2 + $0x38] sm:$0x1] %v335
        %384 = vst [vmem:[#allocation2 + $0x3c] sm:$0xf] %v336
        %385 = vst [vmem:[#allocation2 + $0x40] sm:$0xf] %v337
        %386 = vst [vmem:[#allocation2 + $0x44] sm:$0x1] %v338
        %387 = vst [vmem:[#allocation2 + $0x48] sm:$0xf] %v339
        %388 = vst [vmem:[#allocation2 + $0x4c] sm:$0xf] %v340
        %389 = vst [vmem:[#allocation2 + $0x50] sm:$0x1] %v341
        %390 = vst [vmem:[#allocation2 + $0x54] sm:$0xf] %v342
        %391 = vst [vmem:[#allocation2 + $0x58] sm:$0xf] %v343
        %392 = vst [vmem:[#allocation2 + $0x5c] sm:$0x1] %v344
        %393 = vst [vmem:[#allocation2 + $0x60] sm:$0xf] %v345
        %394 = vst [vmem:[#allocation2 + $0x64] sm:$0xf] %v346
        %395 = vst [vmem:[#allocation2 + $0x68] sm:$0x1] %v347
        %396 = vst [vmem:[#allocation2 + $0x6c] sm:$0xf] %v348
        %397 = vst [vmem:[#allocation2 + $0x70] sm:$0xf] %v349
        %398 = vst [vmem:[#allocation2 + $0x74] sm:$0x1] %v350
        %399 = vst [vmem:[#allocation2 + $0x78] sm:$0xf] %v351
        %400 = vst [vmem:[#allocation2 + $0x7c] sm:$0xf] %v352
        %401 = vst [vmem:[#allocation2 + $0x80] sm:$0x1] %v353
        %402 = vst [vmem:[#allocation2 + $0x84] sm:$0xf] %v354
        %403 = vst [vmem:[#allocation2 + $0x88] sm:$0xf] %v355
        %404 = vst [vmem:[#allocation2 + $0x8c] sm:$0x1] %v356
        %405 = vst [vmem:[#allocation2 + $0x90] sm:$0xf] %v357
        %406 = vst [vmem:[#allocation2 + $0x94] sm:$0xf] %v358
        %407 = vst [vmem:[#allocation2 + $0x98] sm:$0x1] %v359
        %408 = vst [vmem:[#allocation2 + $0x9c] sm:$0xf] %v360
        %409 = vst [vmem:[#allocation2 + $0xa0] sm:$0xf] %v361
        %410 = vst [vmem:[#allocation2 + $0xa4] sm:$0x1] %v362
        %411 = vst [vmem:[#allocation2 + $0xa8] sm:$0xf] %v363
        %412 = vst [vmem:[#allocation2 + $0xac] sm:$0xf] %v364
        %413 = vst [vmem:[#allocation2 + $0xb0] sm:$0x1] %v365
        %414 = vst [vmem:[#allocation2 + $0xb4] sm:$0xf] %v366
        %415 = vst [vmem:[#allocation2 + $0xb8] sm:$0xf] %v367
        %416 = vst [vmem:[#allocation2 + $0xbc] sm:$0x1] %v368
        %v417 = vld [vmem:[%s316] sm:$0xf]
        %v418 = vld [vmem:[%s316 + $0x4] sm:$0xf]
        %v419 = vld [vmem:[%s316 + $0x8] sm:$0x1]
        %v420 = vld [vmem:[%s316 + $0xc] sm:$0xf]
        %v421 = vld [vmem:[%s316 + $0x10] sm:$0xf]
        %v422 = vld [vmem:[%s316 + $0x14] sm:$0x1]
        %s423 = scalar_lea.vmem [#allocation2], 192
        %424 = vst [vmem:[%s423] sm:$0xf] %v417
        %425 = vst [vmem:[%s423 + $0x4] sm:$0xf] %v418
        %426 = vst [vmem:[%s423 + $0x8] sm:$0x1] %v419
        %427 = vst [vmem:[%s423 + $0xc] sm:$0xf] %v420
        %428 = vst [vmem:[%s423 + $0x10] sm:$0xf] %v421
        %429 = vst [vmem:[%s423 + $0x14] sm:$0x1] %v422
        %v430 = vld [vmem:[#allocation2] sm:$0xf]
        %v431 = vld [vmem:[#allocation2 + $0x4] sm:$0xf]
        %v432 = vld [vmem:[#allocation2 + $0xc] sm:$0xf]
        %v433 = vld [vmem:[#allocation2 + $0x10] sm:$0xf]
        %v434 = vld [vmem:[#allocation2 + $0x18] sm:$0xf]
        %v435 = vld [vmem:[#allocation2 + $0x1c] sm:$0xf]
        %v436 = vld [vmem:[#allocation2 + $0x24] sm:$0xf]
        %v437 = vld [vmem:[#allocation2 + $0x28] sm:$0xf]
        %v438 = vld [vmem:[#allocation2 + $0x30] sm:$0xf]
        %v439 = vld [vmem:[#allocation2 + $0x34] sm:$0xf]
        %v440 = vld [vmem:[#allocation2 + $0x3c] sm:$0xf]
        %v441 = vld [vmem:[#allocation2 + $0x40] sm:$0xf]
        %v442 = vld [vmem:[#allocation2 + $0x48] sm:$0xf]
        %v443 = vld [vmem:[#allocation2 + $0x4c] sm:$0xf]
        %v444 = vld [vmem:[#allocation2 + $0x54] sm:$0xf]
        %v445 = vld [vmem:[#allocation2 + $0x58] sm:$0xf]
        %v446 = vld [vmem:[#allocation2 + $0x60] sm:$0xf]
        %v447 = vld [vmem:[#allocation2 + $0x64] sm:$0xf]
        %v448 = vld [vmem:[#allocation2 + $0x6c] sm:$0xf]
        %v449 = vld [vmem:[#allocation2 + $0x70] sm:$0xf]
        %v450 = vld [vmem:[#allocation2 + $0x78] sm:$0xf]
        %v451 = vld [vmem:[#allocation2 + $0x7c] sm:$0xf]
        %v452 = vld [vmem:[#allocation2 + $0x84] sm:$0xf]
        %v453 = vld [vmem:[#allocation2 + $0x88] sm:$0xf]
        %v454 = vld [vmem:[#allocation2 + $0x90] sm:$0xf]
        %v455 = vld [vmem:[#allocation2 + $0x94] sm:$0xf]
        %v456 = vld [vmem:[#allocation2 + $0x9c] sm:$0xf]
        %v457 = vld [vmem:[#allocation2 + $0xa0] sm:$0xf]
        %v458 = vld [vmem:[#allocation2 + $0xa8] sm:$0xf]
        %v459 = vld [vmem:[#allocation2 + $0xac] sm:$0xf]
        %v460 = vld [vmem:[#allocation2 + $0xb4] sm:$0xf]
        %v461 = vld [vmem:[#allocation2 + $0xb8] sm:$0xf]
        %v462 = vld [vmem:[%s2] sm:$0xf]
        %v463 = vld [vmem:[%s2 + $0x4] sm:$0xf]
        %v464 = vld [vmem:[%s2 + $0x8] sm:$0xf]
        %v465 = vld [vmem:[%s2 + $0xc] sm:$0xf]
        %v466 = vld [vmem:[%s2 + $0x10] sm:$0xf]
        %v467 = vld [vmem:[%s2 + $0x14] sm:$0xf]
        %v468 = vld [vmem:[%s2 + $0x18] sm:$0xf]
        %v469 = vld [vmem:[%s2 + $0x1c] sm:$0xf]
        %v470 = vld [vmem:[%s2 + $0x20] sm:$0xf]
        %v471 = vld [vmem:[%s2 + $0x24] sm:$0xf]
        %v472 = vld [vmem:[%s2 + $0x28] sm:$0xf]
        %v473 = vld [vmem:[%s2 + $0x2c] sm:$0xf]
        %v474 = vld [vmem:[%s2 + $0x30] sm:$0xf]
        %v475 = vld [vmem:[%s2 + $0x34] sm:$0xf]
        %v476 = vld [vmem:[%s2 + $0x38] sm:$0xf]
        %v477 = vld [vmem:[%s2 + $0x3c] sm:$0xf]
        %v478 = vld [vmem:[#allocation2 + $0x8] sm:$0x1]
        %v479 = vld [vmem:[#allocation2 + $0x14] sm:$0x1]
        %v480 = vld [vmem:[#allocation2 + $0x20] sm:$0x1]
        %v481 = vld [vmem:[#allocation2 + $0x2c] sm:$0x1]
        %v482 = vld [vmem:[#allocation2 + $0x38] sm:$0x1]
        %v483 = vld [vmem:[#allocation2 + $0x44] sm:$0x1]
        %v484 = vld [vmem:[#allocation2 + $0x50] sm:$0x1]
        %v485 = vld [vmem:[#allocation2 + $0x5c] sm:$0x1]
        %v486 = vld [vmem:[#allocation2 + $0x68] sm:$0x1]
        %v487 = vld [vmem:[#allocation2 + $0x74] sm:$0x1]
        %v488 = vld [vmem:[#allocation2 + $0x80] sm:$0x1]
        %v489 = vld [vmem:[#allocation2 + $0x8c] sm:$0x1]
        %v490 = vld [vmem:[#allocation2 + $0x98] sm:$0x1]
        %v491 = vld [vmem:[#allocation2 + $0xa4] sm:$0x1]
        %v492 = vld [vmem:[#allocation2 + $0xb0] sm:$0x1]
        %v493 = vld [vmem:[#allocation2 + $0xbc] sm:$0x1]
        %vm494 = vsmask.f32 3328
        %vm495 = vsmask.f32 7440
        %vm496 = vmor %vm494, %vm495
        %v498 = vshrl.u32 %v430, 16
        %v500 = vrot.slane %v498, 4
        %v501 = vshll.u32 %v430, 16
        %v503 = vrot.slane %v501, 5
        %v504 = vor.u32 %v500, %v503
        %v505 = vrot.slane %v504, 4
        %v507 = vshll.u32 %v431, 16
        %v509 = vrot.slane %v507, 5
        %v510 = vsel %vm496, %v505, %v509
        %v511 = vshrl.u32 %v431, 16
        %v513 = vrot.slane %v511, 4
        %v514 = vor.u32 %v513, %v509
        %v515 = vrot.slane %v514, 4
        %v517 = vshll.u32 %v478, 16
        %v519 = vrot.slane %v517, 5
        %v520 = vsel %vm496, %v515, %v519
        %v522 = vshrl.u32 %v432, 16
        %v524 = vrot.slane %v522, 4
        %v525 = vshll.u32 %v432, 16
        %v527 = vrot.slane %v525, 5
        %v528 = vor.u32 %v524, %v527
        %v529 = vrot.slane %v528, 4
        %v531 = vshll.u32 %v433, 16
        %v533 = vrot.slane %v531, 5
        %v534 = vsel %vm496, %v529, %v533
        %v535 = vshrl.u32 %v433, 16
        %v537 = vrot.slane %v535, 4
        %v538 = vor.u32 %v537, %v533
        %v539 = vrot.slane %v538, 4
        %v541 = vshll.u32 %v479, 16
        %v543 = vrot.slane %v541, 5
        %v544 = vsel %vm496, %v539, %v543
        %v546 = vshrl.u32 %v434, 16
        %v548 = vrot.slane %v546, 4
        %v549 = vshll.u32 %v434, 16
        %v551 = vrot.slane %v549, 5
        %v552 = vor.u32 %v548, %v551
        %v553 = vrot.slane %v552, 4
        %v555 = vshll.u32 %v435, 16
        %v557 = vrot.slane %v555, 5
        %v558 = vsel %vm496, %v553, %v557
        %v559 = vshrl.u32 %v435, 16
        %v561 = vrot.slane %v559, 4
        %v562 = vor.u32 %v561, %v557
        %v563 = vrot.slane %v562, 4
        %v565 = vshll.u32 %v480, 16
        %v567 = vrot.slane %v565, 5
        %v568 = vsel %vm496, %v563, %v567
        %v570 = vshrl.u32 %v436, 16
        %v572 = vrot.slane %v570, 4
        %v573 = vshll.u32 %v436, 16
        %v575 = vrot.slane %v573, 5
        %v576 = vor.u32 %v572, %v575
        %v577 = vrot.slane %v576, 4
        %v579 = vshll.u32 %v437, 16
        %v581 = vrot.slane %v579, 5
        %v582 = vsel %vm496, %v577, %v581
        %v583 = vshrl.u32 %v437, 16
        %v585 = vrot.slane %v583, 4
        %v586 = vor.u32 %v585, %v581
        %v587 = vrot.slane %v586, 4
        %v589 = vshll.u32 %v481, 16
        %v591 = vrot.slane %v589, 5
        %v592 = vsel %vm496, %v587, %v591
        %v594 = vshrl.u32 %v438, 16
        %v596 = vrot.slane %v594, 4
        %v597 = vshll.u32 %v438, 16
        %v599 = vrot.slane %v597, 5
        %v600 = vor.u32 %v596, %v599
        %v601 = vrot.slane %v600, 4
        %v603 = vshll.u32 %v439, 16
        %v605 = vrot.slane %v603, 5
        %v606 = vsel %vm496, %v601, %v605
        %v607 = vshrl.u32 %v439, 16
        %v609 = vrot.slane %v607, 4
        %v610 = vor.u32 %v609, %v605
        %v611 = vrot.slane %v610, 4
        %v613 = vshll.u32 %v482, 16
        %v615 = vrot.slane %v613, 5
        %v616 = vsel %vm496, %v611, %v615
        %v618 = vshrl.u32 %v440, 16
        %v620 = vrot.slane %v618, 4
        %v621 = vshll.u32 %v440, 16
        %v623 = vrot.slane %v621, 5
        %v624 = vor.u32 %v620, %v623
        %v625 = vrot.slane %v624, 4
        %v627 = vshll.u32 %v441, 16
        %v629 = vrot.slane %v627, 5
        %v630 = vsel %vm496, %v625, %v629
        %v631 = vshrl.u32 %v441, 16
        %v633 = vrot.slane %v631, 4
        %v634 = vor.u32 %v633, %v629
        %v635 = vrot.slane %v634, 4
        %v637 = vshll.u32 %v483, 16
        %v639 = vrot.slane %v637, 5
        %v640 = vsel %vm496, %v635, %v639
        %v642 = vshrl.u32 %v442, 16
        %v644 = vrot.slane %v642, 4
        %v645 = vshll.u32 %v442, 16
        %v647 = vrot.slane %v645, 5
        %v648 = vor.u32 %v644, %v647
        %v649 = vrot.slane %v648, 4
        %v651 = vshll.u32 %v443, 16
        %v653 = vrot.slane %v651, 5
        %v654 = vsel %vm496, %v649, %v653
        %v655 = vshrl.u32 %v443, 16
        %v657 = vrot.slane %v655, 4
        %v658 = vor.u32 %v657, %v653
        %v659 = vrot.slane %v658, 4
        %v661 = vshll.u32 %v484, 16
        %v663 = vrot.slane %v661, 5
        %v664 = vsel %vm496, %v659, %v663
        %v666 = vshrl.u32 %v444, 16
        %v668 = vrot.slane %v666, 4
        %v669 = vshll.u32 %v444, 16
        %v671 = vrot.slane %v669, 5
        %v672 = vor.u32 %v668, %v671
        %v673 = vrot.slane %v672, 4
        %v675 = vshll.u32 %v445, 16
        %v677 = vrot.slane %v675, 5
        %v678 = vsel %vm496, %v673, %v677
        %v679 = vshrl.u32 %v445, 16
        %v681 = vrot.slane %v679, 4
        %v682 = vor.u32 %v681, %v677
        %v683 = vrot.slane %v682, 4
        %v685 = vshll.u32 %v485, 16
        %v687 = vrot.slane %v685, 5
        %v688 = vsel %vm496, %v683, %v687
        %v690 = vshrl.u32 %v446, 16
        %v692 = vrot.slane %v690, 4
        %v693 = vshll.u32 %v446, 16
        %v695 = vrot.slane %v693, 5
        %v696 = vor.u32 %v692, %v695
        %v697 = vrot.slane %v696, 4
        %v699 = vshll.u32 %v447, 16
        %v701 = vrot.slane %v699, 5
        %v702 = vsel %vm496, %v697, %v701
        %v703 = vshrl.u32 %v447, 16
        %v705 = vrot.slane %v703, 4
        %v706 = vor.u32 %v705, %v701
        %v707 = vrot.slane %v706, 4
        %v709 = vshll.u32 %v486, 16
        %v711 = vrot.slane %v709, 5
        %v712 = vsel %vm496, %v707, %v711
        %v714 = vshrl.u32 %v448, 16
        %v716 = vrot.slane %v714, 4
        %v717 = vshll.u32 %v448, 16
        %v719 = vrot.slane %v717, 5
        %v720 = vor.u32 %v716, %v719
        %v721 = vrot.slane %v720, 4
        %v723 = vshll.u32 %v449, 16
        %v725 = vrot.slane %v723, 5
        %v726 = vsel %vm496, %v721, %v725
        %v727 = vshrl.u32 %v449, 16
        %v729 = vrot.slane %v727, 4
        %v730 = vor.u32 %v729, %v725
        %v731 = vrot.slane %v730, 4
        %v733 = vshll.u32 %v487, 16
        %v735 = vrot.slane %v733, 5
        %v736 = vsel %vm496, %v731, %v735
        %v738 = vshrl.u32 %v450, 16
        %v740 = vrot.slane %v738, 4
        %v741 = vshll.u32 %v450, 16
        %v743 = vrot.slane %v741, 5
        %v744 = vor.u32 %v740, %v743
        %v745 = vrot.slane %v744, 4
        %v747 = vshll.u32 %v451, 16
        %v749 = vrot.slane %v747, 5
        %v750 = vsel %vm496, %v745, %v749
        %v751 = vshrl.u32 %v451, 16
        %v753 = vrot.slane %v751, 4
        %v754 = vor.u32 %v753, %v749
        %v755 = vrot.slane %v754, 4
        %v757 = vshll.u32 %v488, 16
        %v759 = vrot.slane %v757, 5
        %v760 = vsel %vm496, %v755, %v759
        %v762 = vshrl.u32 %v452, 16
        %v764 = vrot.slane %v762, 4
        %v765 = vshll.u32 %v452, 16
        %v767 = vrot.slane %v765, 5
        %v768 = vor.u32 %v764, %v767
        %v769 = vrot.slane %v768, 4
        %v771 = vshll.u32 %v453, 16
        %v773 = vrot.slane %v771, 5
        %v774 = vsel %vm496, %v769, %v773
        %v775 = vshrl.u32 %v453, 16
        %v777 = vrot.slane %v775, 4
        %v778 = vor.u32 %v777, %v773
        %v779 = vrot.slane %v778, 4
        %v781 = vshll.u32 %v489, 16
        %v783 = vrot.slane %v781, 5
        %v784 = vsel %vm496, %v779, %v783
        %v786 = vshrl.u32 %v454, 16
        %v788 = vrot.slane %v786, 4
        %v789 = vshll.u32 %v454, 16
        %v791 = vrot.slane %v789, 5
        %v792 = vor.u32 %v788, %v791
        %v793 = vrot.slane %v792, 4
        %v795 = vshll.u32 %v455, 16
        %v797 = vrot.slane %v795, 5
        %v798 = vsel %vm496, %v793, %v797
        %v799 = vshrl.u32 %v455, 16
        %v801 = vrot.slane %v799, 4
        %v802 = vor.u32 %v801, %v797
        %v803 = vrot.slane %v802, 4
        %v805 = vshll.u32 %v490, 16
        %v807 = vrot.slane %v805, 5
        %v808 = vsel %vm496, %v803, %v807
        %v810 = vshrl.u32 %v456, 16
        %v812 = vrot.slane %v810, 4
        %v813 = vshll.u32 %v456, 16
        %v815 = vrot.slane %v813, 5
        %v816 = vor.u32 %v812, %v815
        %v817 = vrot.slane %v816, 4
        %v819 = vshll.u32 %v457, 16
        %v821 = vrot.slane %v819, 5
        %v822 = vsel %vm496, %v817, %v821
        %v823 = vshrl.u32 %v457, 16
        %v825 = vrot.slane %v823, 4
        %v826 = vor.u32 %v825, %v821
        %v827 = vrot.slane %v826, 4
        %v829 = vshll.u32 %v491, 16
        %v831 = vrot.slane %v829, 5
        %v832 = vsel %vm496, %v827, %v831
        %v834 = vshrl.u32 %v458, 16
        %v836 = vrot.slane %v834, 4
        %v837 = vshll.u32 %v458, 16
        %v839 = vrot.slane %v837, 5
        %v840 = vor.u32 %v836, %v839
        %v841 = vrot.slane %v840, 4
        %v843 = vshll.u32 %v459, 16
        %v845 = vrot.slane %v843, 5
        %v846 = vsel %vm496, %v841, %v845
        %v847 = vshrl.u32 %v459, 16
        %v849 = vrot.slane %v847, 4
        %v850 = vor.u32 %v849, %v845
        %v851 = vrot.slane %v850, 4
        %v853 = vshll.u32 %v492, 16
        %v855 = vrot.slane %v853, 5
        %v856 = vsel %vm496, %v851, %v855
        %v858 = vshrl.u32 %v460, 16
        %v860 = vrot.slane %v858, 4
        %v861 = vshll.u32 %v460, 16
        %v863 = vrot.slane %v861, 5
        %v864 = vor.u32 %v860, %v863
        %v865 = vrot.slane %v864, 4
        %v867 = vshll.u32 %v461, 16
        %v869 = vrot.slane %v867, 5
        %v870 = vsel %vm496, %v865, %v869
        %v871 = vshrl.u32 %v461, 16
        %v873 = vrot.slane %v871, 4
        %v874 = vor.u32 %v873, %v869
        %v875 = vrot.slane %v874, 4
        %v877 = vshll.u32 %v493, 16
        %v879 = vrot.slane %v877, 5
        %v880 = vsel %vm496, %v875, %v879
        %s881 = scalar_lea.vmem %s2, 64
        %v882 = vld [vmem:[%s881] sm:$0xf]
        %v883 = vld [vmem:[%s881 + $0x4] sm:$0xf]
        %v884 = vld [vmem:[%s881 + $0x8] sm:$0xf]
        %v885 = vld [vmem:[%s881 + $0xc] sm:$0xf]
        %v886 = vld [vmem:[%s881 + $0x10] sm:$0xf]
        %v887 = vld [vmem:[%s881 + $0x14] sm:$0xf]
        %v888 = vld [vmem:[%s881 + $0x18] sm:$0xf]
        %v889 = vld [vmem:[%s881 + $0x1c] sm:$0xf]
        %v890 = vld [vmem:[%s881 + $0x20] sm:$0xf]
        %v891 = vld [vmem:[%s881 + $0x24] sm:$0xf]
        %v892 = vld [vmem:[%s881 + $0x28] sm:$0xf]
        %v893 = vld [vmem:[%s881 + $0x2c] sm:$0xf]
        %v894 = vld [vmem:[%s881 + $0x30] sm:$0xf]
        %v895 = vld [vmem:[%s881 + $0x34] sm:$0xf]
        %v896 = vld [vmem:[%s881 + $0x38] sm:$0xf]
        %v897 = vld [vmem:[%s881 + $0x3c] sm:$0xf]
        %v898 = vunpack.c.l.b16 %v510
        %v899 = vunpack.c.l.b16 %v520
        %v900 = vunpack.c.l.b16 %v534
        %v901 = vunpack.c.l.b16 %v544
        %v902 = vunpack.c.l.b16 %v558
        %v903 = vunpack.c.l.b16 %v568
        %v904 = vunpack.c.l.b16 %v582
        %v905 = vunpack.c.l.b16 %v592
        %v906 = vunpack.c.l.b16 %v606
        %v907 = vunpack.c.l.b16 %v616
        %v908 = vunpack.c.l.b16 %v630
        %v909 = vunpack.c.l.b16 %v640
        %v910 = vunpack.c.l.b16 %v654
        %v911 = vunpack.c.l.b16 %v664
        %v912 = vunpack.c.l.b16 %v678
        %v913 = vunpack.c.l.b16 %v688
        %v914 = vunpack.c.l.b16 %v702
        %v915 = vunpack.c.l.b16 %v712
        %v916 = vunpack.c.l.b16 %v726
        %v917 = vunpack.c.l.b16 %v736
        %v918 = vunpack.c.l.b16 %v750
        %v919 = vunpack.c.l.b16 %v760
        %v920 = vunpack.c.l.b16 %v774
        %v921 = vunpack.c.l.b16 %v784
        %v922 = vunpack.c.l.b16 %v798
        %v923 = vunpack.c.l.b16 %v808
        %v924 = vunpack.c.l.b16 %v822
        %v925 = vunpack.c.l.b16 %v832
        %v926 = vunpack.c.l.b16 %v846
        %v927 = vunpack.c.l.b16 %v856
        %v928 = vunpack.c.l.b16 %v870
        %v929 = vunpack.c.l.b16 %v880
        %v930 = vpack.c.b16 %v899, %v898
        %v931 = vpack.c.b16 %v901, %v900
        %v932 = vpack.c.b16 %v903, %v902
        %v933 = vpack.c.b16 %v905, %v904
        %v934 = vpack.c.b16 %v907, %v906
        %v935 = vpack.c.b16 %v909, %v908
        %v936 = vpack.c.b16 %v911, %v910
        %v937 = vpack.c.b16 %v913, %v912
        %v938 = vpack.c.b16 %v915, %v914
        %v939 = vpack.c.b16 %v917, %v916
        %v940 = vpack.c.b16 %v919, %v918
        %v941 = vpack.c.b16 %v921, %v920
        %v942 = vpack.c.b16 %v923, %v922
        %v943 = vpack.c.b16 %v925, %v924
        %v944 = vpack.c.b16 %v927, %v926
        %v945 = vpack.c.b16 %v929, %v928
        %v978 = vunpack.c.l.b16 %v882
        %v979 = vunpack.c.l.b16 %v883
        %v980 = vunpack.c.l.b16 %v884
        %v981 = vunpack.c.l.b16 %v885
        %v982 = vunpack.c.l.b16 %v886
        %v983 = vunpack.c.l.b16 %v887
        %v984 = vunpack.c.l.b16 %v888
        %v985 = vunpack.c.l.b16 %v889
        %v986 = vunpack.c.l.b16 %v890
        %v987 = vunpack.c.l.b16 %v891
        %v988 = vunpack.c.l.b16 %v892
        %v989 = vunpack.c.l.b16 %v893
        %v990 = vunpack.c.l.b16 %v894
        %v991 = vunpack.c.l.b16 %v895
        %v992 = vunpack.c.l.b16 %v896
        %v993 = vunpack.c.l.b16 %v897
        %v994 = vpack.c.b16 %v979, %v978
        %v995 = vpack.c.b16 %v981, %v980
        %v996 = vpack.c.b16 %v983, %v982
        %v997 = vpack.c.b16 %v985, %v984
        %v998 = vpack.c.b16 %v987, %v986
        %v999 = vpack.c.b16 %v989, %v988
        %v1000 = vpack.c.b16 %v991, %v990
        %v1001 = vpack.c.b16 %v993, %v992
        %1010 = vmatprep.subr.bf16.mxu0 0
        %1011 = vmatpush1.bf16.msra.mxu0 %v1001
        %1012 = vmatprep.subr.bf16.mxu0 0
        %1013 = vmatpush1.bf16.msra.mxu0 %v1000
        %1014 = vmatprep.subr.bf16.mxu0 0
        %1015 = vmatpush1.bf16.msra.mxu0 %v999
        %1016 = vmatprep.subr.bf16.mxu0 0
        %1017 = vmatpush1.bf16.msra.mxu0 %v998
        %1018 = vmatprep.subr.bf16.mxu0 0
        %1019 = vmatpush1.bf16.msra.mxu0 %v997
        %1020 = vmatprep.subr.bf16.mxu0 0
        %1021 = vmatpush1.bf16.msra.mxu0 %v996
        %1022 = vmatprep.subr.bf16.mxu0 0
        %1023 = vmatpush1.bf16.msra.mxu0 %v995
        %1024 = vmatprep.subr.bf16.mxu0 0
        %1025 = vmatpush1.bf16.msra.mxu0 %v994
        %1026 = vmatprep.subr.bf16.mxu0 0
        %1027 = vmatpush2.bf16.msra.mxu0 0
        %1028 = vmatprep.subr.bf16.mxu0 0
        %1029 = vmatpush2.bf16.msra.mxu0 0
        %1030 = vmatprep.subr.bf16.mxu0 0
        %1031 = vmatpush2.bf16.msra.mxu0 0
        %1032 = vmatprep.subr.bf16.mxu0 0
        %1033 = vmatpush2.bf16.msra.mxu0 0
        %1034 = vmatprep.subr.bf16.mxu0 0
        %1035 = vmatpush2.bf16.msra.mxu0 0
        %1036 = vmatprep.subr.bf16.mxu0 0
        %1037 = vmatpush2.bf16.msra.mxu0 0
        %1038 = vmatprep.subr.bf16.mxu0 0
        %1039 = vmatpush2.bf16.msra.mxu0 0
        %1040 = vmatprep.subr.bf16.mxu0 0
        %1041 = vmatpush2.bf16.msra.mxu0 0
        %1042 = vmatprep.mubr.bf16.mxu0 0
        %1043 = vmatmul.mubr.bf16.gmra.mxu0 %v930
        %v1044 = vpop.f32.mrf.mxu0
        %v1045 = vadd.f32 0.0, %v1044
        %v1046 = vpop.f32.mrf.mxu0
        %v1047 = vpop.f32.mrf.mxu0
        %v1048 = vadd.f32 0.0, %v1047
        %v1049 = vpop.f32.mrf.mxu0
        %1050 = vmatprep.mubr.bf16.mxu0 0
        %1051 = vmatmul.mubr.bf16.gmra.mxu0 %v931
        %v1052 = vpop.f32.mrf.mxu0
        %v1053 = vadd.f32 0.0, %v1052
        %v1054 = vpop.f32.mrf.mxu0
        %v1055 = vpop.f32.mrf.mxu0
        %v1056 = vadd.f32 0.0, %v1055
        %v1057 = vpop.f32.mrf.mxu0
        %1058 = vmatprep.mubr.bf16.mxu0 0
        %1059 = vmatmul.mubr.bf16.gmra.mxu0 %v932
        %v1060 = vpop.f32.mrf.mxu0
        %v1061 = vadd.f32 0.0, %v1060
        %v1062 = vpop.f32.mrf.mxu0
        %v1063 = vpop.f32.mrf.mxu0
        %v1064 = vadd.f32 0.0, %v1063
        %v1065 = vpop.f32.mrf.mxu0
        %1066 = vmatprep.mubr.bf16.mxu0 0
        %1067 = vmatmul.mubr.bf16.gmra.mxu0 %v933
        %v1068 = vpop.f32.mrf.mxu0
        %v1069 = vadd.f32 0.0, %v1068
        %v1070 = vpop.f32.mrf.mxu0
        %v1071 = vpop.f32.mrf.mxu0
        %v1072 = vadd.f32 0.0, %v1071
        %v1073 = vpop.f32.mrf.mxu0
        %1074 = vmatprep.mubr.bf16.mxu0 0
        %1075 = vmatmul.mubr.bf16.gmra.mxu0 %v934
        %v1076 = vpop.f32.mrf.mxu0
        %v1077 = vadd.f32 0.0, %v1076
        %v1078 = vpop.f32.mrf.mxu0
        %v1079 = vpop.f32.mrf.mxu0
        %v1080 = vadd.f32 0.0, %v1079
        %v1081 = vpop.f32.mrf.mxu0
        %1082 = vmatprep.mubr.bf16.mxu0 0
        %1083 = vmatmul.mubr.bf16.gmra.mxu0 %v935
        %v1084 = vpop.f32.mrf.mxu0
        %v1085 = vadd.f32 0.0, %v1084
        %v1086 = vpop.f32.mrf.mxu0
        %v1087 = vpop.f32.mrf.mxu0
        %v1088 = vadd.f32 0.0, %v1087
        %v1089 = vpop.f32.mrf.mxu0
        %1090 = vmatprep.mubr.bf16.mxu0 0
        %1091 = vmatmul.mubr.bf16.gmra.mxu0 %v936
        %v1092 = vpop.f32.mrf.mxu0
        %v1093 = vadd.f32 0.0, %v1092
        %v1094 = vpop.f32.mrf.mxu0
        %v1095 = vpop.f32.mrf.mxu0
        %v1096 = vadd.f32 0.0, %v1095
        %v1097 = vpop.f32.mrf.mxu0
        %1098 = vmatprep.mubr.bf16.mxu0 0
        %1099 = vmatmul.mubr.bf16.gmra.mxu0 %v937
        %v1100 = vpop.f32.mrf.mxu0
        %v1101 = vadd.f32 0.0, %v1100
        %v1102 = vpop.f32.mrf.mxu0
        %v1103 = vpop.f32.mrf.mxu0
        %v1104 = vadd.f32 0.0, %v1103
        %v1105 = vpop.f32.mrf.mxu0
        %1106 = vmatprep.mubr.bf16.mxu0 0
        %1107 = vmatmul.mubr.bf16.gmra.mxu0 %v938
        %v1108 = vpop.f32.mrf.mxu0
        %v1109 = vadd.f32 0.0, %v1108
        %v1110 = vpop.f32.mrf.mxu0
        %v1111 = vpop.f32.mrf.mxu0
        %v1112 = vadd.f32 0.0, %v1111
        %v1113 = vpop.f32.mrf.mxu0
        %1114 = vmatprep.mubr.bf16.mxu0 0
        %1115 = vmatmul.mubr.bf16.gmra.mxu0 %v939
        %v1116 = vpop.f32.mrf.mxu0
        %v1117 = vadd.f32 0.0, %v1116
        %v1118 = vpop.f32.mrf.mxu0
        %v1119 = vpop.f32.mrf.mxu0
        %v1120 = vadd.f32 0.0, %v1119
        %v1121 = vpop.f32.mrf.mxu0
        %1122 = vmatprep.mubr.bf16.mxu0 0
        %1123 = vmatmul.mubr.bf16.gmra.mxu0 %v940
        %v1124 = vpop.f32.mrf.mxu0
        %v1125 = vadd.f32 0.0, %v1124
        %v1126 = vpop.f32.mrf.mxu0
        %v1127 = vpop.f32.mrf.mxu0
        %v1128 = vadd.f32 0.0, %v1127
        %v1129 = vpop.f32.mrf.mxu0
        %1130 = vmatprep.mubr.bf16.mxu0 0
        %1131 = vmatmul.mubr.bf16.gmra.mxu0 %v941
        %v1132 = vpop.f32.mrf.mxu0
        %v1133 = vadd.f32 0.0, %v1132
        %v1134 = vpop.f32.mrf.mxu0
        %v1135 = vpop.f32.mrf.mxu0
        %v1136 = vadd.f32 0.0, %v1135
        %v1137 = vpop.f32.mrf.mxu0
        %1138 = vmatprep.mubr.bf16.mxu0 0
        %1139 = vmatmul.mubr.bf16.gmra.mxu0 %v942
        %v1140 = vpop.f32.mrf.mxu0
        %v1141 = vadd.f32 0.0, %v1140
        %v1142 = vpop.f32.mrf.mxu0
        %v1143 = vpop.f32.mrf.mxu0
        %v1144 = vadd.f32 0.0, %v1143
        %v1145 = vpop.f32.mrf.mxu0
        %1146 = vmatprep.mubr.bf16.mxu0 0
        %1147 = vmatmul.mubr.bf16.gmra.mxu0 %v943
        %v1148 = vpop.f32.mrf.mxu0
        %v1149 = vadd.f32 0.0, %v1148
        %v1150 = vpop.f32.mrf.mxu0
        %v1151 = vpop.f32.mrf.mxu0
        %v1152 = vadd.f32 0.0, %v1151
        %v1153 = vpop.f32.mrf.mxu0
        %1154 = vmatprep.mubr.bf16.mxu0 0
        %1155 = vmatmul.mubr.bf16.gmra.mxu0 %v944
        %v1156 = vpop.f32.mrf.mxu0
        %v1157 = vadd.f32 0.0, %v1156
        %v1158 = vpop.f32.mrf.mxu0
        %v1159 = vpop.f32.mrf.mxu0
        %v1160 = vadd.f32 0.0, %v1159
        %v1161 = vpop.f32.mrf.mxu0
        %1162 = vmatprep.mubr.bf16.mxu0 0
        %1163 = vmatmul.mubr.bf16.gmra.mxu0 %v945
        %v1164 = vpop.f32.mrf.mxu0
        %v1165 = vadd.f32 0.0, %v1164
        %v1166 = vpop.f32.mrf.mxu0
        %v1167 = vpop.f32.mrf.mxu0
        %v1168 = vadd.f32 0.0, %v1167
        %v1169 = vpop.f32.mrf.mxu0
        %1170 = vdwg.mxu0
        %v1203 = vunpack.c.l.b16 %v430
        %v1204 = vunpack.c.l.b16 %v431
        %v1205 = vunpack.c.l.b16 %v432
        %v1206 = vunpack.c.l.b16 %v433
        %v1207 = vunpack.c.l.b16 %v434
        %v1208 = vunpack.c.l.b16 %v435
        %v1209 = vunpack.c.l.b16 %v436
        %v1210 = vunpack.c.l.b16 %v437
        %v1211 = vunpack.c.l.b16 %v438
        %v1212 = vunpack.c.l.b16 %v439
        %v1213 = vunpack.c.l.b16 %v440
        %v1214 = vunpack.c.l.b16 %v441
        %v1215 = vunpack.c.l.b16 %v442
        %v1216 = vunpack.c.l.b16 %v443
        %v1217 = vunpack.c.l.b16 %v444
        %v1218 = vunpack.c.l.b16 %v445
        %v1219 = vunpack.c.l.b16 %v446
        %v1220 = vunpack.c.l.b16 %v447
        %v1221 = vunpack.c.l.b16 %v448
        %v1222 = vunpack.c.l.b16 %v449
        %v1223 = vunpack.c.l.b16 %v450
        %v1224 = vunpack.c.l.b16 %v451
        %v1225 = vunpack.c.l.b16 %v452
        %v1226 = vunpack.c.l.b16 %v453
        %v1227 = vunpack.c.l.b16 %v454
        %v1228 = vunpack.c.l.b16 %v455
        %v1229 = vunpack.c.l.b16 %v456
        %v1230 = vunpack.c.l.b16 %v457
        %v1231 = vunpack.c.l.b16 %v458
        %v1232 = vunpack.c.l.b16 %v459
        %v1233 = vunpack.c.l.b16 %v460
        %v1234 = vunpack.c.l.b16 %v461
        %v1235 = vpack.c.b16 %v1204, %v1203
        %v1236 = vpack.c.b16 %v1206, %v1205
        %v1237 = vpack.c.b16 %v1208, %v1207
        %v1238 = vpack.c.b16 %v1210, %v1209
        %v1239 = vpack.c.b16 %v1212, %v1211
        %v1240 = vpack.c.b16 %v1214, %v1213
        %v1241 = vpack.c.b16 %v1216, %v1215
        %v1242 = vpack.c.b16 %v1218, %v1217
        %v1243 = vpack.c.b16 %v1220, %v1219
        %v1244 = vpack.c.b16 %v1222, %v1221
        %v1245 = vpack.c.b16 %v1224, %v1223
        %v1246 = vpack.c.b16 %v1226, %v1225
        %v1247 = vpack.c.b16 %v1228, %v1227
        %v1248 = vpack.c.b16 %v1230, %v1229
        %v1249 = vpack.c.b16 %v1232, %v1231
        %v1250 = vpack.c.b16 %v1234, %v1233
        %v1283 = vunpack.c.l.b16 %v462
        %v1284 = vunpack.c.l.b16 %v463
        %v1285 = vunpack.c.l.b16 %v464
        %v1286 = vunpack.c.l.b16 %v465
        %v1287 = vunpack.c.l.b16 %v466
        %v1288 = vunpack.c.l.b16 %v467
        %v1289 = vunpack.c.l.b16 %v468
        %v1290 = vunpack.c.l.b16 %v469
        %v1291 = vunpack.c.l.b16 %v470
        %v1292 = vunpack.c.l.b16 %v471
        %v1293 = vunpack.c.l.b16 %v472
        %v1294 = vunpack.c.l.b16 %v473
        %v1295 = vunpack.c.l.b16 %v474
        %v1296 = vunpack.c.l.b16 %v475
        %v1297 = vunpack.c.l.b16 %v476
        %v1298 = vunpack.c.l.b16 %v477
        %v1299 = vpack.c.b16 %v1284, %v1283
        %v1300 = vpack.c.b16 %v1286, %v1285
        %v1301 = vpack.c.b16 %v1288, %v1287
        %v1302 = vpack.c.b16 %v1290, %v1289
        %v1303 = vpack.c.b16 %v1292, %v1291
        %v1304 = vpack.c.b16 %v1294, %v1293
        %v1305 = vpack.c.b16 %v1296, %v1295
        %v1306 = vpack.c.b16 %v1298, %v1297
        %1315 = vmatprep.subr.bf16.mxu0 0
        %1316 = vmatpush1.bf16.msra.mxu0 %v1306
        %1317 = vmatprep.subr.bf16.mxu0 0
        %1318 = vmatpush1.bf16.msra.mxu0 %v1305
        %1319 = vmatprep.subr.bf16.mxu0 0
        %1320 = vmatpush1.bf16.msra.mxu0 %v1304
        %1321 = vmatprep.subr.bf16.mxu0 0
        %1322 = vmatpush1.bf16.msra.mxu0 %v1303
        %1323 = vmatprep.subr.bf16.mxu0 0
        %1324 = vmatpush1.bf16.msra.mxu0 %v1302
        %1325 = vmatprep.subr.bf16.mxu0 0
        %1326 = vmatpush1.bf16.msra.mxu0 %v1301
        %1327 = vmatprep.subr.bf16.mxu0 0
        %1328 = vmatpush1.bf16.msra.mxu0 %v1300
        %1329 = vmatprep.subr.bf16.mxu0 0
        %1330 = vmatpush1.bf16.msra.mxu0 %v1299
        %1331 = vmatprep.subr.bf16.mxu0 0
        %1332 = vmatpush2.bf16.msra.mxu0 0
        %1333 = vmatprep.subr.bf16.mxu0 0
        %1334 = vmatpush2.bf16.msra.mxu0 0
        %1335 = vmatprep.subr.bf16.mxu0 0
        %1336 = vmatpush2.bf16.msra.mxu0 0
        %1337 = vmatprep.subr.bf16.mxu0 0
        %1338 = vmatpush2.bf16.msra.mxu0 0
        %1339 = vmatprep.subr.bf16.mxu0 0
        %1340 = vmatpush2.bf16.msra.mxu0 0
        %1341 = vmatprep.subr.bf16.mxu0 0
        %1342 = vmatpush2.bf16.msra.mxu0 0
        %1343 = vmatprep.subr.bf16.mxu0 0
        %1344 = vmatpush2.bf16.msra.mxu0 0
        %1345 = vmatprep.subr.bf16.mxu0 0
        %1346 = vmatpush2.bf16.msra.mxu0 0
        %1347 = vmatprep.mubr.bf16.mxu0 0
        %1348 = vmatmul.mubr.bf16.gmra.mxu0 %v1235
        %v1349 = vpop.f32.mrf.mxu0
        %v1350 = vadd.f32 %v1045, %v1349
        %v1351 = vpop.f32.mrf.mxu0
        %v1352 = vpop.f32.mrf.mxu0
        %v1353 = vadd.f32 %v1048, %v1352
        %v1354 = vpop.f32.mrf.mxu0
        %1355 = vmatprep.mubr.bf16.mxu0 0
        %1356 = vmatmul.mubr.bf16.gmra.mxu0 %v1236
        %v1357 = vpop.f32.mrf.mxu0
        %v1358 = vadd.f32 %v1053, %v1357
        %v1359 = vpop.f32.mrf.mxu0
        %v1360 = vpop.f32.mrf.mxu0
        %v1361 = vadd.f32 %v1056, %v1360
        %v1362 = vpop.f32.mrf.mxu0
        %1363 = vmatprep.mubr.bf16.mxu0 0
        %1364 = vmatmul.mubr.bf16.gmra.mxu0 %v1237
        %v1365 = vpop.f32.mrf.mxu0
        %v1366 = vadd.f32 %v1061, %v1365
        %v1367 = vpop.f32.mrf.mxu0
        %v1368 = vpop.f32.mrf.mxu0
        %v1369 = vadd.f32 %v1064, %v1368
        %v1370 = vpop.f32.mrf.mxu0
        %1371 = vmatprep.mubr.bf16.mxu0 0
        %1372 = vmatmul.mubr.bf16.gmra.mxu0 %v1238
        %v1373 = vpop.f32.mrf.mxu0
        %v1374 = vadd.f32 %v1069, %v1373
        %v1375 = vpop.f32.mrf.mxu0
        %v1376 = vpop.f32.mrf.mxu0
        %v1377 = vadd.f32 %v1072, %v1376
        %v1378 = vpop.f32.mrf.mxu0
        %1379 = vmatprep.mubr.bf16.mxu0 0
        %1380 = vmatmul.mubr.bf16.gmra.mxu0 %v1239
        %v1381 = vpop.f32.mrf.mxu0
        %v1382 = vadd.f32 %v1077, %v1381
        %v1383 = vpop.f32.mrf.mxu0
        %v1384 = vpop.f32.mrf.mxu0
        %v1385 = vadd.f32 %v1080, %v1384
        %v1386 = vpop.f32.mrf.mxu0
        %1387 = vmatprep.mubr.bf16.mxu0 0
        %1388 = vmatmul.mubr.bf16.gmra.mxu0 %v1240
        %v1389 = vpop.f32.mrf.mxu0
        %v1390 = vadd.f32 %v1085, %v1389
        %v1391 = vpop.f32.mrf.mxu0
        %v1392 = vpop.f32.mrf.mxu0
        %v1393 = vadd.f32 %v1088, %v1392
        %v1394 = vpop.f32.mrf.mxu0
        %1395 = vmatprep.mubr.bf16.mxu0 0
        %1396 = vmatmul.mubr.bf16.gmra.mxu0 %v1241
        %v1397 = vpop.f32.mrf.mxu0
        %v1398 = vadd.f32 %v1093, %v1397
        %v1399 = vpop.f32.mrf.mxu0
        %v1400 = vpop.f32.mrf.mxu0
        %v1401 = vadd.f32 %v1096, %v1400
        %v1402 = vpop.f32.mrf.mxu0
        %1403 = vmatprep.mubr.bf16.mxu0 0
        %1404 = vmatmul.mubr.bf16.gmra.mxu0 %v1242
        %v1405 = vpop.f32.mrf.mxu0
        %v1406 = vadd.f32 %v1101, %v1405
        %v1407 = vpop.f32.mrf.mxu0
        %v1408 = vpop.f32.mrf.mxu0
        %v1409 = vadd.f32 %v1104, %v1408
        %v1410 = vpop.f32.mrf.mxu0
        %1411 = vmatprep.mubr.bf16.mxu0 0
        %1412 = vmatmul.mubr.bf16.gmra.mxu0 %v1243
        %v1413 = vpop.f32.mrf.mxu0
        %v1414 = vadd.f32 %v1109, %v1413
        %v1415 = vpop.f32.mrf.mxu0
        %v1416 = vpop.f32.mrf.mxu0
        %v1417 = vadd.f32 %v1112, %v1416
        %v1418 = vpop.f32.mrf.mxu0
        %1419 = vmatprep.mubr.bf16.mxu0 0
        %1420 = vmatmul.mubr.bf16.gmra.mxu0 %v1244
        %v1421 = vpop.f32.mrf.mxu0
        %v1422 = vadd.f32 %v1117, %v1421
        %v1423 = vpop.f32.mrf.mxu0
        %v1424 = vpop.f32.mrf.mxu0
        %v1425 = vadd.f32 %v1120, %v1424
        %v1426 = vpop.f32.mrf.mxu0
        %1427 = vmatprep.mubr.bf16.mxu0 0
        %1428 = vmatmul.mubr.bf16.gmra.mxu0 %v1245
        %v1429 = vpop.f32.mrf.mxu0
        %v1430 = vadd.f32 %v1125, %v1429
        %v1431 = vpop.f32.mrf.mxu0
        %v1432 = vpop.f32.mrf.mxu0
        %v1433 = vadd.f32 %v1128, %v1432
        %v1434 = vpop.f32.mrf.mxu0
        %1435 = vmatprep.mubr.bf16.mxu0 0
        %1436 = vmatmul.mubr.bf16.gmra.mxu0 %v1246
        %v1437 = vpop.f32.mrf.mxu0
        %v1438 = vadd.f32 %v1133, %v1437
        %v1439 = vpop.f32.mrf.mxu0
        %v1440 = vpop.f32.mrf.mxu0
        %v1441 = vadd.f32 %v1136, %v1440
        %v1442 = vpop.f32.mrf.mxu0
        %1443 = vmatprep.mubr.bf16.mxu0 0
        %1444 = vmatmul.mubr.bf16.gmra.mxu0 %v1247
        %v1445 = vpop.f32.mrf.mxu0
        %v1446 = vadd.f32 %v1141, %v1445
        %v1447 = vpop.f32.mrf.mxu0
        %v1448 = vpop.f32.mrf.mxu0
        %v1449 = vadd.f32 %v1144, %v1448
        %v1450 = vpop.f32.mrf.mxu0
        %1451 = vmatprep.mubr.bf16.mxu0 0
        %1452 = vmatmul.mubr.bf16.gmra.mxu0 %v1248
        %v1453 = vpop.f32.mrf.mxu0
        %v1454 = vadd.f32 %v1149, %v1453
        %v1455 = vpop.f32.mrf.mxu0
        %v1456 = vpop.f32.mrf.mxu0
        %v1457 = vadd.f32 %v1152, %v1456
        %v1458 = vpop.f32.mrf.mxu0
        %1459 = vmatprep.mubr.bf16.mxu0 0
        %1460 = vmatmul.mubr.bf16.gmra.mxu0 %v1249
        %v1461 = vpop.f32.mrf.mxu0
        %v1462 = vadd.f32 %v1157, %v1461
        %v1463 = vpop.f32.mrf.mxu0
        %v1464 = vpop.f32.mrf.mxu0
        %v1465 = vadd.f32 %v1160, %v1464
        %v1466 = vpop.f32.mrf.mxu0
        %1467 = vmatprep.mubr.bf16.mxu0 0
        %1468 = vmatmul.mubr.bf16.gmra.mxu0 %v1250
        %v1469 = vpop.f32.mrf.mxu0
        %v1470 = vadd.f32 %v1165, %v1469
        %v1471 = vpop.f32.mrf.mxu0
        %v1472 = vpop.f32.mrf.mxu0
        %v1473 = vadd.f32 %v1168, %v1472
        %v1474 = vpop.f32.mrf.mxu0
        %1475 = vdwg.mxu0
        %v1476 = vld [vmem:[#allocation2] sm:$0xe]
        %v1477 = vld [vmem:[#allocation2 + $0xc] sm:$0xe]
        %v1478 = vld [vmem:[#allocation2 + $0x18] sm:$0xe]
        %v1479 = vld [vmem:[#allocation2 + $0x24] sm:$0xe]
        %v1480 = vld [vmem:[#allocation2 + $0x30] sm:$0xe]
        %v1481 = vld [vmem:[#allocation2 + $0x3c] sm:$0xe]
        %v1482 = vld [vmem:[#allocation2 + $0x48] sm:$0xe]
        %v1483 = vld [vmem:[#allocation2 + $0x54] sm:$0xe]
        %v1484 = vld [vmem:[#allocation2 + $0x60] sm:$0xe]
        %v1485 = vld [vmem:[#allocation2 + $0x6c] sm:$0xe]
        %v1486 = vld [vmem:[#allocation2 + $0x78] sm:$0xe]
        %v1487 = vld [vmem:[#allocation2 + $0x84] sm:$0xe]
        %v1488 = vld [vmem:[#allocation2 + $0x90] sm:$0xe]
        %v1489 = vld [vmem:[#allocation2 + $0x9c] sm:$0xe]
        %v1490 = vld [vmem:[#allocation2 + $0xa8] sm:$0xe]
        %v1491 = vld [vmem:[#allocation2 + $0xb4] sm:$0xe]
        %vm1524 = vcmask 1042432
        %vm1525 = vcmask 1046532
        %vm1526 = vmor %vm1524, %vm1525
        %v1527 = vrot.slane %v1476, 5
        %v1528 = vrot.slane %v1527, 4
        %v1529 = vrot.slane %v431, 5
        %v1530 = vsel %vm1526, %v1528, %v1529
        %v1531 = vrot.slane %v1529, 4
        %v1532 = vrot.slane %v478, 5
        %v1533 = vsel %vm1526, %v1531, %v1532
        %v1534 = vrot.slane %v1477, 5
        %v1535 = vrot.slane %v1534, 4
        %v1536 = vrot.slane %v433, 5
        %v1537 = vsel %vm1526, %v1535, %v1536
        %v1538 = vrot.slane %v1536, 4
        %v1539 = vrot.slane %v479, 5
        %v1540 = vsel %vm1526, %v1538, %v1539
        %v1541 = vrot.slane %v1478, 5
        %v1542 = vrot.slane %v1541, 4
        %v1543 = vrot.slane %v435, 5
        %v1544 = vsel %vm1526, %v1542, %v1543
        %v1545 = vrot.slane %v1543, 4
        %v1546 = vrot.slane %v480, 5
        %v1547 = vsel %vm1526, %v1545, %v1546
        %v1548 = vrot.slane %v1479, 5
        %v1549 = vrot.slane %v1548, 4
        %v1550 = vrot.slane %v437, 5
        %v1551 = vsel %vm1526, %v1549, %v1550
        %v1552 = vrot.slane %v1550, 4
        %v1553 = vrot.slane %v481, 5
        %v1554 = vsel %vm1526, %v1552, %v1553
        %v1555 = vrot.slane %v1480, 5
        %v1556 = vrot.slane %v1555, 4
        %v1557 = vrot.slane %v439, 5
        %v1558 = vsel %vm1526, %v1556, %v1557
        %v1559 = vrot.slane %v1557, 4
        %v1560 = vrot.slane %v482, 5
        %v1561 = vsel %vm1526, %v1559, %v1560
        %v1562 = vrot.slane %v1481, 5
        %v1563 = vrot.slane %v1562, 4
        %v1564 = vrot.slane %v441, 5
        %v1565 = vsel %vm1526, %v1563, %v1564
        %v1566 = vrot.slane %v1564, 4
        %v1567 = vrot.slane %v483, 5
        %v1568 = vsel %vm1526, %v1566, %v1567
        %v1569 = vrot.slane %v1482, 5
        %v1570 = vrot.slane %v1569, 4
        %v1571 = vrot.slane %v443, 5
        %v1572 = vsel %vm1526, %v1570, %v1571
        %v1573 = vrot.slane %v1571, 4
        %v1574 = vrot.slane %v484, 5
        %v1575 = vsel %vm1526, %v1573, %v1574
        %v1576 = vrot.slane %v1483, 5
        %v1577 = vrot.slane %v1576, 4
        %v1578 = vrot.slane %v445, 5
        %v1579 = vsel %vm1526, %v1577, %v1578
        %v1580 = vrot.slane %v1578, 4
        %v1581 = vrot.slane %v485, 5
        %v1582 = vsel %vm1526, %v1580, %v1581
        %v1583 = vrot.slane %v1484, 5
        %v1584 = vrot.slane %v1583, 4
        %v1585 = vrot.slane %v447, 5
        %v1586 = vsel %vm1526, %v1584, %v1585
        %v1587 = vrot.slane %v1585, 4
        %v1588 = vrot.slane %v486, 5
        %v1589 = vsel %vm1526, %v1587, %v1588
        %v1590 = vrot.slane %v1485, 5
        %v1591 = vrot.slane %v1590, 4
        %v1592 = vrot.slane %v449, 5
        %v1593 = vsel %vm1526, %v1591, %v1592
        %v1594 = vrot.slane %v1592, 4
        %v1595 = vrot.slane %v487, 5
        %v1596 = vsel %vm1526, %v1594, %v1595
        %v1597 = vrot.slane %v1486, 5
        %v1598 = vrot.slane %v1597, 4
        %v1599 = vrot.slane %v451, 5
        %v1600 = vsel %vm1526, %v1598, %v1599
        %v1601 = vrot.slane %v1599, 4
        %v1602 = vrot.slane %v488, 5
        %v1603 = vsel %vm1526, %v1601, %v1602
        %v1604 = vrot.slane %v1487, 5
        %v1605 = vrot.slane %v1604, 4
        %v1606 = vrot.slane %v453, 5
        %v1607 = vsel %vm1526, %v1605, %v1606
        %v1608 = vrot.slane %v1606, 4
        %v1609 = vrot.slane %v489, 5
        %v1610 = vsel %vm1526, %v1608, %v1609
        %v1611 = vrot.slane %v1488, 5
        %v1612 = vrot.slane %v1611, 4
        %v1613 = vrot.slane %v455, 5
        %v1614 = vsel %vm1526, %v1612, %v1613
        %v1615 = vrot.slane %v1613, 4
        %v1616 = vrot.slane %v490, 5
        %v1617 = vsel %vm1526, %v1615, %v1616
        %v1618 = vrot.slane %v1489, 5
        %v1619 = vrot.slane %v1618, 4
        %v1620 = vrot.slane %v457, 5
        %v1621 = vsel %vm1526, %v1619, %v1620
        %v1622 = vrot.slane %v1620, 4
        %v1623 = vrot.slane %v491, 5
        %v1624 = vsel %vm1526, %v1622, %v1623
        %v1625 = vrot.slane %v1490, 5
        %v1626 = vrot.slane %v1625, 4
        %v1627 = vrot.slane %v459, 5
        %v1628 = vsel %vm1526, %v1626, %v1627
        %v1629 = vrot.slane %v1627, 4
        %v1630 = vrot.slane %v492, 5
        %v1631 = vsel %vm1526, %v1629, %v1630
        %v1632 = vrot.slane %v1491, 5
        %v1633 = vrot.slane %v1632, 4
        %v1634 = vrot.slane %v461, 5
        %v1635 = vsel %vm1526, %v1633, %v1634
        %v1636 = vrot.slane %v1634, 4
        %v1637 = vrot.slane %v493, 5
        %v1638 = vsel %vm1526, %v1636, %v1637
        %s1639 = scalar_lea.vmem %s2, 128
        %v1640 = vld [vmem:[%s1639] sm:$0xf]
        %v1641 = vld [vmem:[%s1639 + $0x4] sm:$0xf]
        %v1642 = vld [vmem:[%s1639 + $0x8] sm:$0xf]
        %v1643 = vld [vmem:[%s1639 + $0xc] sm:$0xf]
        %v1644 = vld [vmem:[%s1639 + $0x10] sm:$0xf]
        %v1645 = vld [vmem:[%s1639 + $0x14] sm:$0xf]
        %v1646 = vld [vmem:[%s1639 + $0x18] sm:$0xf]
        %v1647 = vld [vmem:[%s1639 + $0x1c] sm:$0xf]
        %v1648 = vld [vmem:[%s1639 + $0x20] sm:$0xf]
        %v1649 = vld [vmem:[%s1639 + $0x24] sm:$0xf]
        %v1650 = vld [vmem:[%s1639 + $0x28] sm:$0xf]
        %v1651 = vld [vmem:[%s1639 + $0x2c] sm:$0xf]
        %v1652 = vld [vmem:[%s1639 + $0x30] sm:$0xf]
        %v1653 = vld [vmem:[%s1639 + $0x34] sm:$0xf]
        %v1654 = vld [vmem:[%s1639 + $0x38] sm:$0xf]
        %v1655 = vld [vmem:[%s1639 + $0x3c] sm:$0xf]
        %v1656 = vunpack.c.l.b16 %v1530
        %v1657 = vunpack.c.l.b16 %v1533
        %v1658 = vunpack.c.l.b16 %v1537
        %v1659 = vunpack.c.l.b16 %v1540
        %v1660 = vunpack.c.l.b16 %v1544
        %v1661 = vunpack.c.l.b16 %v1547
        %v1662 = vunpack.c.l.b16 %v1551
        %v1663 = vunpack.c.l.b16 %v1554
        %v1664 = vunpack.c.l.b16 %v1558
        %v1665 = vunpack.c.l.b16 %v1561
        %v1666 = vunpack.c.l.b16 %v1565
        %v1667 = vunpack.c.l.b16 %v1568
        %v1668 = vunpack.c.l.b16 %v1572
        %v1669 = vunpack.c.l.b16 %v1575
        %v1670 = vunpack.c.l.b16 %v1579
        %v1671 = vunpack.c.l.b16 %v1582
        %v1672 = vunpack.c.l.b16 %v1586
        %v1673 = vunpack.c.l.b16 %v1589
        %v1674 = vunpack.c.l.b16 %v1593
        %v1675 = vunpack.c.l.b16 %v1596
        %v1676 = vunpack.c.l.b16 %v1600
        %v1677 = vunpack.c.l.b16 %v1603
        %v1678 = vunpack.c.l.b16 %v1607
        %v1679 = vunpack.c.l.b16 %v1610
        %v1680 = vunpack.c.l.b16 %v1614
        %v1681 = vunpack.c.l.b16 %v1617
        %v1682 = vunpack.c.l.b16 %v1621
        %v1683 = vunpack.c.l.b16 %v1624
        %v1684 = vunpack.c.l.b16 %v1628
        %v1685 = vunpack.c.l.b16 %v1631
        %v1686 = vunpack.c.l.b16 %v1635
        %v1687 = vunpack.c.l.b16 %v1638
        %v1688 = vpack.c.b16 %v1657, %v1656
        %v1689 = vpack.c.b16 %v1659, %v1658
        %v1690 = vpack.c.b16 %v1661, %v1660
        %v1691 = vpack.c.b16 %v1663, %v1662
        %v1692 = vpack.c.b16 %v1665, %v1664
        %v1693 = vpack.c.b16 %v1667, %v1666
        %v1694 = vpack.c.b16 %v1669, %v1668
        %v1695 = vpack.c.b16 %v1671, %v1670
        %v1696 = vpack.c.b16 %v1673, %v1672
        %v1697 = vpack.c.b16 %v1675, %v1674
        %v1698 = vpack.c.b16 %v1677, %v1676
        %v1699 = vpack.c.b16 %v1679, %v1678
        %v1700 = vpack.c.b16 %v1681, %v1680
        %v1701 = vpack.c.b16 %v1683, %v1682
        %v1702 = vpack.c.b16 %v1685, %v1684
        %v1703 = vpack.c.b16 %v1687, %v1686
        %v1736 = vunpack.c.l.b16 %v1640
        %v1737 = vunpack.c.l.b16 %v1641
        %v1738 = vunpack.c.l.b16 %v1642
        %v1739 = vunpack.c.l.b16 %v1643
        %v1740 = vunpack.c.l.b16 %v1644
        %v1741 = vunpack.c.l.b16 %v1645
        %v1742 = vunpack.c.l.b16 %v1646
        %v1743 = vunpack.c.l.b16 %v1647
        %v1744 = vunpack.c.l.b16 %v1648
        %v1745 = vunpack.c.l.b16 %v1649
        %v1746 = vunpack.c.l.b16 %v1650
        %v1747 = vunpack.c.l.b16 %v1651
        %v1748 = vunpack.c.l.b16 %v1652
        %v1749 = vunpack.c.l.b16 %v1653
        %v1750 = vunpack.c.l.b16 %v1654
        %v1751 = vunpack.c.l.b16 %v1655
        %v1752 = vpack.c.b16 %v1737, %v1736
        %v1753 = vpack.c.b16 %v1739, %v1738
        %v1754 = vpack.c.b16 %v1741, %v1740
        %v1755 = vpack.c.b16 %v1743, %v1742
        %v1756 = vpack.c.b16 %v1745, %v1744
        %v1757 = vpack.c.b16 %v1747, %v1746
        %v1758 = vpack.c.b16 %v1749, %v1748
        %v1759 = vpack.c.b16 %v1751, %v1750
        %1768 = vmatprep.subr.bf16.mxu0 0
        %1769 = vmatpush1.bf16.msra.mxu0 %v1759
        %1770 = vmatprep.subr.bf16.mxu0 0
        %1771 = vmatpush1.bf16.msra.mxu0 %v1758
        %1772 = vmatprep.subr.bf16.mxu0 0
        %1773 = vmatpush1.bf16.msra.mxu0 %v1757
        %1774 = vmatprep.subr.bf16.mxu0 0
        %1775 = vmatpush1.bf16.msra.mxu0 %v1756
        %1776 = vmatprep.subr.bf16.mxu0 0
        %1777 = vmatpush1.bf16.msra.mxu0 %v1755
        %1778 = vmatprep.subr.bf16.mxu0 0
        %1779 = vmatpush1.bf16.msra.mxu0 %v1754
        %1780 = vmatprep.subr.bf16.mxu0 0
        %1781 = vmatpush1.bf16.msra.mxu0 %v1753
        %1782 = vmatprep.subr.bf16.mxu0 0
        %1783 = vmatpush1.bf16.msra.mxu0 %v1752
        %1784 = vmatprep.subr.bf16.mxu0 0
        %1785 = vmatpush2.bf16.msra.mxu0 0
        %1786 = vmatprep.subr.bf16.mxu0 0
        %1787 = vmatpush2.bf16.msra.mxu0 0
        %1788 = vmatprep.subr.bf16.mxu0 0
        %1789 = vmatpush2.bf16.msra.mxu0 0
        %1790 = vmatprep.subr.bf16.mxu0 0
        %1791 = vmatpush2.bf16.msra.mxu0 0
        %1792 = vmatprep.subr.bf16.mxu0 0
        %1793 = vmatpush2.bf16.msra.mxu0 0
        %1794 = vmatprep.subr.bf16.mxu0 0
        %1795 = vmatpush2.bf16.msra.mxu0 0
        %1796 = vmatprep.subr.bf16.mxu0 0
        %1797 = vmatpush2.bf16.msra.mxu0 0
        %1798 = vmatprep.subr.bf16.mxu0 0
        %1799 = vmatpush2.bf16.msra.mxu0 0
        %1800 = vmatprep.mubr.bf16.mxu0 0
        %1801 = vmatmul.mubr.bf16.gmra.mxu0 %v1688
        %v1802 = vpop.f32.mrf.mxu0
        %v1803 = vadd.f32 0.0, %v1802
        %v1804 = vpop.f32.mrf.mxu0
        %v1805 = vpop.f32.mrf.mxu0
        %v1806 = vadd.f32 0.0, %v1805
        %v1807 = vpop.f32.mrf.mxu0
        %1808 = vmatprep.mubr.bf16.mxu0 0
        %1809 = vmatmul.mubr.bf16.gmra.mxu0 %v1689
        %v1810 = vpop.f32.mrf.mxu0
        %v1811 = vadd.f32 0.0, %v1810
        %v1812 = vpop.f32.mrf.mxu0
        %v1813 = vpop.f32.mrf.mxu0
        %v1814 = vadd.f32 0.0, %v1813
        %v1815 = vpop.f32.mrf.mxu0
        %1816 = vmatprep.mubr.bf16.mxu0 0
        %1817 = vmatmul.mubr.bf16.gmra.mxu0 %v1690
        %v1818 = vpop.f32.mrf.mxu0
        %v1819 = vadd.f32 0.0, %v1818
        %v1820 = vpop.f32.mrf.mxu0
        %v1821 = vpop.f32.mrf.mxu0
        %v1822 = vadd.f32 0.0, %v1821
        %v1823 = vpop.f32.mrf.mxu0
        %1824 = vmatprep.mubr.bf16.mxu0 0
        %1825 = vmatmul.mubr.bf16.gmra.mxu0 %v1691
        %v1826 = vpop.f32.mrf.mxu0
        %v1827 = vadd.f32 0.0, %v1826
        %v1828 = vpop.f32.mrf.mxu0
        %v1829 = vpop.f32.mrf.mxu0
        %v1830 = vadd.f32 0.0, %v1829
        %v1831 = vpop.f32.mrf.mxu0
        %1832 = vmatprep.mubr.bf16.mxu0 0
        %1833 = vmatmul.mubr.bf16.gmra.mxu0 %v1692
        %v1834 = vpop.f32.mrf.mxu0
        %v1835 = vadd.f32 0.0, %v1834
        %v1836 = vpop.f32.mrf.mxu0
        %v1837 = vpop.f32.mrf.mxu0
        %v1838 = vadd.f32 0.0, %v1837
        %v1839 = vpop.f32.mrf.mxu0
        %1840 = vmatprep.mubr.bf16.mxu0 0
        %1841 = vmatmul.mubr.bf16.gmra.mxu0 %v1693
        %v1842 = vpop.f32.mrf.mxu0
        %v1843 = vadd.f32 0.0, %v1842
        %v1844 = vpop.f32.mrf.mxu0
        %v1845 = vpop.f32.mrf.mxu0
        %v1846 = vadd.f32 0.0, %v1845
        %v1847 = vpop.f32.mrf.mxu0
        %1848 = vmatprep.mubr.bf16.mxu0 0
        %1849 = vmatmul.mubr.bf16.gmra.mxu0 %v1694
        %v1850 = vpop.f32.mrf.mxu0
        %v1851 = vadd.f32 0.0, %v1850
        %v1852 = vpop.f32.mrf.mxu0
        %v1853 = vpop.f32.mrf.mxu0
        %v1854 = vadd.f32 0.0, %v1853
        %v1855 = vpop.f32.mrf.mxu0
        %1856 = vmatprep.mubr.bf16.mxu0 0
        %1857 = vmatmul.mubr.bf16.gmra.mxu0 %v1695
        %v1858 = vpop.f32.mrf.mxu0
        %v1859 = vadd.f32 0.0, %v1858
        %v1860 = vpop.f32.mrf.mxu0
        %v1861 = vpop.f32.mrf.mxu0
        %v1862 = vadd.f32 0.0, %v1861
        %v1863 = vpop.f32.mrf.mxu0
        %1864 = vmatprep.mubr.bf16.mxu0 0
        %1865 = vmatmul.mubr.bf16.gmra.mxu0 %v1696
        %v1866 = vpop.f32.mrf.mxu0
        %v1867 = vadd.f32 0.0, %v1866
        %v1868 = vpop.f32.mrf.mxu0
        %v1869 = vpop.f32.mrf.mxu0
        %v1870 = vadd.f32 0.0, %v1869
        %v1871 = vpop.f32.mrf.mxu0
        %1872 = vmatprep.mubr.bf16.mxu0 0
        %1873 = vmatmul.mubr.bf16.gmra.mxu0 %v1697
        %v1874 = vpop.f32.mrf.mxu0
        %v1875 = vadd.f32 0.0, %v1874
        %v1876 = vpop.f32.mrf.mxu0
        %v1877 = vpop.f32.mrf.mxu0
        %v1878 = vadd.f32 0.0, %v1877
        %v1879 = vpop.f32.mrf.mxu0
        %1880 = vmatprep.mubr.bf16.mxu0 0
        %1881 = vmatmul.mubr.bf16.gmra.mxu0 %v1698
        %v1882 = vpop.f32.mrf.mxu0
        %v1883 = vadd.f32 0.0, %v1882
        %v1884 = vpop.f32.mrf.mxu0
        %v1885 = vpop.f32.mrf.mxu0
        %v1886 = vadd.f32 0.0, %v1885
        %v1887 = vpop.f32.mrf.mxu0
        %1888 = vmatprep.mubr.bf16.mxu0 0
        %1889 = vmatmul.mubr.bf16.gmra.mxu0 %v1699
        %v1890 = vpop.f32.mrf.mxu0
        %v1891 = vadd.f32 0.0, %v1890
        %v1892 = vpop.f32.mrf.mxu0
        %v1893 = vpop.f32.mrf.mxu0
        %v1894 = vadd.f32 0.0, %v1893
        %v1895 = vpop.f32.mrf.mxu0
        %1896 = vmatprep.mubr.bf16.mxu0 0
        %1897 = vmatmul.mubr.bf16.gmra.mxu0 %v1700
        %v1898 = vpop.f32.mrf.mxu0
        %v1899 = vadd.f32 0.0, %v1898
        %v1900 = vpop.f32.mrf.mxu0
        %v1901 = vpop.f32.mrf.mxu0
        %v1902 = vadd.f32 0.0, %v1901
        %v1903 = vpop.f32.mrf.mxu0
        %1904 = vmatprep.mubr.bf16.mxu0 0
        %1905 = vmatmul.mubr.bf16.gmra.mxu0 %v1701
        %v1906 = vpop.f32.mrf.mxu0
        %v1907 = vadd.f32 0.0, %v1906
        %v1908 = vpop.f32.mrf.mxu0
        %v1909 = vpop.f32.mrf.mxu0
        %v1910 = vadd.f32 0.0, %v1909
        %v1911 = vpop.f32.mrf.mxu0
        %1912 = vmatprep.mubr.bf16.mxu0 0
        %1913 = vmatmul.mubr.bf16.gmra.mxu0 %v1702
        %v1914 = vpop.f32.mrf.mxu0
        %v1915 = vadd.f32 0.0, %v1914
        %v1916 = vpop.f32.mrf.mxu0
        %v1917 = vpop.f32.mrf.mxu0
        %v1918 = vadd.f32 0.0, %v1917
        %v1919 = vpop.f32.mrf.mxu0
        %1920 = vmatprep.mubr.bf16.mxu0 0
        %1921 = vmatmul.mubr.bf16.gmra.mxu0 %v1703
        %v1922 = vpop.f32.mrf.mxu0
        %v1923 = vadd.f32 0.0, %v1922
        %v1924 = vpop.f32.mrf.mxu0
        %v1925 = vpop.f32.mrf.mxu0
        %v1926 = vadd.f32 0.0, %v1925
        %v1927 = vpop.f32.mrf.mxu0
        %1928 = vdwg.mxu0
        %v1929 = vadd.f32 %v1350, %v1803
        %v1930 = vadd.f32 %v1353, %v1806
        %v1931 = vadd.f32 %v1358, %v1811
        %v1932 = vadd.f32 %v1361, %v1814
        %v1933 = vadd.f32 %v1366, %v1819
        %v1934 = vadd.f32 %v1369, %v1822
        %v1935 = vadd.f32 %v1374, %v1827
        %v1936 = vadd.f32 %v1377, %v1830
        %v1937 = vadd.f32 %v1382, %v1835
        %v1938 = vadd.f32 %v1385, %v1838
        %v1939 = vadd.f32 %v1390, %v1843
        %v1940 = vadd.f32 %v1393, %v1846
        %v1941 = vadd.f32 %v1398, %v1851
        %v1942 = vadd.f32 %v1401, %v1854
        %v1943 = vadd.f32 %v1406, %v1859
        %v1944 = vadd.f32 %v1409, %v1862
        %v1945 = vadd.f32 %v1414, %v1867
        %v1946 = vadd.f32 %v1417, %v1870
        %v1947 = vadd.f32 %v1422, %v1875
        %v1948 = vadd.f32 %v1425, %v1878
        %v1949 = vadd.f32 %v1430, %v1883
        %v1950 = vadd.f32 %v1433, %v1886
        %v1951 = vadd.f32 %v1438, %v1891
        %v1952 = vadd.f32 %v1441, %v1894
        %v1953 = vadd.f32 %v1446, %v1899
        %v1954 = vadd.f32 %v1449, %v1902
        %v1955 = vadd.f32 %v1454, %v1907
        %v1956 = vadd.f32 %v1457, %v1910
        %v1957 = vadd.f32 %v1462, %v1915
        %v1958 = vadd.f32 %v1465, %v1918
        %v1959 = vadd.f32 %v1470, %v1923
        %v1960 = vadd.f32 %v1473, %v1926
        %s1961 = scalar_lea.vmem [#allocation2], 12
        %v1962 = vld [vmem:[%s1961] sm:$0xf]
        %v1963 = vld [vmem:[%s1961 + $0x4] sm:$0xf]
        %v1964 = vld [vmem:[%s1961 + $0xc] sm:$0xf]
        %v1965 = vld [vmem:[%s1961 + $0x10] sm:$0xf]
        %v1966 = vld [vmem:[%s1961 + $0x18] sm:$0xf]
        %v1967 = vld [vmem:[%s1961 + $0x1c] sm:$0xf]
        %v1968 = vld [vmem:[%s1961 + $0x24] sm:$0xf]
        %v1969 = vld [vmem:[%s1961 + $0x28] sm:$0xf]
        %v1970 = vld [vmem:[%s1961 + $0x30] sm:$0xf]
        %v1971 = vld [vmem:[%s1961 + $0x34] sm:$0xf]
        %v1972 = vld [vmem:[%s1961 + $0x3c] sm:$0xf]
        %v1973 = vld [vmem:[%s1961 + $0x40] sm:$0xf]
        %v1974 = vld [vmem:[%s1961 + $0x48] sm:$0xf]
        %v1975 = vld [vmem:[%s1961 + $0x4c] sm:$0xf]
        %v1976 = vld [vmem:[%s1961 + $0x54] sm:$0xf]
        %v1977 = vld [vmem:[%s1961 + $0x58] sm:$0xf]
        %v1978 = vld [vmem:[%s1961 + $0x60] sm:$0xf]
        %v1979 = vld [vmem:[%s1961 + $0x64] sm:$0xf]
        %v1980 = vld [vmem:[%s1961 + $0x6c] sm:$0xf]
        %v1981 = vld [vmem:[%s1961 + $0x70] sm:$0xf]
        %v1982 = vld [vmem:[%s1961 + $0x78] sm:$0xf]
        %v1983 = vld [vmem:[%s1961 + $0x7c] sm:$0xf]
        %v1984 = vld [vmem:[%s1961 + $0x84] sm:$0xf]
        %v1985 = vld [vmem:[%s1961 + $0x88] sm:$0xf]
        %v1986 = vld [vmem:[%s1961 + $0x90] sm:$0xf]
        %v1987 = vld [vmem:[%s1961 + $0x94] sm:$0xf]
        %v1988 = vld [vmem:[%s1961 + $0x9c] sm:$0xf]
        %v1989 = vld [vmem:[%s1961 + $0xa0] sm:$0xf]
        %v1990 = vld [vmem:[%s1961 + $0xa8] sm:$0xf]
        %v1991 = vld [vmem:[%s1961 + $0xac] sm:$0xf]
        %v1992 = vld [vmem:[%s1961 + $0xb4] sm:$0xf]
        %v1993 = vld [vmem:[%s1961 + $0xb8] sm:$0xf]
        %s1994 = scalar_lea.vmem %s2, 192
        %v1995 = vld [vmem:[%s1994] sm:$0xf]
        %v1996 = vld [vmem:[%s1994 + $0x4] sm:$0xf]
        %v1997 = vld [vmem:[%s1994 + $0x8] sm:$0xf]
        %v1998 = vld [vmem:[%s1994 + $0xc] sm:$0xf]
        %v1999 = vld [vmem:[%s1994 + $0x10] sm:$0xf]
        %v2000 = vld [vmem:[%s1994 + $0x14] sm:$0xf]
        %v2001 = vld [vmem:[%s1994 + $0x18] sm:$0xf]
        %v2002 = vld [vmem:[%s1994 + $0x1c] sm:$0xf]
        %v2003 = vld [vmem:[%s1994 + $0x20] sm:$0xf]
        %v2004 = vld [vmem:[%s1994 + $0x24] sm:$0xf]
        %v2005 = vld [vmem:[%s1994 + $0x28] sm:$0xf]
        %v2006 = vld [vmem:[%s1994 + $0x2c] sm:$0xf]
        %v2007 = vld [vmem:[%s1994 + $0x30] sm:$0xf]
        %v2008 = vld [vmem:[%s1994 + $0x34] sm:$0xf]
        %v2009 = vld [vmem:[%s1994 + $0x38] sm:$0xf]
        %v2010 = vld [vmem:[%s1994 + $0x3c] sm:$0xf]
        %v2043 = vunpack.c.l.b16 %v1962
        %v2044 = vunpack.c.l.b16 %v1963
        %v2045 = vunpack.c.l.b16 %v1964
        %v2046 = vunpack.c.l.b16 %v1965
        %v2047 = vunpack.c.l.b16 %v1966
        %v2048 = vunpack.c.l.b16 %v1967
        %v2049 = vunpack.c.l.b16 %v1968
        %v2050 = vunpack.c.l.b16 %v1969
        %v2051 = vunpack.c.l.b16 %v1970
        %v2052 = vunpack.c.l.b16 %v1971
        %v2053 = vunpack.c.l.b16 %v1972
        %v2054 = vunpack.c.l.b16 %v1973
        %v2055 = vunpack.c.l.b16 %v1974
        %v2056 = vunpack.c.l.b16 %v1975
        %v2057 = vunpack.c.l.b16 %v1976
        %v2058 = vunpack.c.l.b16 %v1977
        %v2059 = vunpack.c.l.b16 %v1978
        %v2060 = vunpack.c.l.b16 %v1979
        %v2061 = vunpack.c.l.b16 %v1980
        %v2062 = vunpack.c.l.b16 %v1981
        %v2063 = vunpack.c.l.b16 %v1982
        %v2064 = vunpack.c.l.b16 %v1983
        %v2065 = vunpack.c.l.b16 %v1984
        %v2066 = vunpack.c.l.b16 %v1985
        %v2067 = vunpack.c.l.b16 %v1986
        %v2068 = vunpack.c.l.b16 %v1987
        %v2069 = vunpack.c.l.b16 %v1988
        %v2070 = vunpack.c.l.b16 %v1989
        %v2071 = vunpack.c.l.b16 %v1990
        %v2072 = vunpack.c.l.b16 %v1991
        %v2073 = vunpack.c.l.b16 %v1992
        %v2074 = vunpack.c.l.b16 %v1993
        %v2075 = vpack.c.b16 %v2044, %v2043
        %v2076 = vpack.c.b16 %v2046, %v2045
        %v2077 = vpack.c.b16 %v2048, %v2047
        %v2078 = vpack.c.b16 %v2050, %v2049
        %v2079 = vpack.c.b16 %v2052, %v2051
        %v2080 = vpack.c.b16 %v2054, %v2053
        %v2081 = vpack.c.b16 %v2056, %v2055
        %v2082 = vpack.c.b16 %v2058, %v2057
        %v2083 = vpack.c.b16 %v2060, %v2059
        %v2084 = vpack.c.b16 %v2062, %v2061
        %v2085 = vpack.c.b16 %v2064, %v2063
        %v2086 = vpack.c.b16 %v2066, %v2065
        %v2087 = vpack.c.b16 %v2068, %v2067
        %v2088 = vpack.c.b16 %v2070, %v2069
        %v2089 = vpack.c.b16 %v2072, %v2071
        %v2090 = vpack.c.b16 %v2074, %v2073
        %v2123 = vunpack.c.l.b16 %v1995
        %v2124 = vunpack.c.l.b16 %v1996
        %v2125 = vunpack.c.l.b16 %v1997
        %v2126 = vunpack.c.l.b16 %v1998
        %v2127 = vunpack.c.l.b16 %v1999
        %v2128 = vunpack.c.l.b16 %v2000
        %v2129 = vunpack.c.l.b16 %v2001
        %v2130 = vunpack.c.l.b16 %v2002
        %v2131 = vunpack.c.l.b16 %v2003
        %v2132 = vunpack.c.l.b16 %v2004
        %v2133 = vunpack.c.l.b16 %v2005
        %v2134 = vunpack.c.l.b16 %v2006
        %v2135 = vunpack.c.l.b16 %v2007
        %v2136 = vunpack.c.l.b16 %v2008
        %v2137 = vunpack.c.l.b16 %v2009
        %v2138 = vunpack.c.l.b16 %v2010
        %v2139 = vpack.c.b16 %v2124, %v2123
        %v2140 = vpack.c.b16 %v2126, %v2125
        %v2141 = vpack.c.b16 %v2128, %v2127
        %v2142 = vpack.c.b16 %v2130, %v2129
        %v2143 = vpack.c.b16 %v2132, %v2131
        %v2144 = vpack.c.b16 %v2134, %v2133
        %v2145 = vpack.c.b16 %v2136, %v2135
        %v2146 = vpack.c.b16 %v2138, %v2137
        %2155 = vmatprep.subr.bf16.mxu0 0
        %2156 = vmatpush1.bf16.msra.mxu0 %v2146
        %2157 = vmatprep.subr.bf16.mxu0 0
        %2158 = vmatpush1.bf16.msra.mxu0 %v2145
        %2159 = vmatprep.subr.bf16.mxu0 0
        %2160 = vmatpush1.bf16.msra.mxu0 %v2144
        %2161 = vmatprep.subr.bf16.mxu0 0
        %2162 = vmatpush1.bf16.msra.mxu0 %v2143
        %2163 = vmatprep.subr.bf16.mxu0 0
        %2164 = vmatpush1.bf16.msra.mxu0 %v2142
        %2165 = vmatprep.subr.bf16.mxu0 0
        %2166 = vmatpush1.bf16.msra.mxu0 %v2141
        %2167 = vmatprep.subr.bf16.mxu0 0
        %2168 = vmatpush1.bf16.msra.mxu0 %v2140
        %2169 = vmatprep.subr.bf16.mxu0 0
        %2170 = vmatpush1.bf16.msra.mxu0 %v2139
        %2171 = vmatprep.subr.bf16.mxu0 0
        %2172 = vmatpush2.bf16.msra.mxu0 0
        %2173 = vmatprep.subr.bf16.mxu0 0
        %2174 = vmatpush2.bf16.msra.mxu0 0
        %2175 = vmatprep.subr.bf16.mxu0 0
        %2176 = vmatpush2.bf16.msra.mxu0 0
        %2177 = vmatprep.subr.bf16.mxu0 0
        %2178 = vmatpush2.bf16.msra.mxu0 0
        %2179 = vmatprep.subr.bf16.mxu0 0
        %2180 = vmatpush2.bf16.msra.mxu0 0
        %2181 = vmatprep.subr.bf16.mxu0 0
        %2182 = vmatpush2.bf16.msra.mxu0 0
        %2183 = vmatprep.subr.bf16.mxu0 0
        %2184 = vmatpush2.bf16.msra.mxu0 0
        %2185 = vmatprep.subr.bf16.mxu0 0
        %2186 = vmatpush2.bf16.msra.mxu0 0
        %2187 = vmatprep.mubr.bf16.mxu0 0
        %2188 = vmatmul.mubr.bf16.gmra.mxu0 %v2075
        %v2189 = vpop.f32.mrf.mxu0
        %v2190 = vadd.f32 0.0, %v2189
        %v2191 = vpop.f32.mrf.mxu0
        %v2192 = vpop.f32.mrf.mxu0
        %v2193 = vadd.f32 0.0, %v2192
        %v2194 = vpop.f32.mrf.mxu0
        %2195 = vmatprep.mubr.bf16.mxu0 0
        %2196 = vmatmul.mubr.bf16.gmra.mxu0 %v2076
        %v2197 = vpop.f32.mrf.mxu0
        %v2198 = vadd.f32 0.0, %v2197
        %v2199 = vpop.f32.mrf.mxu0
        %v2200 = vpop.f32.mrf.mxu0
        %v2201 = vadd.f32 0.0, %v2200
        %v2202 = vpop.f32.mrf.mxu0
        %2203 = vmatprep.mubr.bf16.mxu0 0
        %2204 = vmatmul.mubr.bf16.gmra.mxu0 %v2077
        %v2205 = vpop.f32.mrf.mxu0
        %v2206 = vadd.f32 0.0, %v2205
        %v2207 = vpop.f32.mrf.mxu0
        %v2208 = vpop.f32.mrf.mxu0
        %v2209 = vadd.f32 0.0, %v2208
        %v2210 = vpop.f32.mrf.mxu0
        %2211 = vmatprep.mubr.bf16.mxu0 0
        %2212 = vmatmul.mubr.bf16.gmra.mxu0 %v2078
        %v2213 = vpop.f32.mrf.mxu0
        %v2214 = vadd.f32 0.0, %v2213
        %v2215 = vpop.f32.mrf.mxu0
        %v2216 = vpop.f32.mrf.mxu0
        %v2217 = vadd.f32 0.0, %v2216
        %v2218 = vpop.f32.mrf.mxu0
        %2219 = vmatprep.mubr.bf16.mxu0 0
        %2220 = vmatmul.mubr.bf16.gmra.mxu0 %v2079
        %v2221 = vpop.f32.mrf.mxu0
        %v2222 = vadd.f32 0.0, %v2221
        %v2223 = vpop.f32.mrf.mxu0
        %v2224 = vpop.f32.mrf.mxu0
        %v2225 = vadd.f32 0.0, %v2224
        %v2226 = vpop.f32.mrf.mxu0
        %2227 = vmatprep.mubr.bf16.mxu0 0
        %2228 = vmatmul.mubr.bf16.gmra.mxu0 %v2080
        %v2229 = vpop.f32.mrf.mxu0
        %v2230 = vadd.f32 0.0, %v2229
        %v2231 = vpop.f32.mrf.mxu0
        %v2232 = vpop.f32.mrf.mxu0
        %v2233 = vadd.f32 0.0, %v2232
        %v2234 = vpop.f32.mrf.mxu0
        %2235 = vmatprep.mubr.bf16.mxu0 0
        %2236 = vmatmul.mubr.bf16.gmra.mxu0 %v2081
        %v2237 = vpop.f32.mrf.mxu0
        %v2238 = vadd.f32 0.0, %v2237
        %v2239 = vpop.f32.mrf.mxu0
        %v2240 = vpop.f32.mrf.mxu0
        %v2241 = vadd.f32 0.0, %v2240
        %v2242 = vpop.f32.mrf.mxu0
        %2243 = vmatprep.mubr.bf16.mxu0 0
        %2244 = vmatmul.mubr.bf16.gmra.mxu0 %v2082
        %v2245 = vpop.f32.mrf.mxu0
        %v2246 = vadd.f32 0.0, %v2245
        %v2247 = vpop.f32.mrf.mxu0
        %v2248 = vpop.f32.mrf.mxu0
        %v2249 = vadd.f32 0.0, %v2248
        %v2250 = vpop.f32.mrf.mxu0
        %2251 = vmatprep.mubr.bf16.mxu0 0
        %2252 = vmatmul.mubr.bf16.gmra.mxu0 %v2083
        %v2253 = vpop.f32.mrf.mxu0
        %v2254 = vadd.f32 0.0, %v2253
        %v2255 = vpop.f32.mrf.mxu0
        %v2256 = vpop.f32.mrf.mxu0
        %v2257 = vadd.f32 0.0, %v2256
        %v2258 = vpop.f32.mrf.mxu0
        %2259 = vmatprep.mubr.bf16.mxu0 0
        %2260 = vmatmul.mubr.bf16.gmra.mxu0 %v2084
        %v2261 = vpop.f32.mrf.mxu0
        %v2262 = vadd.f32 0.0, %v2261
        %v2263 = vpop.f32.mrf.mxu0
        %v2264 = vpop.f32.mrf.mxu0
        %v2265 = vadd.f32 0.0, %v2264
        %v2266 = vpop.f32.mrf.mxu0
        %2267 = vmatprep.mubr.bf16.mxu0 0
        %2268 = vmatmul.mubr.bf16.gmra.mxu0 %v2085
        %v2269 = vpop.f32.mrf.mxu0
        %v2270 = vadd.f32 0.0, %v2269
        %v2271 = vpop.f32.mrf.mxu0
        %v2272 = vpop.f32.mrf.mxu0
        %v2273 = vadd.f32 0.0, %v2272
        %v2274 = vpop.f32.mrf.mxu0
        %2275 = vmatprep.mubr.bf16.mxu0 0
        %2276 = vmatmul.mubr.bf16.gmra.mxu0 %v2086
        %v2277 = vpop.f32.mrf.mxu0
        %v2278 = vadd.f32 0.0, %v2277
        %v2279 = vpop.f32.mrf.mxu0
        %v2280 = vpop.f32.mrf.mxu0
        %v2281 = vadd.f32 0.0, %v2280
        %v2282 = vpop.f32.mrf.mxu0
        %2283 = vmatprep.mubr.bf16.mxu0 0
        %2284 = vmatmul.mubr.bf16.gmra.mxu0 %v2087
        %v2285 = vpop.f32.mrf.mxu0
        %v2286 = vadd.f32 0.0, %v2285
        %v2287 = vpop.f32.mrf.mxu0
        %v2288 = vpop.f32.mrf.mxu0
        %v2289 = vadd.f32 0.0, %v2288
        %v2290 = vpop.f32.mrf.mxu0
        %2291 = vmatprep.mubr.bf16.mxu0 0
        %2292 = vmatmul.mubr.bf16.gmra.mxu0 %v2088
        %v2293 = vpop.f32.mrf.mxu0
        %v2294 = vadd.f32 0.0, %v2293
        %v2295 = vpop.f32.mrf.mxu0
        %v2296 = vpop.f32.mrf.mxu0
        %v2297 = vadd.f32 0.0, %v2296
        %v2298 = vpop.f32.mrf.mxu0
        %2299 = vmatprep.mubr.bf16.mxu0 0
        %2300 = vmatmul.mubr.bf16.gmra.mxu0 %v2089
        %v2301 = vpop.f32.mrf.mxu0
        %v2302 = vadd.f32 0.0, %v2301
        %v2303 = vpop.f32.mrf.mxu0
        %v2304 = vpop.f32.mrf.mxu0
        %v2305 = vadd.f32 0.0, %v2304
        %v2306 = vpop.f32.mrf.mxu0
        %2307 = vmatprep.mubr.bf16.mxu0 0
        %2308 = vmatmul.mubr.bf16.gmra.mxu0 %v2090
        %v2309 = vpop.f32.mrf.mxu0
        %v2310 = vadd.f32 0.0, %v2309
        %v2311 = vpop.f32.mrf.mxu0
        %v2312 = vpop.f32.mrf.mxu0
        %v2313 = vadd.f32 0.0, %v2312
        %v2314 = vpop.f32.mrf.mxu0
        %2315 = vdwg.mxu0
        %v2316 = vadd.f32 %v1929, %v2190
        %v2317 = vadd.f32 %v1930, %v2193
        %v2318 = vadd.f32 %v1931, %v2198
        %v2319 = vadd.f32 %v1932, %v2201
        %v2320 = vadd.f32 %v1933, %v2206
        %v2321 = vadd.f32 %v1934, %v2209
        %v2322 = vadd.f32 %v1935, %v2214
        %v2323 = vadd.f32 %v1936, %v2217
        %v2324 = vadd.f32 %v1937, %v2222
        %v2325 = vadd.f32 %v1938, %v2225
        %v2326 = vadd.f32 %v1939, %v2230
        %v2327 = vadd.f32 %v1940, %v2233
        %v2328 = vadd.f32 %v1941, %v2238
        %v2329 = vadd.f32 %v1942, %v2241
        %v2330 = vadd.f32 %v1943, %v2246
        %v2331 = vadd.f32 %v1944, %v2249
        %v2332 = vadd.f32 %v1945, %v2254
        %v2333 = vadd.f32 %v1946, %v2257
        %v2334 = vadd.f32 %v1947, %v2262
        %v2335 = vadd.f32 %v1948, %v2265
        %v2336 = vadd.f32 %v1949, %v2270
        %v2337 = vadd.f32 %v1950, %v2273
        %v2338 = vadd.f32 %v1951, %v2278
        %v2339 = vadd.f32 %v1952, %v2281
        %v2340 = vadd.f32 %v1953, %v2286
        %v2341 = vadd.f32 %v1954, %v2289
        %v2342 = vadd.f32 %v1955, %v2294
        %v2343 = vadd.f32 %v1956, %v2297
        %v2344 = vadd.f32 %v1957, %v2302
        %v2345 = vadd.f32 %v1958, %v2305
        %v2346 = vadd.f32 %v1959, %v2310
        %v2347 = vadd.f32 %v1960, %v2313
        %v2348 = vld [vmem:[%s1961] sm:$0xf]
        %v2349 = vld [vmem:[%s1961 + $0x4] sm:$0xf]
        %v2350 = vld [vmem:[%s1961 + $0x8] sm:$0x1]
        %v2351 = vld [vmem:[%s1961 + $0xc] sm:$0xf]
        %v2352 = vld [vmem:[%s1961 + $0x10] sm:$0xf]
        %v2353 = vld [vmem:[%s1961 + $0x14] sm:$0x1]
        %v2354 = vld [vmem:[%s1961 + $0x18] sm:$0xf]
        %v2355 = vld [vmem:[%s1961 + $0x1c] sm:$0xf]
        %v2356 = vld [vmem:[%s1961 + $0x20] sm:$0x1]
        %v2357 = vld [vmem:[%s1961 + $0x24] sm:$0xf]
        %v2358 = vld [vmem:[%s1961 + $0x28] sm:$0xf]
        %v2359 = vld [vmem:[%s1961 + $0x2c] sm:$0x1]
        %v2360 = vld [vmem:[%s1961 + $0x30] sm:$0xf]
        %v2361 = vld [vmem:[%s1961 + $0x34] sm:$0xf]
        %v2362 = vld [vmem:[%s1961 + $0x38] sm:$0x1]
        %v2363 = vld [vmem:[%s1961 + $0x3c] sm:$0xf]
        %v2364 = vld [vmem:[%s1961 + $0x40] sm:$0xf]
        %v2365 = vld [vmem:[%s1961 + $0x44] sm:$0x1]
        %v2366 = vld [vmem:[%s1961 + $0x48] sm:$0xf]
        %v2367 = vld [vmem:[%s1961 + $0x4c] sm:$0xf]
        %v2368 = vld [vmem:[%s1961 + $0x50] sm:$0x1]
        %v2369 = vld [vmem:[%s1961 + $0x54] sm:$0xf]
        %v2370 = vld [vmem:[%s1961 + $0x58] sm:$0xf]
        %v2371 = vld [vmem:[%s1961 + $0x5c] sm:$0x1]
        %v2372 = vld [vmem:[%s1961 + $0x60] sm:$0xf]
        %v2373 = vld [vmem:[%s1961 + $0x64] sm:$0xf]
        %v2374 = vld [vmem:[%s1961 + $0x68] sm:$0x1]
        %v2375 = vld [vmem:[%s1961 + $0x6c] sm:$0xf]
        %v2376 = vld [vmem:[%s1961 + $0x70] sm:$0xf]
        %v2377 = vld [vmem:[%s1961 + $0x74] sm:$0x1]
        %v2378 = vld [vmem:[%s1961 + $0x78] sm:$0xf]
        %v2379 = vld [vmem:[%s1961 + $0x7c] sm:$0xf]
        %v2380 = vld [vmem:[%s1961 + $0x80] sm:$0x1]
        %v2381 = vld [vmem:[%s1961 + $0x84] sm:$0xf]
        %v2382 = vld [vmem:[%s1961 + $0x88] sm:$0xf]
        %v2383 = vld [vmem:[%s1961 + $0x8c] sm:$0x1]
        %v2384 = vld [vmem:[%s1961 + $0x90] sm:$0xf]
        %v2385 = vld [vmem:[%s1961 + $0x94] sm:$0xf]
        %v2386 = vld [vmem:[%s1961 + $0x98] sm:$0x1]
        %v2387 = vld [vmem:[%s1961 + $0x9c] sm:$0xf]
        %v2388 = vld [vmem:[%s1961 + $0xa0] sm:$0xf]
        %v2389 = vld [vmem:[%s1961 + $0xa4] sm:$0x1]
        %v2390 = vld [vmem:[%s1961 + $0xa8] sm:$0xf]
        %v2391 = vld [vmem:[%s1961 + $0xac] sm:$0xf]
        %v2392 = vld [vmem:[%s1961 + $0xb0] sm:$0x1]
        %v2393 = vld [vmem:[%s1961 + $0xb4] sm:$0xf]
        %v2394 = vld [vmem:[%s1961 + $0xb8] sm:$0xf]
        %v2395 = vld [vmem:[%s1961 + $0xbc] sm:$0x1]
        %v2397 = vshrl.u32 %v2348, 16
        %v2399 = vrot.slane %v2397, 4
        %v2400 = vshll.u32 %v2348, 16
        %v2402 = vrot.slane %v2400, 5
        %v2403 = vor.u32 %v2399, %v2402
        %v2404 = vrot.slane %v2403, 4
        %v2406 = vshll.u32 %v2349, 16
        %v2408 = vrot.slane %v2406, 5
        %v2409 = vsel %vm496, %v2404, %v2408
        %v2410 = vshrl.u32 %v2349, 16
        %v2412 = vrot.slane %v2410, 4
        %v2413 = vor.u32 %v2412, %v2408
        %v2414 = vrot.slane %v2413, 4
        %v2416 = vshll.u32 %v2350, 16
        %v2418 = vrot.slane %v2416, 5
        %v2419 = vsel %vm496, %v2414, %v2418
        %v2421 = vshrl.u32 %v2351, 16
        %v2423 = vrot.slane %v2421, 4
        %v2424 = vshll.u32 %v2351, 16
        %v2426 = vrot.slane %v2424, 5
        %v2427 = vor.u32 %v2423, %v2426
        %v2428 = vrot.slane %v2427, 4
        %v2430 = vshll.u32 %v2352, 16
        %v2432 = vrot.slane %v2430, 5
        %v2433 = vsel %vm496, %v2428, %v2432
        %v2434 = vshrl.u32 %v2352, 16
        %v2436 = vrot.slane %v2434, 4
        %v2437 = vor.u32 %v2436, %v2432
        %v2438 = vrot.slane %v2437, 4
        %v2440 = vshll.u32 %v2353, 16
        %v2442 = vrot.slane %v2440, 5
        %v2443 = vsel %vm496, %v2438, %v2442
        %v2445 = vshrl.u32 %v2354, 16
        %v2447 = vrot.slane %v2445, 4
        %v2448 = vshll.u32 %v2354, 16
        %v2450 = vrot.slane %v2448, 5
        %v2451 = vor.u32 %v2447, %v2450
        %v2452 = vrot.slane %v2451, 4
        %v2454 = vshll.u32 %v2355, 16
        %v2456 = vrot.slane %v2454, 5
        %v2457 = vsel %vm496, %v2452, %v2456
        %v2458 = vshrl.u32 %v2355, 16
        %v2460 = vrot.slane %v2458, 4
        %v2461 = vor.u32 %v2460, %v2456
        %v2462 = vrot.slane %v2461, 4
        %v2464 = vshll.u32 %v2356, 16
        %v2466 = vrot.slane %v2464, 5
        %v2467 = vsel %vm496, %v2462, %v2466
        %v2469 = vshrl.u32 %v2357, 16
        %v2471 = vrot.slane %v2469, 4
        %v2472 = vshll.u32 %v2357, 16
        %v2474 = vrot.slane %v2472, 5
        %v2475 = vor.u32 %v2471, %v2474
        %v2476 = vrot.slane %v2475, 4
        %v2478 = vshll.u32 %v2358, 16
        %v2480 = vrot.slane %v2478, 5
        %v2481 = vsel %vm496, %v2476, %v2480
        %v2482 = vshrl.u32 %v2358, 16
        %v2484 = vrot.slane %v2482, 4
        %v2485 = vor.u32 %v2484, %v2480
        %v2486 = vrot.slane %v2485, 4
        %v2488 = vshll.u32 %v2359, 16
        %v2490 = vrot.slane %v2488, 5
        %v2491 = vsel %vm496, %v2486, %v2490
        %v2493 = vshrl.u32 %v2360, 16
        %v2495 = vrot.slane %v2493, 4
        %v2496 = vshll.u32 %v2360, 16
        %v2498 = vrot.slane %v2496, 5
        %v2499 = vor.u32 %v2495, %v2498
        %v2500 = vrot.slane %v2499, 4
        %v2502 = vshll.u32 %v2361, 16
        %v2504 = vrot.slane %v2502, 5
        %v2505 = vsel %vm496, %v2500, %v2504
        %v2506 = vshrl.u32 %v2361, 16
        %v2508 = vrot.slane %v2506, 4
        %v2509 = vor.u32 %v2508, %v2504
        %v2510 = vrot.slane %v2509, 4
        %v2512 = vshll.u32 %v2362, 16
        %v2514 = vrot.slane %v2512, 5
        %v2515 = vsel %vm496, %v2510, %v2514
        %v2517 = vshrl.u32 %v2363, 16
        %v2519 = vrot.slane %v2517, 4
        %v2520 = vshll.u32 %v2363, 16
        %v2522 = vrot.slane %v2520, 5
        %v2523 = vor.u32 %v2519, %v2522
        %v2524 = vrot.slane %v2523, 4
        %v2526 = vshll.u32 %v2364, 16
        %v2528 = vrot.slane %v2526, 5
        %v2529 = vsel %vm496, %v2524, %v2528
        %v2530 = vshrl.u32 %v2364, 16
        %v2532 = vrot.slane %v2530, 4
        %v2533 = vor.u32 %v2532, %v2528
        %v2534 = vrot.slane %v2533, 4
        %v2536 = vshll.u32 %v2365, 16
        %v2538 = vrot.slane %v2536, 5
        %v2539 = vsel %vm496, %v2534, %v2538
        %v2541 = vshrl.u32 %v2366, 16
        %v2543 = vrot.slane %v2541, 4
        %v2544 = vshll.u32 %v2366, 16
        %v2546 = vrot.slane %v2544, 5
        %v2547 = vor.u32 %v2543, %v2546
        %v2548 = vrot.slane %v2547, 4
        %v2550 = vshll.u32 %v2367, 16
        %v2552 = vrot.slane %v2550, 5
        %v2553 = vsel %vm496, %v2548, %v2552
        %v2554 = vshrl.u32 %v2367, 16
        %v2556 = vrot.slane %v2554, 4
        %v2557 = vor.u32 %v2556, %v2552
        %v2558 = vrot.slane %v2557, 4
        %v2560 = vshll.u32 %v2368, 16
        %v2562 = vrot.slane %v2560, 5
        %v2563 = vsel %vm496, %v2558, %v2562
        %v2565 = vshrl.u32 %v2369, 16
        %v2567 = vrot.slane %v2565, 4
        %v2568 = vshll.u32 %v2369, 16
        %v2570 = vrot.slane %v2568, 5
        %v2571 = vor.u32 %v2567, %v2570
        %v2572 = vrot.slane %v2571, 4
        %v2574 = vshll.u32 %v2370, 16
        %v2576 = vrot.slane %v2574, 5
        %v2577 = vsel %vm496, %v2572, %v2576
        %v2578 = vshrl.u32 %v2370, 16
        %v2580 = vrot.slane %v2578, 4
        %v2581 = vor.u32 %v2580, %v2576
        %v2582 = vrot.slane %v2581, 4
        %v2584 = vshll.u32 %v2371, 16
        %v2586 = vrot.slane %v2584, 5
        %v2587 = vsel %vm496, %v2582, %v2586
        %v2589 = vshrl.u32 %v2372, 16
        %v2591 = vrot.slane %v2589, 4
        %v2592 = vshll.u32 %v2372, 16
        %v2594 = vrot.slane %v2592, 5
        %v2595 = vor.u32 %v2591, %v2594
        %v2596 = vrot.slane %v2595, 4
        %v2598 = vshll.u32 %v2373, 16
        %v2600 = vrot.slane %v2598, 5
        %v2601 = vsel %vm496, %v2596, %v2600
        %v2602 = vshrl.u32 %v2373, 16
        %v2604 = vrot.slane %v2602, 4
        %v2605 = vor.u32 %v2604, %v2600
        %v2606 = vrot.slane %v2605, 4
        %v2608 = vshll.u32 %v2374, 16
        %v2610 = vrot.slane %v2608, 5
        %v2611 = vsel %vm496, %v2606, %v2610
        %v2613 = vshrl.u32 %v2375, 16
        %v2615 = vrot.slane %v2613, 4
        %v2616 = vshll.u32 %v2375, 16
        %v2618 = vrot.slane %v2616, 5
        %v2619 = vor.u32 %v2615, %v2618
        %v2620 = vrot.slane %v2619, 4
        %v2622 = vshll.u32 %v2376, 16
        %v2624 = vrot.slane %v2622, 5
        %v2625 = vsel %vm496, %v2620, %v2624
        %v2626 = vshrl.u32 %v2376, 16
        %v2628 = vrot.slane %v2626, 4
        %v2629 = vor.u32 %v2628, %v2624
        %v2630 = vrot.slane %v2629, 4
        %v2632 = vshll.u32 %v2377, 16
        %v2634 = vrot.slane %v2632, 5
        %v2635 = vsel %vm496, %v2630, %v2634
        %v2637 = vshrl.u32 %v2378, 16
        %v2639 = vrot.slane %v2637, 4
        %v2640 = vshll.u32 %v2378, 16
        %v2642 = vrot.slane %v2640, 5
        %v2643 = vor.u32 %v2639, %v2642
        %v2644 = vrot.slane %v2643, 4
        %v2646 = vshll.u32 %v2379, 16
        %v2648 = vrot.slane %v2646, 5
        %v2649 = vsel %vm496, %v2644, %v2648
        %v2650 = vshrl.u32 %v2379, 16
        %v2652 = vrot.slane %v2650, 4
        %v2653 = vor.u32 %v2652, %v2648
        %v2654 = vrot.slane %v2653, 4
        %v2656 = vshll.u32 %v2380, 16
        %v2658 = vrot.slane %v2656, 5
        %v2659 = vsel %vm496, %v2654, %v2658
        %v2661 = vshrl.u32 %v2381, 16
        %v2663 = vrot.slane %v2661, 4
        %v2664 = vshll.u32 %v2381, 16
        %v2666 = vrot.slane %v2664, 5
        %v2667 = vor.u32 %v2663, %v2666
        %v2668 = vrot.slane %v2667, 4
        %v2670 = vshll.u32 %v2382, 16
        %v2672 = vrot.slane %v2670, 5
        %v2673 = vsel %vm496, %v2668, %v2672
        %v2674 = vshrl.u32 %v2382, 16
        %v2676 = vrot.slane %v2674, 4
        %v2677 = vor.u32 %v2676, %v2672
        %v2678 = vrot.slane %v2677, 4
        %v2680 = vshll.u32 %v2383, 16
        %v2682 = vrot.slane %v2680, 5
        %v2683 = vsel %vm496, %v2678, %v2682
        %v2685 = vshrl.u32 %v2384, 16
        %v2687 = vrot.slane %v2685, 4
        %v2688 = vshll.u32 %v2384, 16
        %v2690 = vrot.slane %v2688, 5
        %v2691 = vor.u32 %v2687, %v2690
        %v2692 = vrot.slane %v2691, 4
        %v2694 = vshll.u32 %v2385, 16
        %v2696 = vrot.slane %v2694, 5
        %v2697 = vsel %vm496, %v2692, %v2696
        %v2698 = vshrl.u32 %v2385, 16
        %v2700 = vrot.slane %v2698, 4
        %v2701 = vor.u32 %v2700, %v2696
        %v2702 = vrot.slane %v2701, 4
        %v2704 = vshll.u32 %v2386, 16
        %v2706 = vrot.slane %v2704, 5
        %v2707 = vsel %vm496, %v2702, %v2706
        %v2709 = vshrl.u32 %v2387, 16
        %v2711 = vrot.slane %v2709, 4
        %v2712 = vshll.u32 %v2387, 16
        %v2714 = vrot.slane %v2712, 5
        %v2715 = vor.u32 %v2711, %v2714
        %v2716 = vrot.slane %v2715, 4
        %v2718 = vshll.u32 %v2388, 16
        %v2720 = vrot.slane %v2718, 5
        %v2721 = vsel %vm496, %v2716, %v2720
        %v2722 = vshrl.u32 %v2388, 16
        %v2724 = vrot.slane %v2722, 4
        %v2725 = vor.u32 %v2724, %v2720
        %v2726 = vrot.slane %v2725, 4
        %v2728 = vshll.u32 %v2389, 16
        %v2730 = vrot.slane %v2728, 5
        %v2731 = vsel %vm496, %v2726, %v2730
        %v2733 = vshrl.u32 %v2390, 16
        %v2735 = vrot.slane %v2733, 4
        %v2736 = vshll.u32 %v2390, 16
        %v2738 = vrot.slane %v2736, 5
        %v2739 = vor.u32 %v2735, %v2738
        %v2740 = vrot.slane %v2739, 4
        %v2742 = vshll.u32 %v2391, 16
        %v2744 = vrot.slane %v2742, 5
        %v2745 = vsel %vm496, %v2740, %v2744
        %v2746 = vshrl.u32 %v2391, 16
        %v2748 = vrot.slane %v2746, 4
        %v2749 = vor.u32 %v2748, %v2744
        %v2750 = vrot.slane %v2749, 4
        %v2752 = vshll.u32 %v2392, 16
        %v2754 = vrot.slane %v2752, 5
        %v2755 = vsel %vm496, %v2750, %v2754
        %v2757 = vshrl.u32 %v2393, 16
        %v2759 = vrot.slane %v2757, 4
        %v2760 = vshll.u32 %v2393, 16
        %v2762 = vrot.slane %v2760, 5
        %v2763 = vor.u32 %v2759, %v2762
        %v2764 = vrot.slane %v2763, 4
        %v2766 = vshll.u32 %v2394, 16
        %v2768 = vrot.slane %v2766, 5
        %v2769 = vsel %vm496, %v2764, %v2768
        %v2770 = vshrl.u32 %v2394, 16
        %v2772 = vrot.slane %v2770, 4
        %v2773 = vor.u32 %v2772, %v2768
        %v2774 = vrot.slane %v2773, 4
        %v2776 = vshll.u32 %v2395, 16
        %v2778 = vrot.slane %v2776, 5
        %v2779 = vsel %vm496, %v2774, %v2778
        %s2780 = scalar_lea.vmem %s2, 256
        %v2781 = vld [vmem:[%s2780] sm:$0xf]
        %v2782 = vld [vmem:[%s2780 + $0x4] sm:$0xf]
        %v2783 = vld [vmem:[%s2780 + $0x8] sm:$0xf]
        %v2784 = vld [vmem:[%s2780 + $0xc] sm:$0xf]
        %v2785 = vld [vmem:[%s2780 + $0x10] sm:$0xf]
        %v2786 = vld [vmem:[%s2780 + $0x14] sm:$0xf]
        %v2787 = vld [vmem:[%s2780 + $0x18] sm:$0xf]
        %v2788 = vld [vmem:[%s2780 + $0x1c] sm:$0xf]
        %v2789 = vld [vmem:[%s2780 + $0x20] sm:$0xf]
        %v2790 = vld [vmem:[%s2780 + $0x24] sm:$0xf]
        %v2791 = vld [vmem:[%s2780 + $0x28] sm:$0xf]
        %v2792 = vld [vmem:[%s2780 + $0x2c] sm:$0xf]
        %v2793 = vld [vmem:[%s2780 + $0x30] sm:$0xf]
        %v2794 = vld [vmem:[%s2780 + $0x34] sm:$0xf]
        %v2795 = vld [vmem:[%s2780 + $0x38] sm:$0xf]
        %v2796 = vld [vmem:[%s2780 + $0x3c] sm:$0xf]
        %v2797 = vunpack.c.l.b16 %v2409
        %v2798 = vunpack.c.l.b16 %v2419
        %v2799 = vunpack.c.l.b16 %v2433
        %v2800 = vunpack.c.l.b16 %v2443
        %v2801 = vunpack.c.l.b16 %v2457
        %v2802 = vunpack.c.l.b16 %v2467
        %v2803 = vunpack.c.l.b16 %v2481
        %v2804 = vunpack.c.l.b16 %v2491
        %v2805 = vunpack.c.l.b16 %v2505
        %v2806 = vunpack.c.l.b16 %v2515
        %v2807 = vunpack.c.l.b16 %v2529
        %v2808 = vunpack.c.l.b16 %v2539
        %v2809 = vunpack.c.l.b16 %v2553
        %v2810 = vunpack.c.l.b16 %v2563
        %v2811 = vunpack.c.l.b16 %v2577
        %v2812 = vunpack.c.l.b16 %v2587
        %v2813 = vunpack.c.l.b16 %v2601
        %v2814 = vunpack.c.l.b16 %v2611
        %v2815 = vunpack.c.l.b16 %v2625
        %v2816 = vunpack.c.l.b16 %v2635
        %v2817 = vunpack.c.l.b16 %v2649
        %v2818 = vunpack.c.l.b16 %v2659
        %v2819 = vunpack.c.l.b16 %v2673
        %v2820 = vunpack.c.l.b16 %v2683
        %v2821 = vunpack.c.l.b16 %v2697
        %v2822 = vunpack.c.l.b16 %v2707
        %v2823 = vunpack.c.l.b16 %v2721
        %v2824 = vunpack.c.l.b16 %v2731
        %v2825 = vunpack.c.l.b16 %v2745
        %v2826 = vunpack.c.l.b16 %v2755
        %v2827 = vunpack.c.l.b16 %v2769
        %v2828 = vunpack.c.l.b16 %v2779
        %v2829 = vpack.c.b16 %v2798, %v2797
        %v2830 = vpack.c.b16 %v2800, %v2799
        %v2831 = vpack.c.b16 %v2802, %v2801
        %v2832 = vpack.c.b16 %v2804, %v2803
        %v2833 = vpack.c.b16 %v2806, %v2805
        %v2834 = vpack.c.b16 %v2808, %v2807
        %v2835 = vpack.c.b16 %v2810, %v2809
        %v2836 = vpack.c.b16 %v2812, %v2811
        %v2837 = vpack.c.b16 %v2814, %v2813
        %v2838 = vpack.c.b16 %v2816, %v2815
        %v2839 = vpack.c.b16 %v2818, %v2817
        %v2840 = vpack.c.b16 %v2820, %v2819
        %v2841 = vpack.c.b16 %v2822, %v2821
        %v2842 = vpack.c.b16 %v2824, %v2823
        %v2843 = vpack.c.b16 %v2826, %v2825
        %v2844 = vpack.c.b16 %v2828, %v2827
        %v2877 = vunpack.c.l.b16 %v2781
        %v2878 = vunpack.c.l.b16 %v2782
        %v2879 = vunpack.c.l.b16 %v2783
        %v2880 = vunpack.c.l.b16 %v2784
        %v2881 = vunpack.c.l.b16 %v2785
        %v2882 = vunpack.c.l.b16 %v2786
        %v2883 = vunpack.c.l.b16 %v2787
        %v2884 = vunpack.c.l.b16 %v2788
        %v2885 = vunpack.c.l.b16 %v2789
        %v2886 = vunpack.c.l.b16 %v2790
        %v2887 = vunpack.c.l.b16 %v2791
        %v2888 = vunpack.c.l.b16 %v2792
        %v2889 = vunpack.c.l.b16 %v2793
        %v2890 = vunpack.c.l.b16 %v2794
        %v2891 = vunpack.c.l.b16 %v2795
        %v2892 = vunpack.c.l.b16 %v2796
        %v2893 = vpack.c.b16 %v2878, %v2877
        %v2894 = vpack.c.b16 %v2880, %v2879
        %v2895 = vpack.c.b16 %v2882, %v2881
        %v2896 = vpack.c.b16 %v2884, %v2883
        %v2897 = vpack.c.b16 %v2886, %v2885
        %v2898 = vpack.c.b16 %v2888, %v2887
        %v2899 = vpack.c.b16 %v2890, %v2889
        %v2900 = vpack.c.b16 %v2892, %v2891
        %2909 = vmatprep.subr.bf16.mxu0 0
        %2910 = vmatpush1.bf16.msra.mxu0 %v2900
        %2911 = vmatprep.subr.bf16.mxu0 0
        %2912 = vmatpush1.bf16.msra.mxu0 %v2899
        %2913 = vmatprep.subr.bf16.mxu0 0
        %2914 = vmatpush1.bf16.msra.mxu0 %v2898
        %2915 = vmatprep.subr.bf16.mxu0 0
        %2916 = vmatpush1.bf16.msra.mxu0 %v2897
        %2917 = vmatprep.subr.bf16.mxu0 0
        %2918 = vmatpush1.bf16.msra.mxu0 %v2896
        %2919 = vmatprep.subr.bf16.mxu0 0
        %2920 = vmatpush1.bf16.msra.mxu0 %v2895
        %2921 = vmatprep.subr.bf16.mxu0 0
        %2922 = vmatpush1.bf16.msra.mxu0 %v2894
        %2923 = vmatprep.subr.bf16.mxu0 0
        %2924 = vmatpush1.bf16.msra.mxu0 %v2893
        %2925 = vmatprep.subr.bf16.mxu0 0
        %2926 = vmatpush2.bf16.msra.mxu0 0
        %2927 = vmatprep.subr.bf16.mxu0 0
        %2928 = vmatpush2.bf16.msra.mxu0 0
        %2929 = vmatprep.subr.bf16.mxu0 0
        %2930 = vmatpush2.bf16.msra.mxu0 0
        %2931 = vmatprep.subr.bf16.mxu0 0
        %2932 = vmatpush2.bf16.msra.mxu0 0
        %2933 = vmatprep.subr.bf16.mxu0 0
        %2934 = vmatpush2.bf16.msra.mxu0 0
        %2935 = vmatprep.subr.bf16.mxu0 0
        %2936 = vmatpush2.bf16.msra.mxu0 0
        %2937 = vmatprep.subr.bf16.mxu0 0
        %2938 = vmatpush2.bf16.msra.mxu0 0
        %2939 = vmatprep.subr.bf16.mxu0 0
        %2940 = vmatpush2.bf16.msra.mxu0 0
        %2941 = vmatprep.mubr.bf16.mxu0 0
        %2942 = vmatmul.mubr.bf16.gmra.mxu0 %v2829
        %v2943 = vpop.f32.mrf.mxu0
        %v2944 = vadd.f32 0.0, %v2943
        %v2945 = vpop.f32.mrf.mxu0
        %v2946 = vpop.f32.mrf.mxu0
        %v2947 = vadd.f32 0.0, %v2946
        %v2948 = vpop.f32.mrf.mxu0
        %2949 = vmatprep.mubr.bf16.mxu0 0
        %2950 = vmatmul.mubr.bf16.gmra.mxu0 %v2830
        %v2951 = vpop.f32.mrf.mxu0
        %v2952 = vadd.f32 0.0, %v2951
        %v2953 = vpop.f32.mrf.mxu0
        %v2954 = vpop.f32.mrf.mxu0
        %v2955 = vadd.f32 0.0, %v2954
        %v2956 = vpop.f32.mrf.mxu0
        %2957 = vmatprep.mubr.bf16.mxu0 0
        %2958 = vmatmul.mubr.bf16.gmra.mxu0 %v2831
        %v2959 = vpop.f32.mrf.mxu0
        %v2960 = vadd.f32 0.0, %v2959
        %v2961 = vpop.f32.mrf.mxu0
        %v2962 = vpop.f32.mrf.mxu0
        %v2963 = vadd.f32 0.0, %v2962
        %v2964 = vpop.f32.mrf.mxu0
        %2965 = vmatprep.mubr.bf16.mxu0 0
        %2966 = vmatmul.mubr.bf16.gmra.mxu0 %v2832
        %v2967 = vpop.f32.mrf.mxu0
        %v2968 = vadd.f32 0.0, %v2967
        %v2969 = vpop.f32.mrf.mxu0
        %v2970 = vpop.f32.mrf.mxu0
        %v2971 = vadd.f32 0.0, %v2970
        %v2972 = vpop.f32.mrf.mxu0
        %2973 = vmatprep.mubr.bf16.mxu0 0
        %2974 = vmatmul.mubr.bf16.gmra.mxu0 %v2833
        %v2975 = vpop.f32.mrf.mxu0
        %v2976 = vadd.f32 0.0, %v2975
        %v2977 = vpop.f32.mrf.mxu0
        %v2978 = vpop.f32.mrf.mxu0
        %v2979 = vadd.f32 0.0, %v2978
        %v2980 = vpop.f32.mrf.mxu0
        %2981 = vmatprep.mubr.bf16.mxu0 0
        %2982 = vmatmul.mubr.bf16.gmra.mxu0 %v2834
        %v2983 = vpop.f32.mrf.mxu0
        %v2984 = vadd.f32 0.0, %v2983
        %v2985 = vpop.f32.mrf.mxu0
        %v2986 = vpop.f32.mrf.mxu0
        %v2987 = vadd.f32 0.0, %v2986
        %v2988 = vpop.f32.mrf.mxu0
        %2989 = vmatprep.mubr.bf16.mxu0 0
        %2990 = vmatmul.mubr.bf16.gmra.mxu0 %v2835
        %v2991 = vpop.f32.mrf.mxu0
        %v2992 = vadd.f32 0.0, %v2991
        %v2993 = vpop.f32.mrf.mxu0
        %v2994 = vpop.f32.mrf.mxu0
        %v2995 = vadd.f32 0.0, %v2994
        %v2996 = vpop.f32.mrf.mxu0
        %2997 = vmatprep.mubr.bf16.mxu0 0
        %2998 = vmatmul.mubr.bf16.gmra.mxu0 %v2836
        %v2999 = vpop.f32.mrf.mxu0
        %v3000 = vadd.f32 0.0, %v2999
        %v3001 = vpop.f32.mrf.mxu0
        %v3002 = vpop.f32.mrf.mxu0
        %v3003 = vadd.f32 0.0, %v3002
        %v3004 = vpop.f32.mrf.mxu0
        %3005 = vmatprep.mubr.bf16.mxu0 0
        %3006 = vmatmul.mubr.bf16.gmra.mxu0 %v2837
        %v3007 = vpop.f32.mrf.mxu0
        %v3008 = vadd.f32 0.0, %v3007
        %v3009 = vpop.f32.mrf.mxu0
        %v3010 = vpop.f32.mrf.mxu0
        %v3011 = vadd.f32 0.0, %v3010
        %v3012 = vpop.f32.mrf.mxu0
        %3013 = vmatprep.mubr.bf16.mxu0 0
        %3014 = vmatmul.mubr.bf16.gmra.mxu0 %v2838
        %v3015 = vpop.f32.mrf.mxu0
        %v3016 = vadd.f32 0.0, %v3015
        %v3017 = vpop.f32.mrf.mxu0
        %v3018 = vpop.f32.mrf.mxu0
        %v3019 = vadd.f32 0.0, %v3018
        %v3020 = vpop.f32.mrf.mxu0
        %3021 = vmatprep.mubr.bf16.mxu0 0
        %3022 = vmatmul.mubr.bf16.gmra.mxu0 %v2839
        %v3023 = vpop.f32.mrf.mxu0
        %v3024 = vadd.f32 0.0, %v3023
        %v3025 = vpop.f32.mrf.mxu0
        %v3026 = vpop.f32.mrf.mxu0
        %v3027 = vadd.f32 0.0, %v3026
        %v3028 = vpop.f32.mrf.mxu0
        %3029 = vmatprep.mubr.bf16.mxu0 0
        %3030 = vmatmul.mubr.bf16.gmra.mxu0 %v2840
        %v3031 = vpop.f32.mrf.mxu0
        %v3032 = vadd.f32 0.0, %v3031
        %v3033 = vpop.f32.mrf.mxu0
        %v3034 = vpop.f32.mrf.mxu0
        %v3035 = vadd.f32 0.0, %v3034
        %v3036 = vpop.f32.mrf.mxu0
        %3037 = vmatprep.mubr.bf16.mxu0 0
        %3038 = vmatmul.mubr.bf16.gmra.mxu0 %v2841
        %v3039 = vpop.f32.mrf.mxu0
        %v3040 = vadd.f32 0.0, %v3039
        %v3041 = vpop.f32.mrf.mxu0
        %v3042 = vpop.f32.mrf.mxu0
        %v3043 = vadd.f32 0.0, %v3042
        %v3044 = vpop.f32.mrf.mxu0
        %3045 = vmatprep.mubr.bf16.mxu0 0
        %3046 = vmatmul.mubr.bf16.gmra.mxu0 %v2842
        %v3047 = vpop.f32.mrf.mxu0
        %v3048 = vadd.f32 0.0, %v3047
        %v3049 = vpop.f32.mrf.mxu0
        %v3050 = vpop.f32.mrf.mxu0
        %v3051 = vadd.f32 0.0, %v3050
        %v3052 = vpop.f32.mrf.mxu0
        %3053 = vmatprep.mubr.bf16.mxu0 0
        %3054 = vmatmul.mubr.bf16.gmra.mxu0 %v2843
        %v3055 = vpop.f32.mrf.mxu0
        %v3056 = vadd.f32 0.0, %v3055
        %v3057 = vpop.f32.mrf.mxu0
        %v3058 = vpop.f32.mrf.mxu0
        %v3059 = vadd.f32 0.0, %v3058
        %v3060 = vpop.f32.mrf.mxu0
        %3061 = vmatprep.mubr.bf16.mxu0 0
        %3062 = vmatmul.mubr.bf16.gmra.mxu0 %v2844
        %v3063 = vpop.f32.mrf.mxu0
        %v3064 = vadd.f32 0.0, %v3063
        %v3065 = vpop.f32.mrf.mxu0
        %v3066 = vpop.f32.mrf.mxu0
        %v3067 = vadd.f32 0.0, %v3066
        %v3068 = vpop.f32.mrf.mxu0
        %3069 = vdwg.mxu0
        %v3070 = vadd.f32 %v2316, %v2944
        %v3071 = vadd.f32 %v2317, %v2947
        %v3072 = vadd.f32 %v2318, %v2952
        %v3073 = vadd.f32 %v2319, %v2955
        %v3074 = vadd.f32 %v2320, %v2960
        %v3075 = vadd.f32 %v2321, %v2963
        %v3076 = vadd.f32 %v2322, %v2968
        %v3077 = vadd.f32 %v2323, %v2971
        %v3078 = vadd.f32 %v2324, %v2976
        %v3079 = vadd.f32 %v2325, %v2979
        %v3080 = vadd.f32 %v2326, %v2984
        %v3081 = vadd.f32 %v2327, %v2987
        %v3082 = vadd.f32 %v2328, %v2992
        %v3083 = vadd.f32 %v2329, %v2995
        %v3084 = vadd.f32 %v2330, %v3000
        %v3085 = vadd.f32 %v2331, %v3003
        %v3086 = vadd.f32 %v2332, %v3008
        %v3087 = vadd.f32 %v2333, %v3011
        %v3088 = vadd.f32 %v2334, %v3016
        %v3089 = vadd.f32 %v2335, %v3019
        %v3090 = vadd.f32 %v2336, %v3024
        %v3091 = vadd.f32 %v2337, %v3027
        %v3092 = vadd.f32 %v2338, %v3032
        %v3093 = vadd.f32 %v2339, %v3035
        %v3094 = vadd.f32 %v2340, %v3040
        %v3095 = vadd.f32 %v2341, %v3043
        %v3096 = vadd.f32 %v2342, %v3048
        %v3097 = vadd.f32 %v2343, %v3051
        %v3098 = vadd.f32 %v2344, %v3056
        %v3099 = vadd.f32 %v2345, %v3059
        %v3100 = vadd.f32 %v2346, %v3064
        %v3101 = vadd.f32 %v2347, %v3067
        %v3102 = vld [vmem:[%s1961] sm:$0xe]
        %v3103 = vld [vmem:[%s1961 + $0xc] sm:$0xe]
        %v3104 = vld [vmem:[%s1961 + $0x18] sm:$0xe]
        %v3105 = vld [vmem:[%s1961 + $0x24] sm:$0xe]
        %v3106 = vld [vmem:[%s1961 + $0x30] sm:$0xe]
        %v3107 = vld [vmem:[%s1961 + $0x3c] sm:$0xe]
        %v3108 = vld [vmem:[%s1961 + $0x48] sm:$0xe]
        %v3109 = vld [vmem:[%s1961 + $0x54] sm:$0xe]
        %v3110 = vld [vmem:[%s1961 + $0x60] sm:$0xe]
        %v3111 = vld [vmem:[%s1961 + $0x6c] sm:$0xe]
        %v3112 = vld [vmem:[%s1961 + $0x78] sm:$0xe]
        %v3113 = vld [vmem:[%s1961 + $0x84] sm:$0xe]
        %v3114 = vld [vmem:[%s1961 + $0x90] sm:$0xe]
        %v3115 = vld [vmem:[%s1961 + $0x9c] sm:$0xe]
        %v3116 = vld [vmem:[%s1961 + $0xa8] sm:$0xe]
        %v3117 = vld [vmem:[%s1961 + $0xb4] sm:$0xe]
        %v3166 = vrot.slane %v3102, 5
        %v3167 = vrot.slane %v3166, 4
        %v3168 = vrot.slane %v2349, 5
        %v3169 = vsel %vm1526, %v3167, %v3168
        %v3170 = vrot.slane %v3168, 4
        %v3171 = vrot.slane %v2350, 5
        %v3172 = vsel %vm1526, %v3170, %v3171
        %v3173 = vrot.slane %v3103, 5
        %v3174 = vrot.slane %v3173, 4
        %v3175 = vrot.slane %v2352, 5
        %v3176 = vsel %vm1526, %v3174, %v3175
        %v3177 = vrot.slane %v3175, 4
        %v3178 = vrot.slane %v2353, 5
        %v3179 = vsel %vm1526, %v3177, %v3178
        %v3180 = vrot.slane %v3104, 5
        %v3181 = vrot.slane %v3180, 4
        %v3182 = vrot.slane %v2355, 5
        %v3183 = vsel %vm1526, %v3181, %v3182
        %v3184 = vrot.slane %v3182, 4
        %v3185 = vrot.slane %v2356, 5
        %v3186 = vsel %vm1526, %v3184, %v3185
        %v3187 = vrot.slane %v3105, 5
        %v3188 = vrot.slane %v3187, 4
        %v3189 = vrot.slane %v2358, 5
        %v3190 = vsel %vm1526, %v3188, %v3189
        %v3191 = vrot.slane %v3189, 4
        %v3192 = vrot.slane %v2359, 5
        %v3193 = vsel %vm1526, %v3191, %v3192
        %v3194 = vrot.slane %v3106, 5
        %v3195 = vrot.slane %v3194, 4
        %v3196 = vrot.slane %v2361, 5
        %v3197 = vsel %vm1526, %v3195, %v3196
        %v3198 = vrot.slane %v3196, 4
        %v3199 = vrot.slane %v2362, 5
        %v3200 = vsel %vm1526, %v3198, %v3199
        %v3201 = vrot.slane %v3107, 5
        %v3202 = vrot.slane %v3201, 4
        %v3203 = vrot.slane %v2364, 5
        %v3204 = vsel %vm1526, %v3202, %v3203
        %v3205 = vrot.slane %v3203, 4
        %v3206 = vrot.slane %v2365, 5
        %v3207 = vsel %vm1526, %v3205, %v3206
        %v3208 = vrot.slane %v3108, 5
        %v3209 = vrot.slane %v3208, 4
        %v3210 = vrot.slane %v2367, 5
        %v3211 = vsel %vm1526, %v3209, %v3210
        %v3212 = vrot.slane %v3210, 4
        %v3213 = vrot.slane %v2368, 5
        %v3214 = vsel %vm1526, %v3212, %v3213
        %v3215 = vrot.slane %v3109, 5
        %v3216 = vrot.slane %v3215, 4
        %v3217 = vrot.slane %v2370, 5
        %v3218 = vsel %vm1526, %v3216, %v3217
        %v3219 = vrot.slane %v3217, 4
        %v3220 = vrot.slane %v2371, 5
        %v3221 = vsel %vm1526, %v3219, %v3220
        %v3222 = vrot.slane %v3110, 5
        %v3223 = vrot.slane %v3222, 4
        %v3224 = vrot.slane %v2373, 5
        %v3225 = vsel %vm1526, %v3223, %v3224
        %v3226 = vrot.slane %v3224, 4
        %v3227 = vrot.slane %v2374, 5
        %v3228 = vsel %vm1526, %v3226, %v3227
        %v3229 = vrot.slane %v3111, 5
        %v3230 = vrot.slane %v3229, 4
        %v3231 = vrot.slane %v2376, 5
        %v3232 = vsel %vm1526, %v3230, %v3231
        %v3233 = vrot.slane %v3231, 4
        %v3234 = vrot.slane %v2377, 5
        %v3235 = vsel %vm1526, %v3233, %v3234
        %v3236 = vrot.slane %v3112, 5
        %v3237 = vrot.slane %v3236, 4
        %v3238 = vrot.slane %v2379, 5
        %v3239 = vsel %vm1526, %v3237, %v3238
        %v3240 = vrot.slane %v3238, 4
        %v3241 = vrot.slane %v2380, 5
        %v3242 = vsel %vm1526, %v3240, %v3241
        %v3243 = vrot.slane %v3113, 5
        %v3244 = vrot.slane %v3243, 4
        %v3245 = vrot.slane %v2382, 5
        %v3246 = vsel %vm1526, %v3244, %v3245
        %v3247 = vrot.slane %v3245, 4
        %v3248 = vrot.slane %v2383, 5
        %v3249 = vsel %vm1526, %v3247, %v3248
        %v3250 = vrot.slane %v3114, 5
        %v3251 = vrot.slane %v3250, 4
        %v3252 = vrot.slane %v2385, 5
        %v3253 = vsel %vm1526, %v3251, %v3252
        %v3254 = vrot.slane %v3252, 4
        %v3255 = vrot.slane %v2386, 5
        %v3256 = vsel %vm1526, %v3254, %v3255
        %v3257 = vrot.slane %v3115, 5
        %v3258 = vrot.slane %v3257, 4
        %v3259 = vrot.slane %v2388, 5
        %v3260 = vsel %vm1526, %v3258, %v3259
        %v3261 = vrot.slane %v3259, 4
        %v3262 = vrot.slane %v2389, 5
        %v3263 = vsel %vm1526, %v3261, %v3262
        %v3264 = vrot.slane %v3116, 5
        %v3265 = vrot.slane %v3264, 4
        %v3266 = vrot.slane %v2391, 5
        %v3267 = vsel %vm1526, %v3265, %v3266
        %v3268 = vrot.slane %v3266, 4
        %v3269 = vrot.slane %v2392, 5
        %v3270 = vsel %vm1526, %v3268, %v3269
        %v3271 = vrot.slane %v3117, 5
        %v3272 = vrot.slane %v3271, 4
        %v3273 = vrot.slane %v2394, 5
        %v3274 = vsel %vm1526, %v3272, %v3273
        %v3275 = vrot.slane %v3273, 4
        %v3276 = vrot.slane %v2395, 5
        %v3277 = vsel %vm1526, %v3275, %v3276
        %s3278 = scalar_lea.vmem %s2, 320
        %v3279 = vld [vmem:[%s3278] sm:$0xf]
        %v3280 = vld [vmem:[%s3278 + $0x4] sm:$0xf]
        %v3281 = vld [vmem:[%s3278 + $0x8] sm:$0xf]
        %v3282 = vld [vmem:[%s3278 + $0xc] sm:$0xf]
        %v3283 = vld [vmem:[%s3278 + $0x10] sm:$0xf]
        %v3284 = vld [vmem:[%s3278 + $0x14] sm:$0xf]
        %v3285 = vld [vmem:[%s3278 + $0x18] sm:$0xf]
        %v3286 = vld [vmem:[%s3278 + $0x1c] sm:$0xf]
        %v3287 = vld [vmem:[%s3278 + $0x20] sm:$0xf]
        %v3288 = vld [vmem:[%s3278 + $0x24] sm:$0xf]
        %v3289 = vld [vmem:[%s3278 + $0x28] sm:$0xf]
        %v3290 = vld [vmem:[%s3278 + $0x2c] sm:$0xf]
        %v3291 = vld [vmem:[%s3278 + $0x30] sm:$0xf]
        %v3292 = vld [vmem:[%s3278 + $0x34] sm:$0xf]
        %v3293 = vld [vmem:[%s3278 + $0x38] sm:$0xf]
        %v3294 = vld [vmem:[%s3278 + $0x3c] sm:$0xf]
        %v3295 = vunpack.c.l.b16 %v3169
        %v3296 = vunpack.c.l.b16 %v3172
        %v3297 = vunpack.c.l.b16 %v3176
        %v3298 = vunpack.c.l.b16 %v3179
        %v3299 = vunpack.c.l.b16 %v3183
        %v3300 = vunpack.c.l.b16 %v3186
        %v3301 = vunpack.c.l.b16 %v3190
        %v3302 = vunpack.c.l.b16 %v3193
        %v3303 = vunpack.c.l.b16 %v3197
        %v3304 = vunpack.c.l.b16 %v3200
        %v3305 = vunpack.c.l.b16 %v3204
        %v3306 = vunpack.c.l.b16 %v3207
        %v3307 = vunpack.c.l.b16 %v3211
        %v3308 = vunpack.c.l.b16 %v3214
        %v3309 = vunpack.c.l.b16 %v3218
        %v3310 = vunpack.c.l.b16 %v3221
        %v3311 = vunpack.c.l.b16 %v3225
        %v3312 = vunpack.c.l.b16 %v3228
        %v3313 = vunpack.c.l.b16 %v3232
        %v3314 = vunpack.c.l.b16 %v3235
        %v3315 = vunpack.c.l.b16 %v3239
        %v3316 = vunpack.c.l.b16 %v3242
        %v3317 = vunpack.c.l.b16 %v3246
        %v3318 = vunpack.c.l.b16 %v3249
        %v3319 = vunpack.c.l.b16 %v3253
        %v3320 = vunpack.c.l.b16 %v3256
        %v3321 = vunpack.c.l.b16 %v3260
        %v3322 = vunpack.c.l.b16 %v3263
        %v3323 = vunpack.c.l.b16 %v3267
        %v3324 = vunpack.c.l.b16 %v3270
        %v3325 = vunpack.c.l.b16 %v3274
        %v3326 = vunpack.c.l.b16 %v3277
        %v3327 = vpack.c.b16 %v3296, %v3295
        %v3328 = vpack.c.b16 %v3298, %v3297
        %v3329 = vpack.c.b16 %v3300, %v3299
        %v3330 = vpack.c.b16 %v3302, %v3301
        %v3331 = vpack.c.b16 %v3304, %v3303
        %v3332 = vpack.c.b16 %v3306, %v3305
        %v3333 = vpack.c.b16 %v3308, %v3307
        %v3334 = vpack.c.b16 %v3310, %v3309
        %v3335 = vpack.c.b16 %v3312, %v3311
        %v3336 = vpack.c.b16 %v3314, %v3313
        %v3337 = vpack.c.b16 %v3316, %v3315
        %v3338 = vpack.c.b16 %v3318, %v3317
        %v3339 = vpack.c.b16 %v3320, %v3319
        %v3340 = vpack.c.b16 %v3322, %v3321
        %v3341 = vpack.c.b16 %v3324, %v3323
        %v3342 = vpack.c.b16 %v3326, %v3325
        %v3375 = vunpack.c.l.b16 %v3279
        %v3376 = vunpack.c.l.b16 %v3280
        %v3377 = vunpack.c.l.b16 %v3281
        %v3378 = vunpack.c.l.b16 %v3282
        %v3379 = vunpack.c.l.b16 %v3283
        %v3380 = vunpack.c.l.b16 %v3284
        %v3381 = vunpack.c.l.b16 %v3285
        %v3382 = vunpack.c.l.b16 %v3286
        %v3383 = vunpack.c.l.b16 %v3287
        %v3384 = vunpack.c.l.b16 %v3288
        %v3385 = vunpack.c.l.b16 %v3289
        %v3386 = vunpack.c.l.b16 %v3290
        %v3387 = vunpack.c.l.b16 %v3291
        %v3388 = vunpack.c.l.b16 %v3292
        %v3389 = vunpack.c.l.b16 %v3293
        %v3390 = vunpack.c.l.b16 %v3294
        %v3391 = vpack.c.b16 %v3376, %v3375
        %v3392 = vpack.c.b16 %v3378, %v3377
        %v3393 = vpack.c.b16 %v3380, %v3379
        %v3394 = vpack.c.b16 %v3382, %v3381
        %v3395 = vpack.c.b16 %v3384, %v3383
        %v3396 = vpack.c.b16 %v3386, %v3385
        %v3397 = vpack.c.b16 %v3388, %v3387
        %v3398 = vpack.c.b16 %v3390, %v3389
        %3407 = vmatprep.subr.bf16.mxu0 0
        %3408 = vmatpush1.bf16.msra.mxu0 %v3398
        %3409 = vmatprep.subr.bf16.mxu0 0
        %3410 = vmatpush1.bf16.msra.mxu0 %v3397
        %3411 = vmatprep.subr.bf16.mxu0 0
        %3412 = vmatpush1.bf16.msra.mxu0 %v3396
        %3413 = vmatprep.subr.bf16.mxu0 0
        %3414 = vmatpush1.bf16.msra.mxu0 %v3395
        %3415 = vmatprep.subr.bf16.mxu0 0
        %3416 = vmatpush1.bf16.msra.mxu0 %v3394
        %3417 = vmatprep.subr.bf16.mxu0 0
        %3418 = vmatpush1.bf16.msra.mxu0 %v3393
        %3419 = vmatprep.subr.bf16.mxu0 0
        %3420 = vmatpush1.bf16.msra.mxu0 %v3392
        %3421 = vmatprep.subr.bf16.mxu0 0
        %3422 = vmatpush1.bf16.msra.mxu0 %v3391
        %3423 = vmatprep.subr.bf16.mxu0 0
        %3424 = vmatpush2.bf16.msra.mxu0 0
        %3425 = vmatprep.subr.bf16.mxu0 0
        %3426 = vmatpush2.bf16.msra.mxu0 0
        %3427 = vmatprep.subr.bf16.mxu0 0
        %3428 = vmatpush2.bf16.msra.mxu0 0
        %3429 = vmatprep.subr.bf16.mxu0 0
        %3430 = vmatpush2.bf16.msra.mxu0 0
        %3431 = vmatprep.subr.bf16.mxu0 0
        %3432 = vmatpush2.bf16.msra.mxu0 0
        %3433 = vmatprep.subr.bf16.mxu0 0
        %3434 = vmatpush2.bf16.msra.mxu0 0
        %3435 = vmatprep.subr.bf16.mxu0 0
        %3436 = vmatpush2.bf16.msra.mxu0 0
        %3437 = vmatprep.subr.bf16.mxu0 0
        %3438 = vmatpush2.bf16.msra.mxu0 0
        %3439 = vmatprep.mubr.bf16.mxu0 0
        %3440 = vmatmul.mubr.bf16.gmra.mxu0 %v3327
        %v3441 = vpop.f32.mrf.mxu0
        %v3442 = vadd.f32 0.0, %v3441
        %v3443 = vpop.f32.mrf.mxu0
        %v3444 = vpop.f32.mrf.mxu0
        %v3445 = vadd.f32 0.0, %v3444
        %v3446 = vpop.f32.mrf.mxu0
        %3447 = vmatprep.mubr.bf16.mxu0 0
        %3448 = vmatmul.mubr.bf16.gmra.mxu0 %v3328
        %v3449 = vpop.f32.mrf.mxu0
        %v3450 = vadd.f32 0.0, %v3449
        %v3451 = vpop.f32.mrf.mxu0
        %v3452 = vpop.f32.mrf.mxu0
        %v3453 = vadd.f32 0.0, %v3452
        %v3454 = vpop.f32.mrf.mxu0
        %3455 = vmatprep.mubr.bf16.mxu0 0
        %3456 = vmatmul.mubr.bf16.gmra.mxu0 %v3329
        %v3457 = vpop.f32.mrf.mxu0
        %v3458 = vadd.f32 0.0, %v3457
        %v3459 = vpop.f32.mrf.mxu0
        %v3460 = vpop.f32.mrf.mxu0
        %v3461 = vadd.f32 0.0, %v3460
        %v3462 = vpop.f32.mrf.mxu0
        %3463 = vmatprep.mubr.bf16.mxu0 0
        %3464 = vmatmul.mubr.bf16.gmra.mxu0 %v3330
        %v3465 = vpop.f32.mrf.mxu0
        %v3466 = vadd.f32 0.0, %v3465
        %v3467 = vpop.f32.mrf.mxu0
        %v3468 = vpop.f32.mrf.mxu0
        %v3469 = vadd.f32 0.0, %v3468
        %v3470 = vpop.f32.mrf.mxu0
        %3471 = vmatprep.mubr.bf16.mxu0 0
        %3472 = vmatmul.mubr.bf16.gmra.mxu0 %v3331
        %v3473 = vpop.f32.mrf.mxu0
        %v3474 = vadd.f32 0.0, %v3473
        %v3475 = vpop.f32.mrf.mxu0
        %v3476 = vpop.f32.mrf.mxu0
        %v3477 = vadd.f32 0.0, %v3476
        %v3478 = vpop.f32.mrf.mxu0
        %3479 = vmatprep.mubr.bf16.mxu0 0
        %3480 = vmatmul.mubr.bf16.gmra.mxu0 %v3332
        %v3481 = vpop.f32.mrf.mxu0
        %v3482 = vadd.f32 0.0, %v3481
        %v3483 = vpop.f32.mrf.mxu0
        %v3484 = vpop.f32.mrf.mxu0
        %v3485 = vadd.f32 0.0, %v3484
        %v3486 = vpop.f32.mrf.mxu0
        %3487 = vmatprep.mubr.bf16.mxu0 0
        %3488 = vmatmul.mubr.bf16.gmra.mxu0 %v3333
        %v3489 = vpop.f32.mrf.mxu0
        %v3490 = vadd.f32 0.0, %v3489
        %v3491 = vpop.f32.mrf.mxu0
        %v3492 = vpop.f32.mrf.mxu0
        %v3493 = vadd.f32 0.0, %v3492
        %v3494 = vpop.f32.mrf.mxu0
        %3495 = vmatprep.mubr.bf16.mxu0 0
        %3496 = vmatmul.mubr.bf16.gmra.mxu0 %v3334
        %v3497 = vpop.f32.mrf.mxu0
        %v3498 = vadd.f32 0.0, %v3497
        %v3499 = vpop.f32.mrf.mxu0
        %v3500 = vpop.f32.mrf.mxu0
        %v3501 = vadd.f32 0.0, %v3500
        %v3502 = vpop.f32.mrf.mxu0
        %3503 = vmatprep.mubr.bf16.mxu0 0
        %3504 = vmatmul.mubr.bf16.gmra.mxu0 %v3335
        %v3505 = vpop.f32.mrf.mxu0
        %v3506 = vadd.f32 0.0, %v3505
        %v3507 = vpop.f32.mrf.mxu0
        %v3508 = vpop.f32.mrf.mxu0
        %v3509 = vadd.f32 0.0, %v3508
        %v3510 = vpop.f32.mrf.mxu0
        %3511 = vmatprep.mubr.bf16.mxu0 0
        %3512 = vmatmul.mubr.bf16.gmra.mxu0 %v3336
        %v3513 = vpop.f32.mrf.mxu0
        %v3514 = vadd.f32 0.0, %v3513
        %v3515 = vpop.f32.mrf.mxu0
        %v3516 = vpop.f32.mrf.mxu0
        %v3517 = vadd.f32 0.0, %v3516
        %v3518 = vpop.f32.mrf.mxu0
        %3519 = vmatprep.mubr.bf16.mxu0 0
        %3520 = vmatmul.mubr.bf16.gmra.mxu0 %v3337
        %v3521 = vpop.f32.mrf.mxu0
        %v3522 = vadd.f32 0.0, %v3521
        %v3523 = vpop.f32.mrf.mxu0
        %v3524 = vpop.f32.mrf.mxu0
        %v3525 = vadd.f32 0.0, %v3524
        %v3526 = vpop.f32.mrf.mxu0
        %3527 = vmatprep.mubr.bf16.mxu0 0
        %3528 = vmatmul.mubr.bf16.gmra.mxu0 %v3338
        %v3529 = vpop.f32.mrf.mxu0
        %v3530 = vadd.f32 0.0, %v3529
        %v3531 = vpop.f32.mrf.mxu0
        %v3532 = vpop.f32.mrf.mxu0
        %v3533 = vadd.f32 0.0, %v3532
        %v3534 = vpop.f32.mrf.mxu0
        %3535 = vmatprep.mubr.bf16.mxu0 0
        %3536 = vmatmul.mubr.bf16.gmra.mxu0 %v3339
        %v3537 = vpop.f32.mrf.mxu0
        %v3538 = vadd.f32 0.0, %v3537
        %v3539 = vpop.f32.mrf.mxu0
        %v3540 = vpop.f32.mrf.mxu0
        %v3541 = vadd.f32 0.0, %v3540
        %v3542 = vpop.f32.mrf.mxu0
        %3543 = vmatprep.mubr.bf16.mxu0 0
        %3544 = vmatmul.mubr.bf16.gmra.mxu0 %v3340
        %v3545 = vpop.f32.mrf.mxu0
        %v3546 = vadd.f32 0.0, %v3545
        %v3547 = vpop.f32.mrf.mxu0
        %v3548 = vpop.f32.mrf.mxu0
        %v3549 = vadd.f32 0.0, %v3548
        %v3550 = vpop.f32.mrf.mxu0
        %3551 = vmatprep.mubr.bf16.mxu0 0
        %3552 = vmatmul.mubr.bf16.gmra.mxu0 %v3341
        %v3553 = vpop.f32.mrf.mxu0
        %v3554 = vadd.f32 0.0, %v3553
        %v3555 = vpop.f32.mrf.mxu0
        %v3556 = vpop.f32.mrf.mxu0
        %v3557 = vadd.f32 0.0, %v3556
        %v3558 = vpop.f32.mrf.mxu0
        %3559 = vmatprep.mubr.bf16.mxu0 0
        %3560 = vmatmul.mubr.bf16.gmra.mxu0 %v3342
        %v3561 = vpop.f32.mrf.mxu0
        %v3562 = vadd.f32 0.0, %v3561
        %v3563 = vpop.f32.mrf.mxu0
        %v3564 = vpop.f32.mrf.mxu0
        %v3565 = vadd.f32 0.0, %v3564
        %v3566 = vpop.f32.mrf.mxu0
        %3567 = vdwg.mxu0
        %v3568 = vadd.f32 %v3070, %v3442
        %v3569 = vadd.f32 %v3071, %v3445
        %v3570 = vadd.f32 %v3072, %v3450
        %v3571 = vadd.f32 %v3073, %v3453
        %v3572 = vadd.f32 %v3074, %v3458
        %v3573 = vadd.f32 %v3075, %v3461
        %v3574 = vadd.f32 %v3076, %v3466
        %v3575 = vadd.f32 %v3077, %v3469
        %v3576 = vadd.f32 %v3078, %v3474
        %v3577 = vadd.f32 %v3079, %v3477
        %v3578 = vadd.f32 %v3080, %v3482
        %v3579 = vadd.f32 %v3081, %v3485
        %v3580 = vadd.f32 %v3082, %v3490
        %v3581 = vadd.f32 %v3083, %v3493
        %v3582 = vadd.f32 %v3084, %v3498
        %v3583 = vadd.f32 %v3085, %v3501
        %v3584 = vadd.f32 %v3086, %v3506
        %v3585 = vadd.f32 %v3087, %v3509
        %v3586 = vadd.f32 %v3088, %v3514
        %v3587 = vadd.f32 %v3089, %v3517
        %v3588 = vadd.f32 %v3090, %v3522
        %v3589 = vadd.f32 %v3091, %v3525
        %v3590 = vadd.f32 %v3092, %v3530
        %v3591 = vadd.f32 %v3093, %v3533
        %v3592 = vadd.f32 %v3094, %v3538
        %v3593 = vadd.f32 %v3095, %v3541
        %v3594 = vadd.f32 %v3096, %v3546
        %v3595 = vadd.f32 %v3097, %v3549
        %v3596 = vadd.f32 %v3098, %v3554
        %v3597 = vadd.f32 %v3099, %v3557
        %v3598 = vadd.f32 %v3100, %v3562
        %v3599 = vadd.f32 %v3101, %v3565
        %s3600 = scalar_lea.vmem [#allocation2], 24
        %v3601 = vld [vmem:[%s3600] sm:$0xf]
        %v3602 = vld [vmem:[%s3600 + $0x4] sm:$0xf]
        %v3603 = vld [vmem:[%s3600 + $0xc] sm:$0xf]
        %v3604 = vld [vmem:[%s3600 + $0x10] sm:$0xf]
        %v3605 = vld [vmem:[%s3600 + $0x18] sm:$0xf]
        %v3606 = vld [vmem:[%s3600 + $0x1c] sm:$0xf]
        %v3607 = vld [vmem:[%s3600 + $0x24] sm:$0xf]
        %v3608 = vld [vmem:[%s3600 + $0x28] sm:$0xf]
        %v3609 = vld [vmem:[%s3600 + $0x30] sm:$0xf]
        %v3610 = vld [vmem:[%s3600 + $0x34] sm:$0xf]
        %v3611 = vld [vmem:[%s3600 + $0x3c] sm:$0xf]
        %v3612 = vld [vmem:[%s3600 + $0x40] sm:$0xf]
        %v3613 = vld [vmem:[%s3600 + $0x48] sm:$0xf]
        %v3614 = vld [vmem:[%s3600 + $0x4c] sm:$0xf]
        %v3615 = vld [vmem:[%s3600 + $0x54] sm:$0xf]
        %v3616 = vld [vmem:[%s3600 + $0x58] sm:$0xf]
        %v3617 = vld [vmem:[%s3600 + $0x60] sm:$0xf]
        %v3618 = vld [vmem:[%s3600 + $0x64] sm:$0xf]
        %v3619 = vld [vmem:[%s3600 + $0x6c] sm:$0xf]
        %v3620 = vld [vmem:[%s3600 + $0x70] sm:$0xf]
        %v3621 = vld [vmem:[%s3600 + $0x78] sm:$0xf]
        %v3622 = vld [vmem:[%s3600 + $0x7c] sm:$0xf]
        %v3623 = vld [vmem:[%s3600 + $0x84] sm:$0xf]
        %v3624 = vld [vmem:[%s3600 + $0x88] sm:$0xf]
        %v3625 = vld [vmem:[%s3600 + $0x90] sm:$0xf]
        %v3626 = vld [vmem:[%s3600 + $0x94] sm:$0xf]
        %v3627 = vld [vmem:[%s3600 + $0x9c] sm:$0xf]
        %v3628 = vld [vmem:[%s3600 + $0xa0] sm:$0xf]
        %v3629 = vld [vmem:[%s3600 + $0xa8] sm:$0xf]
        %v3630 = vld [vmem:[%s3600 + $0xac] sm:$0xf]
        %v3631 = vld [vmem:[%s3600 + $0xb4] sm:$0xf]
        %v3632 = vld [vmem:[%s3600 + $0xb8] sm:$0xf]
        %s3633 = scalar_lea.vmem %s2, 384
        %v3634 = vld [vmem:[%s3633] sm:$0xf]
        %v3635 = vld [vmem:[%s3633 + $0x4] sm:$0xf]
        %v3636 = vld [vmem:[%s3633 + $0x8] sm:$0xf]
        %v3637 = vld [vmem:[%s3633 + $0xc] sm:$0xf]
        %v3638 = vld [vmem:[%s3633 + $0x10] sm:$0xf]
        %v3639 = vld [vmem:[%s3633 + $0x14] sm:$0xf]
        %v3640 = vld [vmem:[%s3633 + $0x18] sm:$0xf]
        %v3641 = vld [vmem:[%s3633 + $0x1c] sm:$0xf]
        %v3642 = vld [vmem:[%s3633 + $0x20] sm:$0xf]
        %v3643 = vld [vmem:[%s3633 + $0x24] sm:$0xf]
        %v3644 = vld [vmem:[%s3633 + $0x28] sm:$0xf]
        %v3645 = vld [vmem:[%s3633 + $0x2c] sm:$0xf]
        %v3646 = vld [vmem:[%s3633 + $0x30] sm:$0xf]
        %v3647 = vld [vmem:[%s3633 + $0x34] sm:$0xf]
        %v3648 = vld [vmem:[%s3633 + $0x38] sm:$0xf]
        %v3649 = vld [vmem:[%s3633 + $0x3c] sm:$0xf]
        %v3682 = vunpack.c.l.b16 %v3601
        %v3683 = vunpack.c.l.b16 %v3602
        %v3684 = vunpack.c.l.b16 %v3603
        %v3685 = vunpack.c.l.b16 %v3604
        %v3686 = vunpack.c.l.b16 %v3605
        %v3687 = vunpack.c.l.b16 %v3606
        %v3688 = vunpack.c.l.b16 %v3607
        %v3689 = vunpack.c.l.b16 %v3608
        %v3690 = vunpack.c.l.b16 %v3609
        %v3691 = vunpack.c.l.b16 %v3610
        %v3692 = vunpack.c.l.b16 %v3611
        %v3693 = vunpack.c.l.b16 %v3612
        %v3694 = vunpack.c.l.b16 %v3613
        %v3695 = vunpack.c.l.b16 %v3614
        %v3696 = vunpack.c.l.b16 %v3615
        %v3697 = vunpack.c.l.b16 %v3616
        %v3698 = vunpack.c.l.b16 %v3617
        %v3699 = vunpack.c.l.b16 %v3618
        %v3700 = vunpack.c.l.b16 %v3619
        %v3701 = vunpack.c.l.b16 %v3620
        %v3702 = vunpack.c.l.b16 %v3621
        %v3703 = vunpack.c.l.b16 %v3622
        %v3704 = vunpack.c.l.b16 %v3623
        %v3705 = vunpack.c.l.b16 %v3624
        %v3706 = vunpack.c.l.b16 %v3625
        %v3707 = vunpack.c.l.b16 %v3626
        %v3708 = vunpack.c.l.b16 %v3627
        %v3709 = vunpack.c.l.b16 %v3628
        %v3710 = vunpack.c.l.b16 %v3629
        %v3711 = vunpack.c.l.b16 %v3630
        %v3712 = vunpack.c.l.b16 %v3631
        %v3713 = vunpack.c.l.b16 %v3632
        %v3714 = vpack.c.b16 %v3683, %v3682
        %v3715 = vpack.c.b16 %v3685, %v3684
        %v3716 = vpack.c.b16 %v3687, %v3686
        %v3717 = vpack.c.b16 %v3689, %v3688
        %v3718 = vpack.c.b16 %v3691, %v3690
        %v3719 = vpack.c.b16 %v3693, %v3692
        %v3720 = vpack.c.b16 %v3695, %v3694
        %v3721 = vpack.c.b16 %v3697, %v3696
        %v3722 = vpack.c.b16 %v3699, %v3698
        %v3723 = vpack.c.b16 %v3701, %v3700
        %v3724 = vpack.c.b16 %v3703, %v3702
        %v3725 = vpack.c.b16 %v3705, %v3704
        %v3726 = vpack.c.b16 %v3707, %v3706
        %v3727 = vpack.c.b16 %v3709, %v3708
        %v3728 = vpack.c.b16 %v3711, %v3710
        %v3729 = vpack.c.b16 %v3713, %v3712
        %v3762 = vunpack.c.l.b16 %v3634
        %v3763 = vunpack.c.l.b16 %v3635
        %v3764 = vunpack.c.l.b16 %v3636
        %v3765 = vunpack.c.l.b16 %v3637
        %v3766 = vunpack.c.l.b16 %v3638
        %v3767 = vunpack.c.l.b16 %v3639
        %v3768 = vunpack.c.l.b16 %v3640
        %v3769 = vunpack.c.l.b16 %v3641
        %v3770 = vunpack.c.l.b16 %v3642
        %v3771 = vunpack.c.l.b16 %v3643
        %v3772 = vunpack.c.l.b16 %v3644
        %v3773 = vunpack.c.l.b16 %v3645
        %v3774 = vunpack.c.l.b16 %v3646
        %v3775 = vunpack.c.l.b16 %v3647
        %v3776 = vunpack.c.l.b16 %v3648
        %v3777 = vunpack.c.l.b16 %v3649
        %v3778 = vpack.c.b16 %v3763, %v3762
        %v3779 = vpack.c.b16 %v3765, %v3764
        %v3780 = vpack.c.b16 %v3767, %v3766
        %v3781 = vpack.c.b16 %v3769, %v3768
        %v3782 = vpack.c.b16 %v3771, %v3770
        %v3783 = vpack.c.b16 %v3773, %v3772
        %v3784 = vpack.c.b16 %v3775, %v3774
        %v3785 = vpack.c.b16 %v3777, %v3776
        %3794 = vmatprep.subr.bf16.mxu0 0
        %3795 = vmatpush1.bf16.msra.mxu0 %v3785
        %3796 = vmatprep.subr.bf16.mxu0 0
        %3797 = vmatpush1.bf16.msra.mxu0 %v3784
        %3798 = vmatprep.subr.bf16.mxu0 0
        %3799 = vmatpush1.bf16.msra.mxu0 %v3783
        %3800 = vmatprep.subr.bf16.mxu0 0
        %3801 = vmatpush1.bf16.msra.mxu0 %v3782
        %3802 = vmatprep.subr.bf16.mxu0 0
        %3803 = vmatpush1.bf16.msra.mxu0 %v3781
        %3804 = vmatprep.subr.bf16.mxu0 0
        %3805 = vmatpush1.bf16.msra.mxu0 %v3780
        %3806 = vmatprep.subr.bf16.mxu0 0
        %3807 = vmatpush1.bf16.msra.mxu0 %v3779
        %3808 = vmatprep.subr.bf16.mxu0 0
        %3809 = vmatpush1.bf16.msra.mxu0 %v3778
        %3810 = vmatprep.subr.bf16.mxu0 0
        %3811 = vmatpush2.bf16.msra.mxu0 0
        %3812 = vmatprep.subr.bf16.mxu0 0
        %3813 = vmatpush2.bf16.msra.mxu0 0
        %3814 = vmatprep.subr.bf16.mxu0 0
        %3815 = vmatpush2.bf16.msra.mxu0 0
        %3816 = vmatprep.subr.bf16.mxu0 0
        %3817 = vmatpush2.bf16.msra.mxu0 0
        %3818 = vmatprep.subr.bf16.mxu0 0
        %3819 = vmatpush2.bf16.msra.mxu0 0
        %3820 = vmatprep.subr.bf16.mxu0 0
        %3821 = vmatpush2.bf16.msra.mxu0 0
        %3822 = vmatprep.subr.bf16.mxu0 0
        %3823 = vmatpush2.bf16.msra.mxu0 0
        %3824 = vmatprep.subr.bf16.mxu0 0
        %3825 = vmatpush2.bf16.msra.mxu0 0
        %3826 = vmatprep.mubr.bf16.mxu0 0
        %3827 = vmatmul.mubr.bf16.gmra.mxu0 %v3714
        %v3828 = vpop.f32.mrf.mxu0
        %v3829 = vadd.f32 0.0, %v3828
        %v3830 = vpop.f32.mrf.mxu0
        %v3831 = vpop.f32.mrf.mxu0
        %v3832 = vadd.f32 0.0, %v3831
        %v3833 = vpop.f32.mrf.mxu0
        %3834 = vmatprep.mubr.bf16.mxu0 0
        %3835 = vmatmul.mubr.bf16.gmra.mxu0 %v3715
        %v3836 = vpop.f32.mrf.mxu0
        %v3837 = vadd.f32 0.0, %v3836
        %v3838 = vpop.f32.mrf.mxu0
        %v3839 = vpop.f32.mrf.mxu0
        %v3840 = vadd.f32 0.0, %v3839
        %v3841 = vpop.f32.mrf.mxu0
        %3842 = vmatprep.mubr.bf16.mxu0 0
        %3843 = vmatmul.mubr.bf16.gmra.mxu0 %v3716
        %v3844 = vpop.f32.mrf.mxu0
        %v3845 = vadd.f32 0.0, %v3844
        %v3846 = vpop.f32.mrf.mxu0
        %v3847 = vpop.f32.mrf.mxu0
        %v3848 = vadd.f32 0.0, %v3847
        %v3849 = vpop.f32.mrf.mxu0
        %3850 = vmatprep.mubr.bf16.mxu0 0
        %3851 = vmatmul.mubr.bf16.gmra.mxu0 %v3717
        %v3852 = vpop.f32.mrf.mxu0
        %v3853 = vadd.f32 0.0, %v3852
        %v3854 = vpop.f32.mrf.mxu0
        %v3855 = vpop.f32.mrf.mxu0
        %v3856 = vadd.f32 0.0, %v3855
        %v3857 = vpop.f32.mrf.mxu0
        %3858 = vmatprep.mubr.bf16.mxu0 0
        %3859 = vmatmul.mubr.bf16.gmra.mxu0 %v3718
        %v3860 = vpop.f32.mrf.mxu0
        %v3861 = vadd.f32 0.0, %v3860
        %v3862 = vpop.f32.mrf.mxu0
        %v3863 = vpop.f32.mrf.mxu0
        %v3864 = vadd.f32 0.0, %v3863
        %v3865 = vpop.f32.mrf.mxu0
        %3866 = vmatprep.mubr.bf16.mxu0 0
        %3867 = vmatmul.mubr.bf16.gmra.mxu0 %v3719
        %v3868 = vpop.f32.mrf.mxu0
        %v3869 = vadd.f32 0.0, %v3868
        %v3870 = vpop.f32.mrf.mxu0
        %v3871 = vpop.f32.mrf.mxu0
        %v3872 = vadd.f32 0.0, %v3871
        %v3873 = vpop.f32.mrf.mxu0
        %3874 = vmatprep.mubr.bf16.mxu0 0
        %3875 = vmatmul.mubr.bf16.gmra.mxu0 %v3720
        %v3876 = vpop.f32.mrf.mxu0
        %v3877 = vadd.f32 0.0, %v3876
        %v3878 = vpop.f32.mrf.mxu0
        %v3879 = vpop.f32.mrf.mxu0
        %v3880 = vadd.f32 0.0, %v3879
        %v3881 = vpop.f32.mrf.mxu0
        %3882 = vmatprep.mubr.bf16.mxu0 0
        %3883 = vmatmul.mubr.bf16.gmra.mxu0 %v3721
        %v3884 = vpop.f32.mrf.mxu0
        %v3885 = vadd.f32 0.0, %v3884
        %v3886 = vpop.f32.mrf.mxu0
        %v3887 = vpop.f32.mrf.mxu0
        %v3888 = vadd.f32 0.0, %v3887
        %v3889 = vpop.f32.mrf.mxu0
        %3890 = vmatprep.mubr.bf16.mxu0 0
        %3891 = vmatmul.mubr.bf16.gmra.mxu0 %v3722
        %v3892 = vpop.f32.mrf.mxu0
        %v3893 = vadd.f32 0.0, %v3892
        %v3894 = vpop.f32.mrf.mxu0
        %v3895 = vpop.f32.mrf.mxu0
        %v3896 = vadd.f32 0.0, %v3895
        %v3897 = vpop.f32.mrf.mxu0
        %3898 = vmatprep.mubr.bf16.mxu0 0
        %3899 = vmatmul.mubr.bf16.gmra.mxu0 %v3723
        %v3900 = vpop.f32.mrf.mxu0
        %v3901 = vadd.f32 0.0, %v3900
        %v3902 = vpop.f32.mrf.mxu0
        %v3903 = vpop.f32.mrf.mxu0
        %v3904 = vadd.f32 0.0, %v3903
        %v3905 = vpop.f32.mrf.mxu0
        %3906 = vmatprep.mubr.bf16.mxu0 0
        %3907 = vmatmul.mubr.bf16.gmra.mxu0 %v3724
        %v3908 = vpop.f32.mrf.mxu0
        %v3909 = vadd.f32 0.0, %v3908
        %v3910 = vpop.f32.mrf.mxu0
        %v3911 = vpop.f32.mrf.mxu0
        %v3912 = vadd.f32 0.0, %v3911
        %v3913 = vpop.f32.mrf.mxu0
        %3914 = vmatprep.mubr.bf16.mxu0 0
        %3915 = vmatmul.mubr.bf16.gmra.mxu0 %v3725
        %v3916 = vpop.f32.mrf.mxu0
        %v3917 = vadd.f32 0.0, %v3916
        %v3918 = vpop.f32.mrf.mxu0
        %v3919 = vpop.f32.mrf.mxu0
        %v3920 = vadd.f32 0.0, %v3919
        %v3921 = vpop.f32.mrf.mxu0
        %3922 = vmatprep.mubr.bf16.mxu0 0
        %3923 = vmatmul.mubr.bf16.gmra.mxu0 %v3726
        %v3924 = vpop.f32.mrf.mxu0
        %v3925 = vadd.f32 0.0, %v3924
        %v3926 = vpop.f32.mrf.mxu0
        %v3927 = vpop.f32.mrf.mxu0
        %v3928 = vadd.f32 0.0, %v3927
        %v3929 = vpop.f32.mrf.mxu0
        %3930 = vmatprep.mubr.bf16.mxu0 0
        %3931 = vmatmul.mubr.bf16.gmra.mxu0 %v3727
        %v3932 = vpop.f32.mrf.mxu0
        %v3933 = vadd.f32 0.0, %v3932
        %v3934 = vpop.f32.mrf.mxu0
        %v3935 = vpop.f32.mrf.mxu0
        %v3936 = vadd.f32 0.0, %v3935
        %v3937 = vpop.f32.mrf.mxu0
        %3938 = vmatprep.mubr.bf16.mxu0 0
        %3939 = vmatmul.mubr.bf16.gmra.mxu0 %v3728
        %v3940 = vpop.f32.mrf.mxu0
        %v3941 = vadd.f32 0.0, %v3940
        %v3942 = vpop.f32.mrf.mxu0
        %v3943 = vpop.f32.mrf.mxu0
        %v3944 = vadd.f32 0.0, %v3943
        %v3945 = vpop.f32.mrf.mxu0
        %3946 = vmatprep.mubr.bf16.mxu0 0
        %3947 = vmatmul.mubr.bf16.gmra.mxu0 %v3729
        %v3948 = vpop.f32.mrf.mxu0
        %v3949 = vadd.f32 0.0, %v3948
        %v3950 = vpop.f32.mrf.mxu0
        %v3951 = vpop.f32.mrf.mxu0
        %v3952 = vadd.f32 0.0, %v3951
        %v3953 = vpop.f32.mrf.mxu0
        %3954 = vdwg.mxu0
        %v3955 = vadd.f32 %v3568, %v3829
        %v3956 = vadd.f32 %v3569, %v3832
        %v3957 = vadd.f32 %v3570, %v3837
        %v3958 = vadd.f32 %v3571, %v3840
        %v3959 = vadd.f32 %v3572, %v3845
        %v3960 = vadd.f32 %v3573, %v3848
        %v3961 = vadd.f32 %v3574, %v3853
        %v3962 = vadd.f32 %v3575, %v3856
        %v3963 = vadd.f32 %v3576, %v3861
        %v3964 = vadd.f32 %v3577, %v3864
        %v3965 = vadd.f32 %v3578, %v3869
        %v3966 = vadd.f32 %v3579, %v3872
        %v3967 = vadd.f32 %v3580, %v3877
        %v3968 = vadd.f32 %v3581, %v3880
        %v3969 = vadd.f32 %v3582, %v3885
        %v3970 = vadd.f32 %v3583, %v3888
        %v3971 = vadd.f32 %v3584, %v3893
        %v3972 = vadd.f32 %v3585, %v3896
        %v3973 = vadd.f32 %v3586, %v3901
        %v3974 = vadd.f32 %v3587, %v3904
        %v3975 = vadd.f32 %v3588, %v3909
        %v3976 = vadd.f32 %v3589, %v3912
        %v3977 = vadd.f32 %v3590, %v3917
        %v3978 = vadd.f32 %v3591, %v3920
        %v3979 = vadd.f32 %v3592, %v3925
        %v3980 = vadd.f32 %v3593, %v3928
        %v3981 = vadd.f32 %v3594, %v3933
        %v3982 = vadd.f32 %v3595, %v3936
        %v3983 = vadd.f32 %v3596, %v3941
        %v3984 = vadd.f32 %v3597, %v3944
        %v3985 = vadd.f32 %v3598, %v3949
        %v3986 = vadd.f32 %v3599, %v3952
        %v3987 = vld [vmem:[%s3600] sm:$0xf]
        %v3988 = vld [vmem:[%s3600 + $0x4] sm:$0xf]
        %v3989 = vld [vmem:[%s3600 + $0x8] sm:$0x1]
        %v3990 = vld [vmem:[%s3600 + $0xc] sm:$0xf]
        %v3991 = vld [vmem:[%s3600 + $0x10] sm:$0xf]
        %v3992 = vld [vmem:[%s3600 + $0x14] sm:$0x1]
        %v3993 = vld [vmem:[%s3600 + $0x18] sm:$0xf]
        %v3994 = vld [vmem:[%s3600 + $0x1c] sm:$0xf]
        %v3995 = vld [vmem:[%s3600 + $0x20] sm:$0x1]
        %v3996 = vld [vmem:[%s3600 + $0x24] sm:$0xf]
        %v3997 = vld [vmem:[%s3600 + $0x28] sm:$0xf]
        %v3998 = vld [vmem:[%s3600 + $0x2c] sm:$0x1]
        %v3999 = vld [vmem:[%s3600 + $0x30] sm:$0xf]
        %v4000 = vld [vmem:[%s3600 + $0x34] sm:$0xf]
        %v4001 = vld [vmem:[%s3600 + $0x38] sm:$0x1]
        %v4002 = vld [vmem:[%s3600 + $0x3c] sm:$0xf]
        %v4003 = vld [vmem:[%s3600 + $0x40] sm:$0xf]
        %v4004 = vld [vmem:[%s3600 + $0x44] sm:$0x1]
        %v4005 = vld [vmem:[%s3600 + $0x48] sm:$0xf]
        %v4006 = vld [vmem:[%s3600 + $0x4c] sm:$0xf]
        %v4007 = vld [vmem:[%s3600 + $0x50] sm:$0x1]
        %v4008 = vld [vmem:[%s3600 + $0x54] sm:$0xf]
        %v4009 = vld [vmem:[%s3600 + $0x58] sm:$0xf]
        %v4010 = vld [vmem:[%s3600 + $0x5c] sm:$0x1]
        %v4011 = vld [vmem:[%s3600 + $0x60] sm:$0xf]
        %v4012 = vld [vmem:[%s3600 + $0x64] sm:$0xf]
        %v4013 = vld [vmem:[%s3600 + $0x68] sm:$0x1]
        %v4014 = vld [vmem:[%s3600 + $0x6c] sm:$0xf]
        %v4015 = vld [vmem:[%s3600 + $0x70] sm:$0xf]
        %v4016 = vld [vmem:[%s3600 + $0x74] sm:$0x1]
        %v4017 = vld [vmem:[%s3600 + $0x78] sm:$0xf]
        %v4018 = vld [vmem:[%s3600 + $0x7c] sm:$0xf]
        %v4019 = vld [vmem:[%s3600 + $0x80] sm:$0x1]
        %v4020 = vld [vmem:[%s3600 + $0x84] sm:$0xf]
        %v4021 = vld [vmem:[%s3600 + $0x88] sm:$0xf]
        %v4022 = vld [vmem:[%s3600 + $0x8c] sm:$0x1]
        %v4023 = vld [vmem:[%s3600 + $0x90] sm:$0xf]
        %v4024 = vld [vmem:[%s3600 + $0x94] sm:$0xf]
        %v4025 = vld [vmem:[%s3600 + $0x98] sm:$0x1]
        %v4026 = vld [vmem:[%s3600 + $0x9c] sm:$0xf]
        %v4027 = vld [vmem:[%s3600 + $0xa0] sm:$0xf]
        %v4028 = vld [vmem:[%s3600 + $0xa4] sm:$0x1]
        %v4029 = vld [vmem:[%s3600 + $0xa8] sm:$0xf]
        %v4030 = vld [vmem:[%s3600 + $0xac] sm:$0xf]
        %v4031 = vld [vmem:[%s3600 + $0xb0] sm:$0x1]
        %v4032 = vld [vmem:[%s3600 + $0xb4] sm:$0xf]
        %v4033 = vld [vmem:[%s3600 + $0xb8] sm:$0xf]
        %v4034 = vld [vmem:[%s3600 + $0xbc] sm:$0x1]
        %v4036 = vshrl.u32 %v3987, 16
        %v4038 = vrot.slane %v4036, 4
        %v4039 = vshll.u32 %v3987, 16
        %v4041 = vrot.slane %v4039, 5
        %v4042 = vor.u32 %v4038, %v4041
        %v4043 = vrot.slane %v4042, 4
        %v4045 = vshll.u32 %v3988, 16
        %v4047 = vrot.slane %v4045, 5
        %v4048 = vsel %vm496, %v4043, %v4047
        %v4049 = vshrl.u32 %v3988, 16
        %v4051 = vrot.slane %v4049, 4
        %v4052 = vor.u32 %v4051, %v4047
        %v4053 = vrot.slane %v4052, 4
        %v4055 = vshll.u32 %v3989, 16
        %v4057 = vrot.slane %v4055, 5
        %v4058 = vsel %vm496, %v4053, %v4057
        %v4060 = vshrl.u32 %v3990, 16
        %v4062 = vrot.slane %v4060, 4
        %v4063 = vshll.u32 %v3990, 16
        %v4065 = vrot.slane %v4063, 5
        %v4066 = vor.u32 %v4062, %v4065
        %v4067 = vrot.slane %v4066, 4
        %v4069 = vshll.u32 %v3991, 16
        %v4071 = vrot.slane %v4069, 5
        %v4072 = vsel %vm496, %v4067, %v4071
        %v4073 = vshrl.u32 %v3991, 16
        %v4075 = vrot.slane %v4073, 4
        %v4076 = vor.u32 %v4075, %v4071
        %v4077 = vrot.slane %v4076, 4
        %v4079 = vshll.u32 %v3992, 16
        %v4081 = vrot.slane %v4079, 5
        %v4082 = vsel %vm496, %v4077, %v4081
        %v4084 = vshrl.u32 %v3993, 16
        %v4086 = vrot.slane %v4084, 4
        %v4087 = vshll.u32 %v3993, 16
        %v4089 = vrot.slane %v4087, 5
        %v4090 = vor.u32 %v4086, %v4089
        %v4091 = vrot.slane %v4090, 4
        %v4093 = vshll.u32 %v3994, 16
        %v4095 = vrot.slane %v4093, 5
        %v4096 = vsel %vm496, %v4091, %v4095
        %v4097 = vshrl.u32 %v3994, 16
        %v4099 = vrot.slane %v4097, 4
        %v4100 = vor.u32 %v4099, %v4095
        %v4101 = vrot.slane %v4100, 4
        %v4103 = vshll.u32 %v3995, 16
        %v4105 = vrot.slane %v4103, 5
        %v4106 = vsel %vm496, %v4101, %v4105
        %v4108 = vshrl.u32 %v3996, 16
        %v4110 = vrot.slane %v4108, 4
        %v4111 = vshll.u32 %v3996, 16
        %v4113 = vrot.slane %v4111, 5
        %v4114 = vor.u32 %v4110, %v4113
        %v4115 = vrot.slane %v4114, 4
        %v4117 = vshll.u32 %v3997, 16
        %v4119 = vrot.slane %v4117, 5
        %v4120 = vsel %vm496, %v4115, %v4119
        %v4121 = vshrl.u32 %v3997, 16
        %v4123 = vrot.slane %v4121, 4
        %v4124 = vor.u32 %v4123, %v4119
        %v4125 = vrot.slane %v4124, 4
        %v4127 = vshll.u32 %v3998, 16
        %v4129 = vrot.slane %v4127, 5
        %v4130 = vsel %vm496, %v4125, %v4129
        %v4132 = vshrl.u32 %v3999, 16
        %v4134 = vrot.slane %v4132, 4
        %v4135 = vshll.u32 %v3999, 16
        %v4137 = vrot.slane %v4135, 5
        %v4138 = vor.u32 %v4134, %v4137
        %v4139 = vrot.slane %v4138, 4
        %v4141 = vshll.u32 %v4000, 16
        %v4143 = vrot.slane %v4141, 5
        %v4144 = vsel %vm496, %v4139, %v4143
        %v4145 = vshrl.u32 %v4000, 16
        %v4147 = vrot.slane %v4145, 4
        %v4148 = vor.u32 %v4147, %v4143
        %v4149 = vrot.slane %v4148, 4
        %v4151 = vshll.u32 %v4001, 16
        %v4153 = vrot.slane %v4151, 5
        %v4154 = vsel %vm496, %v4149, %v4153
        %v4156 = vshrl.u32 %v4002, 16
        %v4158 = vrot.slane %v4156, 4
        %v4159 = vshll.u32 %v4002, 16
        %v4161 = vrot.slane %v4159, 5
        %v4162 = vor.u32 %v4158, %v4161
        %v4163 = vrot.slane %v4162, 4
        %v4165 = vshll.u32 %v4003, 16
        %v4167 = vrot.slane %v4165, 5
        %v4168 = vsel %vm496, %v4163, %v4167
        %v4169 = vshrl.u32 %v4003, 16
        %v4171 = vrot.slane %v4169, 4
        %v4172 = vor.u32 %v4171, %v4167
        %v4173 = vrot.slane %v4172, 4
        %v4175 = vshll.u32 %v4004, 16
        %v4177 = vrot.slane %v4175, 5
        %v4178 = vsel %vm496, %v4173, %v4177
        %v4180 = vshrl.u32 %v4005, 16
        %v4182 = vrot.slane %v4180, 4
        %v4183 = vshll.u32 %v4005, 16
        %v4185 = vrot.slane %v4183, 5
        %v4186 = vor.u32 %v4182, %v4185
        %v4187 = vrot.slane %v4186, 4
        %v4189 = vshll.u32 %v4006, 16
        %v4191 = vrot.slane %v4189, 5
        %v4192 = vsel %vm496, %v4187, %v4191
        %v4193 = vshrl.u32 %v4006, 16
        %v4195 = vrot.slane %v4193, 4
        %v4196 = vor.u32 %v4195, %v4191
        %v4197 = vrot.slane %v4196, 4
        %v4199 = vshll.u32 %v4007, 16
        %v4201 = vrot.slane %v4199, 5
        %v4202 = vsel %vm496, %v4197, %v4201
        %v4204 = vshrl.u32 %v4008, 16
        %v4206 = vrot.slane %v4204, 4
        %v4207 = vshll.u32 %v4008, 16
        %v4209 = vrot.slane %v4207, 5
        %v4210 = vor.u32 %v4206, %v4209
        %v4211 = vrot.slane %v4210, 4
        %v4213 = vshll.u32 %v4009, 16
        %v4215 = vrot.slane %v4213, 5
        %v4216 = vsel %vm496, %v4211, %v4215
        %v4217 = vshrl.u32 %v4009, 16
        %v4219 = vrot.slane %v4217, 4
        %v4220 = vor.u32 %v4219, %v4215
        %v4221 = vrot.slane %v4220, 4
        %v4223 = vshll.u32 %v4010, 16
        %v4225 = vrot.slane %v4223, 5
        %v4226 = vsel %vm496, %v4221, %v4225
        %v4228 = vshrl.u32 %v4011, 16
        %v4230 = vrot.slane %v4228, 4
        %v4231 = vshll.u32 %v4011, 16
        %v4233 = vrot.slane %v4231, 5
        %v4234 = vor.u32 %v4230, %v4233
        %v4235 = vrot.slane %v4234, 4
        %v4237 = vshll.u32 %v4012, 16
        %v4239 = vrot.slane %v4237, 5
        %v4240 = vsel %vm496, %v4235, %v4239
        %v4241 = vshrl.u32 %v4012, 16
        %v4243 = vrot.slane %v4241, 4
        %v4244 = vor.u32 %v4243, %v4239
        %v4245 = vrot.slane %v4244, 4
        %v4247 = vshll.u32 %v4013, 16
        %v4249 = vrot.slane %v4247, 5
        %v4250 = vsel %vm496, %v4245, %v4249
        %v4252 = vshrl.u32 %v4014, 16
        %v4254 = vrot.slane %v4252, 4
        %v4255 = vshll.u32 %v4014, 16
        %v4257 = vrot.slane %v4255, 5
        %v4258 = vor.u32 %v4254, %v4257
        %v4259 = vrot.slane %v4258, 4
        %v4261 = vshll.u32 %v4015, 16
        %v4263 = vrot.slane %v4261, 5
        %v4264 = vsel %vm496, %v4259, %v4263
        %v4265 = vshrl.u32 %v4015, 16
        %v4267 = vrot.slane %v4265, 4
        %v4268 = vor.u32 %v4267, %v4263
        %v4269 = vrot.slane %v4268, 4
        %v4271 = vshll.u32 %v4016, 16
        %v4273 = vrot.slane %v4271, 5
        %v4274 = vsel %vm496, %v4269, %v4273
        %v4276 = vshrl.u32 %v4017, 16
        %v4278 = vrot.slane %v4276, 4
        %v4279 = vshll.u32 %v4017, 16
        %v4281 = vrot.slane %v4279, 5
        %v4282 = vor.u32 %v4278, %v4281
        %v4283 = vrot.slane %v4282, 4
        %v4285 = vshll.u32 %v4018, 16
        %v4287 = vrot.slane %v4285, 5
        %v4288 = vsel %vm496, %v4283, %v4287
        %v4289 = vshrl.u32 %v4018, 16
        %v4291 = vrot.slane %v4289, 4
        %v4292 = vor.u32 %v4291, %v4287
        %v4293 = vrot.slane %v4292, 4
        %v4295 = vshll.u32 %v4019, 16
        %v4297 = vrot.slane %v4295, 5
        %v4298 = vsel %vm496, %v4293, %v4297
        %v4300 = vshrl.u32 %v4020, 16
        %v4302 = vrot.slane %v4300, 4
        %v4303 = vshll.u32 %v4020, 16
        %v4305 = vrot.slane %v4303, 5
        %v4306 = vor.u32 %v4302, %v4305
        %v4307 = vrot.slane %v4306, 4
        %v4309 = vshll.u32 %v4021, 16
        %v4311 = vrot.slane %v4309, 5
        %v4312 = vsel %vm496, %v4307, %v4311
        %v4313 = vshrl.u32 %v4021, 16
        %v4315 = vrot.slane %v4313, 4
        %v4316 = vor.u32 %v4315, %v4311
        %v4317 = vrot.slane %v4316, 4
        %v4319 = vshll.u32 %v4022, 16
        %v4321 = vrot.slane %v4319, 5
        %v4322 = vsel %vm496, %v4317, %v4321
        %v4324 = vshrl.u32 %v4023, 16
        %v4326 = vrot.slane %v4324, 4
        %v4327 = vshll.u32 %v4023, 16
        %v4329 = vrot.slane %v4327, 5
        %v4330 = vor.u32 %v4326, %v4329
        %v4331 = vrot.slane %v4330, 4
        %v4333 = vshll.u32 %v4024, 16
        %v4335 = vrot.slane %v4333, 5
        %v4336 = vsel %vm496, %v4331, %v4335
        %v4337 = vshrl.u32 %v4024, 16
        %v4339 = vrot.slane %v4337, 4
        %v4340 = vor.u32 %v4339, %v4335
        %v4341 = vrot.slane %v4340, 4
        %v4343 = vshll.u32 %v4025, 16
        %v4345 = vrot.slane %v4343, 5
        %v4346 = vsel %vm496, %v4341, %v4345
        %v4348 = vshrl.u32 %v4026, 16
        %v4350 = vrot.slane %v4348, 4
        %v4351 = vshll.u32 %v4026, 16
        %v4353 = vrot.slane %v4351, 5
        %v4354 = vor.u32 %v4350, %v4353
        %v4355 = vrot.slane %v4354, 4
        %v4357 = vshll.u32 %v4027, 16
        %v4359 = vrot.slane %v4357, 5
        %v4360 = vsel %vm496, %v4355, %v4359
        %v4361 = vshrl.u32 %v4027, 16
        %v4363 = vrot.slane %v4361, 4
        %v4364 = vor.u32 %v4363, %v4359
        %v4365 = vrot.slane %v4364, 4
        %v4367 = vshll.u32 %v4028, 16
        %v4369 = vrot.slane %v4367, 5
        %v4370 = vsel %vm496, %v4365, %v4369
        %v4372 = vshrl.u32 %v4029, 16
        %v4374 = vrot.slane %v4372, 4
        %v4375 = vshll.u32 %v4029, 16
        %v4377 = vrot.slane %v4375, 5
        %v4378 = vor.u32 %v4374, %v4377
        %v4379 = vrot.slane %v4378, 4
        %v4381 = vshll.u32 %v4030, 16
        %v4383 = vrot.slane %v4381, 5
        %v4384 = vsel %vm496, %v4379, %v4383
        %v4385 = vshrl.u32 %v4030, 16
        %v4387 = vrot.slane %v4385, 4
        %v4388 = vor.u32 %v4387, %v4383
        %v4389 = vrot.slane %v4388, 4
        %v4391 = vshll.u32 %v4031, 16
        %v4393 = vrot.slane %v4391, 5
        %v4394 = vsel %vm496, %v4389, %v4393
        %v4396 = vshrl.u32 %v4032, 16
        %v4398 = vrot.slane %v4396, 4
        %v4399 = vshll.u32 %v4032, 16
        %v4401 = vrot.slane %v4399, 5
        %v4402 = vor.u32 %v4398, %v4401
        %v4403 = vrot.slane %v4402, 4
        %v4405 = vshll.u32 %v4033, 16
        %v4407 = vrot.slane %v4405, 5
        %v4408 = vsel %vm496, %v4403, %v4407
        %v4409 = vshrl.u32 %v4033, 16
        %v4411 = vrot.slane %v4409, 4
        %v4412 = vor.u32 %v4411, %v4407
        %v4413 = vrot.slane %v4412, 4
        %v4415 = vshll.u32 %v4034, 16
        %v4417 = vrot.slane %v4415, 5
        %v4418 = vsel %vm496, %v4413, %v4417
        %s4419 = scalar_lea.vmem %s2, 448
        %v4420 = vld [vmem:[%s4419] sm:$0xf]
        %v4421 = vld [vmem:[%s4419 + $0x4] sm:$0xf]
        %v4422 = vld [vmem:[%s4419 + $0x8] sm:$0xf]
        %v4423 = vld [vmem:[%s4419 + $0xc] sm:$0xf]
        %v4424 = vld [vmem:[%s4419 + $0x10] sm:$0xf]
        %v4425 = vld [vmem:[%s4419 + $0x14] sm:$0xf]
        %v4426 = vld [vmem:[%s4419 + $0x18] sm:$0xf]
        %v4427 = vld [vmem:[%s4419 + $0x1c] sm:$0xf]
        %v4428 = vld [vmem:[%s4419 + $0x20] sm:$0xf]
        %v4429 = vld [vmem:[%s4419 + $0x24] sm:$0xf]
        %v4430 = vld [vmem:[%s4419 + $0x28] sm:$0xf]
        %v4431 = vld [vmem:[%s4419 + $0x2c] sm:$0xf]
        %v4432 = vld [vmem:[%s4419 + $0x30] sm:$0xf]
        %v4433 = vld [vmem:[%s4419 + $0x34] sm:$0xf]
        %v4434 = vld [vmem:[%s4419 + $0x38] sm:$0xf]
        %v4435 = vld [vmem:[%s4419 + $0x3c] sm:$0xf]
        %v4436 = vunpack.c.l.b16 %v4048
        %v4437 = vunpack.c.l.b16 %v4058
        %v4438 = vunpack.c.l.b16 %v4072
        %v4439 = vunpack.c.l.b16 %v4082
        %v4440 = vunpack.c.l.b16 %v4096
        %v4441 = vunpack.c.l.b16 %v4106
        %v4442 = vunpack.c.l.b16 %v4120
        %v4443 = vunpack.c.l.b16 %v4130
        %v4444 = vunpack.c.l.b16 %v4144
        %v4445 = vunpack.c.l.b16 %v4154
        %v4446 = vunpack.c.l.b16 %v4168
        %v4447 = vunpack.c.l.b16 %v4178
        %v4448 = vunpack.c.l.b16 %v4192
        %v4449 = vunpack.c.l.b16 %v4202
        %v4450 = vunpack.c.l.b16 %v4216
        %v4451 = vunpack.c.l.b16 %v4226
        %v4452 = vunpack.c.l.b16 %v4240
        %v4453 = vunpack.c.l.b16 %v4250
        %v4454 = vunpack.c.l.b16 %v4264
        %v4455 = vunpack.c.l.b16 %v4274
        %v4456 = vunpack.c.l.b16 %v4288
        %v4457 = vunpack.c.l.b16 %v4298
        %v4458 = vunpack.c.l.b16 %v4312
        %v4459 = vunpack.c.l.b16 %v4322
        %v4460 = vunpack.c.l.b16 %v4336
        %v4461 = vunpack.c.l.b16 %v4346
        %v4462 = vunpack.c.l.b16 %v4360
        %v4463 = vunpack.c.l.b16 %v4370
        %v4464 = vunpack.c.l.b16 %v4384
        %v4465 = vunpack.c.l.b16 %v4394
        %v4466 = vunpack.c.l.b16 %v4408
        %v4467 = vunpack.c.l.b16 %v4418
        %v4468 = vpack.c.b16 %v4437, %v4436
        %v4469 = vpack.c.b16 %v4439, %v4438
        %v4470 = vpack.c.b16 %v4441, %v4440
        %v4471 = vpack.c.b16 %v4443, %v4442
        %v4472 = vpack.c.b16 %v4445, %v4444
        %v4473 = vpack.c.b16 %v4447, %v4446
        %v4474 = vpack.c.b16 %v4449, %v4448
        %v4475 = vpack.c.b16 %v4451, %v4450
        %v4476 = vpack.c.b16 %v4453, %v4452
        %v4477 = vpack.c.b16 %v4455, %v4454
        %v4478 = vpack.c.b16 %v4457, %v4456
        %v4479 = vpack.c.b16 %v4459, %v4458
        %v4480 = vpack.c.b16 %v4461, %v4460
        %v4481 = vpack.c.b16 %v4463, %v4462
        %v4482 = vpack.c.b16 %v4465, %v4464
        %v4483 = vpack.c.b16 %v4467, %v4466
        %v4516 = vunpack.c.l.b16 %v4420
        %v4517 = vunpack.c.l.b16 %v4421
        %v4518 = vunpack.c.l.b16 %v4422
        %v4519 = vunpack.c.l.b16 %v4423
        %v4520 = vunpack.c.l.b16 %v4424
        %v4521 = vunpack.c.l.b16 %v4425
        %v4522 = vunpack.c.l.b16 %v4426
        %v4523 = vunpack.c.l.b16 %v4427
        %v4524 = vunpack.c.l.b16 %v4428
        %v4525 = vunpack.c.l.b16 %v4429
        %v4526 = vunpack.c.l.b16 %v4430
        %v4527 = vunpack.c.l.b16 %v4431
        %v4528 = vunpack.c.l.b16 %v4432
        %v4529 = vunpack.c.l.b16 %v4433
        %v4530 = vunpack.c.l.b16 %v4434
        %v4531 = vunpack.c.l.b16 %v4435
        %v4532 = vpack.c.b16 %v4517, %v4516
        %v4533 = vpack.c.b16 %v4519, %v4518
        %v4534 = vpack.c.b16 %v4521, %v4520
        %v4535 = vpack.c.b16 %v4523, %v4522
        %v4536 = vpack.c.b16 %v4525, %v4524
        %v4537 = vpack.c.b16 %v4527, %v4526
        %v4538 = vpack.c.b16 %v4529, %v4528
        %v4539 = vpack.c.b16 %v4531, %v4530
        %4548 = vmatprep.subr.bf16.mxu0 0
        %4549 = vmatpush1.bf16.msra.mxu0 %v4539
        %4550 = vmatprep.subr.bf16.mxu0 0
        %4551 = vmatpush1.bf16.msra.mxu0 %v4538
        %4552 = vmatprep.subr.bf16.mxu0 0
        %4553 = vmatpush1.bf16.msra.mxu0 %v4537
        %4554 = vmatprep.subr.bf16.mxu0 0
        %4555 = vmatpush1.bf16.msra.mxu0 %v4536
        %4556 = vmatprep.subr.bf16.mxu0 0
        %4557 = vmatpush1.bf16.msra.mxu0 %v4535
        %4558 = vmatprep.subr.bf16.mxu0 0
        %4559 = vmatpush1.bf16.msra.mxu0 %v4534
        %4560 = vmatprep.subr.bf16.mxu0 0
        %4561 = vmatpush1.bf16.msra.mxu0 %v4533
        %4562 = vmatprep.subr.bf16.mxu0 0
        %4563 = vmatpush1.bf16.msra.mxu0 %v4532
        %4564 = vmatprep.subr.bf16.mxu0 0
        %4565 = vmatpush2.bf16.msra.mxu0 0
        %4566 = vmatprep.subr.bf16.mxu0 0
        %4567 = vmatpush2.bf16.msra.mxu0 0
        %4568 = vmatprep.subr.bf16.mxu0 0
        %4569 = vmatpush2.bf16.msra.mxu0 0
        %4570 = vmatprep.subr.bf16.mxu0 0
        %4571 = vmatpush2.bf16.msra.mxu0 0
        %4572 = vmatprep.subr.bf16.mxu0 0
        %4573 = vmatpush2.bf16.msra.mxu0 0
        %4574 = vmatprep.subr.bf16.mxu0 0
        %4575 = vmatpush2.bf16.msra.mxu0 0
        %4576 = vmatprep.subr.bf16.mxu0 0
        %4577 = vmatpush2.bf16.msra.mxu0 0
        %4578 = vmatprep.subr.bf16.mxu0 0
        %4579 = vmatpush2.bf16.msra.mxu0 0
        %4580 = vmatprep.mubr.bf16.mxu0 0
        %4581 = vmatmul.mubr.bf16.gmra.mxu0 %v4468
        %v4582 = vpop.f32.mrf.mxu0
        %v4583 = vadd.f32 0.0, %v4582
        %v4584 = vpop.f32.mrf.mxu0
        %v4585 = vpop.f32.mrf.mxu0
        %v4586 = vadd.f32 0.0, %v4585
        %v4587 = vpop.f32.mrf.mxu0
        %4588 = vmatprep.mubr.bf16.mxu0 0
        %4589 = vmatmul.mubr.bf16.gmra.mxu0 %v4469
        %v4590 = vpop.f32.mrf.mxu0
        %v4591 = vadd.f32 0.0, %v4590
        %v4592 = vpop.f32.mrf.mxu0
        %v4593 = vpop.f32.mrf.mxu0
        %v4594 = vadd.f32 0.0, %v4593
        %v4595 = vpop.f32.mrf.mxu0
        %4596 = vmatprep.mubr.bf16.mxu0 0
        %4597 = vmatmul.mubr.bf16.gmra.mxu0 %v4470
        %v4598 = vpop.f32.mrf.mxu0
        %v4599 = vadd.f32 0.0, %v4598
        %v4600 = vpop.f32.mrf.mxu0
        %v4601 = vpop.f32.mrf.mxu0
        %v4602 = vadd.f32 0.0, %v4601
        %v4603 = vpop.f32.mrf.mxu0
        %4604 = vmatprep.mubr.bf16.mxu0 0
        %4605 = vmatmul.mubr.bf16.gmra.mxu0 %v4471
        %v4606 = vpop.f32.mrf.mxu0
        %v4607 = vadd.f32 0.0, %v4606
        %v4608 = vpop.f32.mrf.mxu0
        %v4609 = vpop.f32.mrf.mxu0
        %v4610 = vadd.f32 0.0, %v4609
        %v4611 = vpop.f32.mrf.mxu0
        %4612 = vmatprep.mubr.bf16.mxu0 0
        %4613 = vmatmul.mubr.bf16.gmra.mxu0 %v4472
        %v4614 = vpop.f32.mrf.mxu0
        %v4615 = vadd.f32 0.0, %v4614
        %v4616 = vpop.f32.mrf.mxu0
        %v4617 = vpop.f32.mrf.mxu0
        %v4618 = vadd.f32 0.0, %v4617
        %v4619 = vpop.f32.mrf.mxu0
        %4620 = vmatprep.mubr.bf16.mxu0 0
        %4621 = vmatmul.mubr.bf16.gmra.mxu0 %v4473
        %v4622 = vpop.f32.mrf.mxu0
        %v4623 = vadd.f32 0.0, %v4622
        %v4624 = vpop.f32.mrf.mxu0
        %v4625 = vpop.f32.mrf.mxu0
        %v4626 = vadd.f32 0.0, %v4625
        %v4627 = vpop.f32.mrf.mxu0
        %4628 = vmatprep.mubr.bf16.mxu0 0
        %4629 = vmatmul.mubr.bf16.gmra.mxu0 %v4474
        %v4630 = vpop.f32.mrf.mxu0
        %v4631 = vadd.f32 0.0, %v4630
        %v4632 = vpop.f32.mrf.mxu0
        %v4633 = vpop.f32.mrf.mxu0
        %v4634 = vadd.f32 0.0, %v4633
        %v4635 = vpop.f32.mrf.mxu0
        %4636 = vmatprep.mubr.bf16.mxu0 0
        %4637 = vmatmul.mubr.bf16.gmra.mxu0 %v4475
        %v4638 = vpop.f32.mrf.mxu0
        %v4639 = vadd.f32 0.0, %v4638
        %v4640 = vpop.f32.mrf.mxu0
        %v4641 = vpop.f32.mrf.mxu0
        %v4642 = vadd.f32 0.0, %v4641
        %v4643 = vpop.f32.mrf.mxu0
        %4644 = vmatprep.mubr.bf16.mxu0 0
        %4645 = vmatmul.mubr.bf16.gmra.mxu0 %v4476
        %v4646 = vpop.f32.mrf.mxu0
        %v4647 = vadd.f32 0.0, %v4646
        %v4648 = vpop.f32.mrf.mxu0
        %v4649 = vpop.f32.mrf.mxu0
        %v4650 = vadd.f32 0.0, %v4649
        %v4651 = vpop.f32.mrf.mxu0
        %4652 = vmatprep.mubr.bf16.mxu0 0
        %4653 = vmatmul.mubr.bf16.gmra.mxu0 %v4477
        %v4654 = vpop.f32.mrf.mxu0
        %v4655 = vadd.f32 0.0, %v4654
        %v4656 = vpop.f32.mrf.mxu0
        %v4657 = vpop.f32.mrf.mxu0
        %v4658 = vadd.f32 0.0, %v4657
        %v4659 = vpop.f32.mrf.mxu0
        %4660 = vmatprep.mubr.bf16.mxu0 0
        %4661 = vmatmul.mubr.bf16.gmra.mxu0 %v4478
        %v4662 = vpop.f32.mrf.mxu0
        %v4663 = vadd.f32 0.0, %v4662
        %v4664 = vpop.f32.mrf.mxu0
        %v4665 = vpop.f32.mrf.mxu0
        %v4666 = vadd.f32 0.0, %v4665
        %v4667 = vpop.f32.mrf.mxu0
        %4668 = vmatprep.mubr.bf16.mxu0 0
        %4669 = vmatmul.mubr.bf16.gmra.mxu0 %v4479
        %v4670 = vpop.f32.mrf.mxu0
        %v4671 = vadd.f32 0.0, %v4670
        %v4672 = vpop.f32.mrf.mxu0
        %v4673 = vpop.f32.mrf.mxu0
        %v4674 = vadd.f32 0.0, %v4673
        %v4675 = vpop.f32.mrf.mxu0
        %4676 = vmatprep.mubr.bf16.mxu0 0
        %4677 = vmatmul.mubr.bf16.gmra.mxu0 %v4480
        %v4678 = vpop.f32.mrf.mxu0
        %v4679 = vadd.f32 0.0, %v4678
        %v4680 = vpop.f32.mrf.mxu0
        %v4681 = vpop.f32.mrf.mxu0
        %v4682 = vadd.f32 0.0, %v4681
        %v4683 = vpop.f32.mrf.mxu0
        %4684 = vmatprep.mubr.bf16.mxu0 0
        %4685 = vmatmul.mubr.bf16.gmra.mxu0 %v4481
        %v4686 = vpop.f32.mrf.mxu0
        %v4687 = vadd.f32 0.0, %v4686
        %v4688 = vpop.f32.mrf.mxu0
        %v4689 = vpop.f32.mrf.mxu0
        %v4690 = vadd.f32 0.0, %v4689
        %v4691 = vpop.f32.mrf.mxu0
        %4692 = vmatprep.mubr.bf16.mxu0 0
        %4693 = vmatmul.mubr.bf16.gmra.mxu0 %v4482
        %v4694 = vpop.f32.mrf.mxu0
        %v4695 = vadd.f32 0.0, %v4694
        %v4696 = vpop.f32.mrf.mxu0
        %v4697 = vpop.f32.mrf.mxu0
        %v4698 = vadd.f32 0.0, %v4697
        %v4699 = vpop.f32.mrf.mxu0
        %4700 = vmatprep.mubr.bf16.mxu0 0
        %4701 = vmatmul.mubr.bf16.gmra.mxu0 %v4483
        %v4702 = vpop.f32.mrf.mxu0
        %v4703 = vadd.f32 0.0, %v4702
        %v4704 = vpop.f32.mrf.mxu0
        %v4705 = vpop.f32.mrf.mxu0
        %v4706 = vadd.f32 0.0, %v4705
        %v4707 = vpop.f32.mrf.mxu0
        %4708 = vdwg.mxu0
        %v4709 = vadd.f32 %v3955, %v4583
        %v4710 = vadd.f32 %v3956, %v4586
        %v4711 = vadd.f32 %v3957, %v4591
        %v4712 = vadd.f32 %v3958, %v4594
        %v4713 = vadd.f32 %v3959, %v4599
        %v4714 = vadd.f32 %v3960, %v4602
        %v4715 = vadd.f32 %v3961, %v4607
        %v4716 = vadd.f32 %v3962, %v4610
        %v4717 = vadd.f32 %v3963, %v4615
        %v4718 = vadd.f32 %v3964, %v4618
        %v4719 = vadd.f32 %v3965, %v4623
        %v4720 = vadd.f32 %v3966, %v4626
        %v4721 = vadd.f32 %v3967, %v4631
        %v4722 = vadd.f32 %v3968, %v4634
        %v4723 = vadd.f32 %v3969, %v4639
        %v4724 = vadd.f32 %v3970, %v4642
        %v4725 = vadd.f32 %v3971, %v4647
        %v4726 = vadd.f32 %v3972, %v4650
        %v4727 = vadd.f32 %v3973, %v4655
        %v4728 = vadd.f32 %v3974, %v4658
        %v4729 = vadd.f32 %v3975, %v4663
        %v4730 = vadd.f32 %v3976, %v4666
        %v4731 = vadd.f32 %v3977, %v4671
        %v4732 = vadd.f32 %v3978, %v4674
        %v4733 = vadd.f32 %v3979, %v4679
        %v4734 = vadd.f32 %v3980, %v4682
        %v4735 = vadd.f32 %v3981, %v4687
        %v4736 = vadd.f32 %v3982, %v4690
        %v4737 = vadd.f32 %v3983, %v4695
        %v4738 = vadd.f32 %v3984, %v4698
        %v4739 = vadd.f32 %v3985, %v4703
        %v4740 = vadd.f32 %v3986, %v4706
        %v4741 = vld [vmem:[%s3600] sm:$0xe]
        %v4742 = vld [vmem:[%s3600 + $0xc] sm:$0xe]
        %v4743 = vld [vmem:[%s3600 + $0x18] sm:$0xe]
        %v4744 = vld [vmem:[%s3600 + $0x24] sm:$0xe]
        %v4745 = vld [vmem:[%s3600 + $0x30] sm:$0xe]
        %v4746 = vld [vmem:[%s3600 + $0x3c] sm:$0xe]
        %v4747 = vld [vmem:[%s3600 + $0x48] sm:$0xe]
        %v4748 = vld [vmem:[%s3600 + $0x54] sm:$0xe]
        %v4749 = vld [vmem:[%s3600 + $0x60] sm:$0xe]
        %v4750 = vld [vmem:[%s3600 + $0x6c] sm:$0xe]
        %v4751 = vld [vmem:[%s3600 + $0x78] sm:$0xe]
        %v4752 = vld [vmem:[%s3600 + $0x84] sm:$0xe]
        %v4753 = vld [vmem:[%s3600 + $0x90] sm:$0xe]
        %v4754 = vld [vmem:[%s3600 + $0x9c] sm:$0xe]
        %v4755 = vld [vmem:[%s3600 + $0xa8] sm:$0xe]
        %v4756 = vld [vmem:[%s3600 + $0xb4] sm:$0xe]
        %v4805 = vrot.slane %v4741, 5
        %v4806 = vrot.slane %v4805, 4
        %v4807 = vrot.slane %v3988, 5
        %v4808 = vsel %vm1526, %v4806, %v4807
        %v4809 = vrot.slane %v4807, 4
        %v4810 = vrot.slane %v3989, 5
        %v4811 = vsel %vm1526, %v4809, %v4810
        %v4812 = vrot.slane %v4742, 5
        %v4813 = vrot.slane %v4812, 4
        %v4814 = vrot.slane %v3991, 5
        %v4815 = vsel %vm1526, %v4813, %v4814
        %v4816 = vrot.slane %v4814, 4
        %v4817 = vrot.slane %v3992, 5
        %v4818 = vsel %vm1526, %v4816, %v4817
        %v4819 = vrot.slane %v4743, 5
        %v4820 = vrot.slane %v4819, 4
        %v4821 = vrot.slane %v3994, 5
        %v4822 = vsel %vm1526, %v4820, %v4821
        %v4823 = vrot.slane %v4821, 4
        %v4824 = vrot.slane %v3995, 5
        %v4825 = vsel %vm1526, %v4823, %v4824
        %v4826 = vrot.slane %v4744, 5
        %v4827 = vrot.slane %v4826, 4
        %v4828 = vrot.slane %v3997, 5
        %v4829 = vsel %vm1526, %v4827, %v4828
        %v4830 = vrot.slane %v4828, 4
        %v4831 = vrot.slane %v3998, 5
        %v4832 = vsel %vm1526, %v4830, %v4831
        %v4833 = vrot.slane %v4745, 5
        %v4834 = vrot.slane %v4833, 4
        %v4835 = vrot.slane %v4000, 5
        %v4836 = vsel %vm1526, %v4834, %v4835
        %v4837 = vrot.slane %v4835, 4
        %v4838 = vrot.slane %v4001, 5
        %v4839 = vsel %vm1526, %v4837, %v4838
        %v4840 = vrot.slane %v4746, 5
        %v4841 = vrot.slane %v4840, 4
        %v4842 = vrot.slane %v4003, 5
        %v4843 = vsel %vm1526, %v4841, %v4842
        %v4844 = vrot.slane %v4842, 4
        %v4845 = vrot.slane %v4004, 5
        %v4846 = vsel %vm1526, %v4844, %v4845
        %v4847 = vrot.slane %v4747, 5
        %v4848 = vrot.slane %v4847, 4
        %v4849 = vrot.slane %v4006, 5
        %v4850 = vsel %vm1526, %v4848, %v4849
        %v4851 = vrot.slane %v4849, 4
        %v4852 = vrot.slane %v4007, 5
        %v4853 = vsel %vm1526, %v4851, %v4852
        %v4854 = vrot.slane %v4748, 5
        %v4855 = vrot.slane %v4854, 4
        %v4856 = vrot.slane %v4009, 5
        %v4857 = vsel %vm1526, %v4855, %v4856
        %v4858 = vrot.slane %v4856, 4
        %v4859 = vrot.slane %v4010, 5
        %v4860 = vsel %vm1526, %v4858, %v4859
        %v4861 = vrot.slane %v4749, 5
        %v4862 = vrot.slane %v4861, 4
        %v4863 = vrot.slane %v4012, 5
        %v4864 = vsel %vm1526, %v4862, %v4863
        %v4865 = vrot.slane %v4863, 4
        %v4866 = vrot.slane %v4013, 5
        %v4867 = vsel %vm1526, %v4865, %v4866
        %v4868 = vrot.slane %v4750, 5
        %v4869 = vrot.slane %v4868, 4
        %v4870 = vrot.slane %v4015, 5
        %v4871 = vsel %vm1526, %v4869, %v4870
        %v4872 = vrot.slane %v4870, 4
        %v4873 = vrot.slane %v4016, 5
        %v4874 = vsel %vm1526, %v4872, %v4873
        %v4875 = vrot.slane %v4751, 5
        %v4876 = vrot.slane %v4875, 4
        %v4877 = vrot.slane %v4018, 5
        %v4878 = vsel %vm1526, %v4876, %v4877
        %v4879 = vrot.slane %v4877, 4
        %v4880 = vrot.slane %v4019, 5
        %v4881 = vsel %vm1526, %v4879, %v4880
        %v4882 = vrot.slane %v4752, 5
        %v4883 = vrot.slane %v4882, 4
        %v4884 = vrot.slane %v4021, 5
        %v4885 = vsel %vm1526, %v4883, %v4884
        %v4886 = vrot.slane %v4884, 4
        %v4887 = vrot.slane %v4022, 5
        %v4888 = vsel %vm1526, %v4886, %v4887
        %v4889 = vrot.slane %v4753, 5
        %v4890 = vrot.slane %v4889, 4
        %v4891 = vrot.slane %v4024, 5
        %v4892 = vsel %vm1526, %v4890, %v4891
        %v4893 = vrot.slane %v4891, 4
        %v4894 = vrot.slane %v4025, 5
        %v4895 = vsel %vm1526, %v4893, %v4894
        %v4896 = vrot.slane %v4754, 5
        %v4897 = vrot.slane %v4896, 4
        %v4898 = vrot.slane %v4027, 5
        %v4899 = vsel %vm1526, %v4897, %v4898
        %v4900 = vrot.slane %v4898, 4
        %v4901 = vrot.slane %v4028, 5
        %v4902 = vsel %vm1526, %v4900, %v4901
        %v4903 = vrot.slane %v4755, 5
        %v4904 = vrot.slane %v4903, 4
        %v4905 = vrot.slane %v4030, 5
        %v4906 = vsel %vm1526, %v4904, %v4905
        %v4907 = vrot.slane %v4905, 4
        %v4908 = vrot.slane %v4031, 5
        %v4909 = vsel %vm1526, %v4907, %v4908
        %v4910 = vrot.slane %v4756, 5
        %v4911 = vrot.slane %v4910, 4
        %v4912 = vrot.slane %v4033, 5
        %v4913 = vsel %vm1526, %v4911, %v4912
        %v4914 = vrot.slane %v4912, 4
        %v4915 = vrot.slane %v4034, 5
        %v4916 = vsel %vm1526, %v4914, %v4915
        %s4917 = scalar_lea.vmem %s2, 512
        %v4918 = vld [vmem:[%s4917] sm:$0xf]
        %v4919 = vld [vmem:[%s4917 + $0x4] sm:$0xf]
        %v4920 = vld [vmem:[%s4917 + $0x8] sm:$0xf]
        %v4921 = vld [vmem:[%s4917 + $0xc] sm:$0xf]
        %v4922 = vld [vmem:[%s4917 + $0x10] sm:$0xf]
        %v4923 = vld [vmem:[%s4917 + $0x14] sm:$0xf]
        %v4924 = vld [vmem:[%s4917 + $0x18] sm:$0xf]
        %v4925 = vld [vmem:[%s4917 + $0x1c] sm:$0xf]
        %v4926 = vld [vmem:[%s4917 + $0x20] sm:$0xf]
        %v4927 = vld [vmem:[%s4917 + $0x24] sm:$0xf]
        %v4928 = vld [vmem:[%s4917 + $0x28] sm:$0xf]
        %v4929 = vld [vmem:[%s4917 + $0x2c] sm:$0xf]
        %v4930 = vld [vmem:[%s4917 + $0x30] sm:$0xf]
        %v4931 = vld [vmem:[%s4917 + $0x34] sm:$0xf]
        %v4932 = vld [vmem:[%s4917 + $0x38] sm:$0xf]
        %v4933 = vld [vmem:[%s4917 + $0x3c] sm:$0xf]
        %v4934 = vunpack.c.l.b16 %v4808
        %v4935 = vunpack.c.l.b16 %v4811
        %v4936 = vunpack.c.l.b16 %v4815
        %v4937 = vunpack.c.l.b16 %v4818
        %v4938 = vunpack.c.l.b16 %v4822
        %v4939 = vunpack.c.l.b16 %v4825
        %v4940 = vunpack.c.l.b16 %v4829
        %v4941 = vunpack.c.l.b16 %v4832
        %v4942 = vunpack.c.l.b16 %v4836
        %v4943 = vunpack.c.l.b16 %v4839
        %v4944 = vunpack.c.l.b16 %v4843
        %v4945 = vunpack.c.l.b16 %v4846
        %v4946 = vunpack.c.l.b16 %v4850
        %v4947 = vunpack.c.l.b16 %v4853
        %v4948 = vunpack.c.l.b16 %v4857
        %v4949 = vunpack.c.l.b16 %v4860
        %v4950 = vunpack.c.l.b16 %v4864
        %v4951 = vunpack.c.l.b16 %v4867
        %v4952 = vunpack.c.l.b16 %v4871
        %v4953 = vunpack.c.l.b16 %v4874
        %v4954 = vunpack.c.l.b16 %v4878
        %v4955 = vunpack.c.l.b16 %v4881
        %v4956 = vunpack.c.l.b16 %v4885
        %v4957 = vunpack.c.l.b16 %v4888
        %v4958 = vunpack.c.l.b16 %v4892
        %v4959 = vunpack.c.l.b16 %v4895
        %v4960 = vunpack.c.l.b16 %v4899
        %v4961 = vunpack.c.l.b16 %v4902
        %v4962 = vunpack.c.l.b16 %v4906
        %v4963 = vunpack.c.l.b16 %v4909
        %v4964 = vunpack.c.l.b16 %v4913
        %v4965 = vunpack.c.l.b16 %v4916
        %v4966 = vpack.c.b16 %v4935, %v4934
        %v4967 = vpack.c.b16 %v4937, %v4936
        %v4968 = vpack.c.b16 %v4939, %v4938
        %v4969 = vpack.c.b16 %v4941, %v4940
        %v4970 = vpack.c.b16 %v4943, %v4942
        %v4971 = vpack.c.b16 %v4945, %v4944
        %v4972 = vpack.c.b16 %v4947, %v4946
        %v4973 = vpack.c.b16 %v4949, %v4948
        %v4974 = vpack.c.b16 %v4951, %v4950
        %v4975 = vpack.c.b16 %v4953, %v4952
        %v4976 = vpack.c.b16 %v4955, %v4954
        %v4977 = vpack.c.b16 %v4957, %v4956
        %v4978 = vpack.c.b16 %v4959, %v4958
        %v4979 = vpack.c.b16 %v4961, %v4960
        %v4980 = vpack.c.b16 %v4963, %v4962
        %v4981 = vpack.c.b16 %v4965, %v4964
        %v5014 = vunpack.c.l.b16 %v4918
        %v5015 = vunpack.c.l.b16 %v4919
        %v5016 = vunpack.c.l.b16 %v4920
        %v5017 = vunpack.c.l.b16 %v4921
        %v5018 = vunpack.c.l.b16 %v4922
        %v5019 = vunpack.c.l.b16 %v4923
        %v5020 = vunpack.c.l.b16 %v4924
        %v5021 = vunpack.c.l.b16 %v4925
        %v5022 = vunpack.c.l.b16 %v4926
        %v5023 = vunpack.c.l.b16 %v4927
        %v5024 = vunpack.c.l.b16 %v4928
        %v5025 = vunpack.c.l.b16 %v4929
        %v5026 = vunpack.c.l.b16 %v4930
        %v5027 = vunpack.c.l.b16 %v4931
        %v5028 = vunpack.c.l.b16 %v4932
        %v5029 = vunpack.c.l.b16 %v4933
        %v5030 = vpack.c.b16 %v5015, %v5014
        %v5031 = vpack.c.b16 %v5017, %v5016
        %v5032 = vpack.c.b16 %v5019, %v5018
        %v5033 = vpack.c.b16 %v5021, %v5020
        %v5034 = vpack.c.b16 %v5023, %v5022
        %v5035 = vpack.c.b16 %v5025, %v5024
        %v5036 = vpack.c.b16 %v5027, %v5026
        %v5037 = vpack.c.b16 %v5029, %v5028
        %5046 = vmatprep.subr.bf16.mxu0 0
        %5047 = vmatpush1.bf16.msra.mxu0 %v5037
        %5048 = vmatprep.subr.bf16.mxu0 0
        %5049 = vmatpush1.bf16.msra.mxu0 %v5036
        %5050 = vmatprep.subr.bf16.mxu0 0
        %5051 = vmatpush1.bf16.msra.mxu0 %v5035
        %5052 = vmatprep.subr.bf16.mxu0 0
        %5053 = vmatpush1.bf16.msra.mxu0 %v5034
        %5054 = vmatprep.subr.bf16.mxu0 0
        %5055 = vmatpush1.bf16.msra.mxu0 %v5033
        %5056 = vmatprep.subr.bf16.mxu0 0
        %5057 = vmatpush1.bf16.msra.mxu0 %v5032
        %5058 = vmatprep.subr.bf16.mxu0 0
        %5059 = vmatpush1.bf16.msra.mxu0 %v5031
        %5060 = vmatprep.subr.bf16.mxu0 0
        %5061 = vmatpush1.bf16.msra.mxu0 %v5030
        %5062 = vmatprep.subr.bf16.mxu0 0
        %5063 = vmatpush2.bf16.msra.mxu0 0
        %5064 = vmatprep.subr.bf16.mxu0 0
        %5065 = vmatpush2.bf16.msra.mxu0 0
        %5066 = vmatprep.subr.bf16.mxu0 0
        %5067 = vmatpush2.bf16.msra.mxu0 0
        %5068 = vmatprep.subr.bf16.mxu0 0
        %5069 = vmatpush2.bf16.msra.mxu0 0
        %5070 = vmatprep.subr.bf16.mxu0 0
        %5071 = vmatpush2.bf16.msra.mxu0 0
        %5072 = vmatprep.subr.bf16.mxu0 0
        %5073 = vmatpush2.bf16.msra.mxu0 0
        %5074 = vmatprep.subr.bf16.mxu0 0
        %5075 = vmatpush2.bf16.msra.mxu0 0
        %5076 = vmatprep.subr.bf16.mxu0 0
        %5077 = vmatpush2.bf16.msra.mxu0 0
        %5078 = vmatprep.mubr.bf16.mxu0 0
        %5079 = vmatmul.mubr.bf16.gmra.mxu0 %v4966
        %v5080 = vpop.f32.mrf.mxu0
        %v5081 = vadd.f32 0.0, %v5080
        %v5082 = vpop.f32.mrf.mxu0
        %v5083 = vpop.f32.mrf.mxu0
        %v5084 = vadd.f32 0.0, %v5083
        %v5085 = vpop.f32.mrf.mxu0
        %5086 = vmatprep.mubr.bf16.mxu0 0
        %5087 = vmatmul.mubr.bf16.gmra.mxu0 %v4967
        %v5088 = vpop.f32.mrf.mxu0
        %v5089 = vadd.f32 0.0, %v5088
        %v5090 = vpop.f32.mrf.mxu0
        %v5091 = vpop.f32.mrf.mxu0
        %v5092 = vadd.f32 0.0, %v5091
        %v5093 = vpop.f32.mrf.mxu0
        %5094 = vmatprep.mubr.bf16.mxu0 0
        %5095 = vmatmul.mubr.bf16.gmra.mxu0 %v4968
        %v5096 = vpop.f32.mrf.mxu0
        %v5097 = vadd.f32 0.0, %v5096
        %v5098 = vpop.f32.mrf.mxu0
        %v5099 = vpop.f32.mrf.mxu0
        %v5100 = vadd.f32 0.0, %v5099
        %v5101 = vpop.f32.mrf.mxu0
        %5102 = vmatprep.mubr.bf16.mxu0 0
        %5103 = vmatmul.mubr.bf16.gmra.mxu0 %v4969
        %v5104 = vpop.f32.mrf.mxu0
        %v5105 = vadd.f32 0.0, %v5104
        %v5106 = vpop.f32.mrf.mxu0
        %v5107 = vpop.f32.mrf.mxu0
        %v5108 = vadd.f32 0.0, %v5107
        %v5109 = vpop.f32.mrf.mxu0
        %5110 = vmatprep.mubr.bf16.mxu0 0
        %5111 = vmatmul.mubr.bf16.gmra.mxu0 %v4970
        %v5112 = vpop.f32.mrf.mxu0
        %v5113 = vadd.f32 0.0, %v5112
        %v5114 = vpop.f32.mrf.mxu0
        %v5115 = vpop.f32.mrf.mxu0
        %v5116 = vadd.f32 0.0, %v5115
        %v5117 = vpop.f32.mrf.mxu0
        %5118 = vmatprep.mubr.bf16.mxu0 0
        %5119 = vmatmul.mubr.bf16.gmra.mxu0 %v4971
        %v5120 = vpop.f32.mrf.mxu0
        %v5121 = vadd.f32 0.0, %v5120
        %v5122 = vpop.f32.mrf.mxu0
        %v5123 = vpop.f32.mrf.mxu0
        %v5124 = vadd.f32 0.0, %v5123
        %v5125 = vpop.f32.mrf.mxu0
        %5126 = vmatprep.mubr.bf16.mxu0 0
        %5127 = vmatmul.mubr.bf16.gmra.mxu0 %v4972
        %v5128 = vpop.f32.mrf.mxu0
        %v5129 = vadd.f32 0.0, %v5128
        %v5130 = vpop.f32.mrf.mxu0
        %v5131 = vpop.f32.mrf.mxu0
        %v5132 = vadd.f32 0.0, %v5131
        %v5133 = vpop.f32.mrf.mxu0
        %5134 = vmatprep.mubr.bf16.mxu0 0
        %5135 = vmatmul.mubr.bf16.gmra.mxu0 %v4973
        %v5136 = vpop.f32.mrf.mxu0
        %v5137 = vadd.f32 0.0, %v5136
        %v5138 = vpop.f32.mrf.mxu0
        %v5139 = vpop.f32.mrf.mxu0
        %v5140 = vadd.f32 0.0, %v5139
        %v5141 = vpop.f32.mrf.mxu0
        %5142 = vmatprep.mubr.bf16.mxu0 0
        %5143 = vmatmul.mubr.bf16.gmra.mxu0 %v4974
        %v5144 = vpop.f32.mrf.mxu0
        %v5145 = vadd.f32 0.0, %v5144
        %v5146 = vpop.f32.mrf.mxu0
        %v5147 = vpop.f32.mrf.mxu0
        %v5148 = vadd.f32 0.0, %v5147
        %v5149 = vpop.f32.mrf.mxu0
        %5150 = vmatprep.mubr.bf16.mxu0 0
        %5151 = vmatmul.mubr.bf16.gmra.mxu0 %v4975
        %v5152 = vpop.f32.mrf.mxu0
        %v5153 = vadd.f32 0.0, %v5152
        %v5154 = vpop.f32.mrf.mxu0
        %v5155 = vpop.f32.mrf.mxu0
        %v5156 = vadd.f32 0.0, %v5155
        %v5157 = vpop.f32.mrf.mxu0
        %5158 = vmatprep.mubr.bf16.mxu0 0
        %5159 = vmatmul.mubr.bf16.gmra.mxu0 %v4976
        %v5160 = vpop.f32.mrf.mxu0
        %v5161 = vadd.f32 0.0, %v5160
        %v5162 = vpop.f32.mrf.mxu0
        %v5163 = vpop.f32.mrf.mxu0
        %v5164 = vadd.f32 0.0, %v5163
        %v5165 = vpop.f32.mrf.mxu0
        %5166 = vmatprep.mubr.bf16.mxu0 0
        %5167 = vmatmul.mubr.bf16.gmra.mxu0 %v4977
        %v5168 = vpop.f32.mrf.mxu0
        %v5169 = vadd.f32 0.0, %v5168
        %v5170 = vpop.f32.mrf.mxu0
        %v5171 = vpop.f32.mrf.mxu0
        %v5172 = vadd.f32 0.0, %v5171
        %v5173 = vpop.f32.mrf.mxu0
        %5174 = vmatprep.mubr.bf16.mxu0 0
        %5175 = vmatmul.mubr.bf16.gmra.mxu0 %v4978
        %v5176 = vpop.f32.mrf.mxu0
        %v5177 = vadd.f32 0.0, %v5176
        %v5178 = vpop.f32.mrf.mxu0
        %v5179 = vpop.f32.mrf.mxu0
        %v5180 = vadd.f32 0.0, %v5179
        %v5181 = vpop.f32.mrf.mxu0
        %5182 = vmatprep.mubr.bf16.mxu0 0
        %5183 = vmatmul.mubr.bf16.gmra.mxu0 %v4979
        %v5184 = vpop.f32.mrf.mxu0
        %v5185 = vadd.f32 0.0, %v5184
        %v5186 = vpop.f32.mrf.mxu0
        %v5187 = vpop.f32.mrf.mxu0
        %v5188 = vadd.f32 0.0, %v5187
        %v5189 = vpop.f32.mrf.mxu0
        %5190 = vmatprep.mubr.bf16.mxu0 0
        %5191 = vmatmul.mubr.bf16.gmra.mxu0 %v4980
        %v5192 = vpop.f32.mrf.mxu0
        %v5193 = vadd.f32 0.0, %v5192
        %v5194 = vpop.f32.mrf.mxu0
        %v5195 = vpop.f32.mrf.mxu0
        %v5196 = vadd.f32 0.0, %v5195
        %v5197 = vpop.f32.mrf.mxu0
        %5198 = vmatprep.mubr.bf16.mxu0 0
        %5199 = vmatmul.mubr.bf16.gmra.mxu0 %v4981
        %v5200 = vpop.f32.mrf.mxu0
        %v5201 = vadd.f32 0.0, %v5200
        %v5202 = vpop.f32.mrf.mxu0
        %v5203 = vpop.f32.mrf.mxu0
        %v5204 = vadd.f32 0.0, %v5203
        %v5205 = vpop.f32.mrf.mxu0
        %5206 = vdwg.mxu0
        %v5207 = vadd.f32 %v4709, %v5081
        %v5208 = vadd.f32 %v4710, %v5084
        %v5209 = vadd.f32 %v4711, %v5089
        %v5210 = vadd.f32 %v4712, %v5092
        %v5211 = vadd.f32 %v4713, %v5097
        %v5212 = vadd.f32 %v4714, %v5100
        %v5213 = vadd.f32 %v4715, %v5105
        %v5214 = vadd.f32 %v4716, %v5108
        %v5215 = vadd.f32 %v4717, %v5113
        %v5216 = vadd.f32 %v4718, %v5116
        %v5217 = vadd.f32 %v4719, %v5121
        %v5218 = vadd.f32 %v4720, %v5124
        %v5219 = vadd.f32 %v4721, %v5129
        %v5220 = vadd.f32 %v4722, %v5132
        %v5221 = vadd.f32 %v4723, %v5137
        %v5222 = vadd.f32 %v4724, %v5140
        %v5223 = vadd.f32 %v4725, %v5145
        %v5224 = vadd.f32 %v4726, %v5148
        %v5225 = vadd.f32 %v4727, %v5153
        %v5226 = vadd.f32 %v4728, %v5156
        %v5227 = vadd.f32 %v4729, %v5161
        %v5228 = vadd.f32 %v4730, %v5164
        %v5229 = vadd.f32 %v4731, %v5169
        %v5230 = vadd.f32 %v4732, %v5172
        %v5231 = vadd.f32 %v4733, %v5177
        %v5232 = vadd.f32 %v4734, %v5180
        %v5233 = vadd.f32 %v4735, %v5185
        %v5234 = vadd.f32 %v4736, %v5188
        %v5235 = vadd.f32 %v4737, %v5193
        %v5236 = vadd.f32 %v4738, %v5196
        %v5237 = vadd.f32 %v4739, %v5201
        %v5238 = vadd.f32 %v4740, %v5204
        %v5239 = vpack.c.bf16 %v5208, %v5207
        %v5240 = vpack.c.bf16 %v5210, %v5209
        %v5241 = vpack.c.bf16 %v5212, %v5211
        %v5242 = vpack.c.bf16 %v5214, %v5213
        %v5243 = vpack.c.bf16 %v5216, %v5215
        %v5244 = vpack.c.bf16 %v5218, %v5217
        %v5245 = vpack.c.bf16 %v5220, %v5219
        %v5246 = vpack.c.bf16 %v5222, %v5221
        %v5247 = vpack.c.bf16 %v5224, %v5223
        %v5248 = vpack.c.bf16 %v5226, %v5225
        %v5249 = vpack.c.bf16 %v5228, %v5227
        %v5250 = vpack.c.bf16 %v5230, %v5229
        %v5251 = vpack.c.bf16 %v5232, %v5231
        %v5252 = vpack.c.bf16 %v5234, %v5233
        %v5253 = vpack.c.bf16 %v5236, %v5235
        %v5254 = vpack.c.bf16 %v5238, %v5237
        %v5271 = vunpack.c.l.b16 %v5239
        %v5272 = vunpack.c.h.b16 %v5239
        %v5273 = vunpack.c.l.b16 %v5240
        %v5274 = vunpack.c.h.b16 %v5240
        %v5275 = vunpack.c.l.b16 %v5241
        %v5276 = vunpack.c.h.b16 %v5241
        %v5277 = vunpack.c.l.b16 %v5242
        %v5278 = vunpack.c.h.b16 %v5242
        %v5279 = vunpack.c.l.b16 %v5243
        %v5280 = vunpack.c.h.b16 %v5243
        %v5281 = vunpack.c.l.b16 %v5244
        %v5282 = vunpack.c.h.b16 %v5244
        %v5283 = vunpack.c.l.b16 %v5245
        %v5284 = vunpack.c.h.b16 %v5245
        %v5285 = vunpack.c.l.b16 %v5246
        %v5286 = vunpack.c.h.b16 %v5246
        %v5287 = vunpack.c.l.b16 %v5247
        %v5288 = vunpack.c.h.b16 %v5247
        %v5289 = vunpack.c.l.b16 %v5248
        %v5290 = vunpack.c.h.b16 %v5248
        %v5291 = vunpack.c.l.b16 %v5249
        %v5292 = vunpack.c.h.b16 %v5249
        %v5293 = vunpack.c.l.b16 %v5250
        %v5294 = vunpack.c.h.b16 %v5250
        %v5295 = vunpack.c.l.b16 %v5251
        %v5296 = vunpack.c.h.b16 %v5251
        %v5297 = vunpack.c.l.b16 %v5252
        %v5298 = vunpack.c.h.b16 %v5252
        %v5299 = vunpack.c.l.b16 %v5253
        %v5300 = vunpack.c.h.b16 %v5253
        %v5301 = vunpack.c.l.b16 %v5254
        %v5302 = vunpack.c.h.b16 %v5254
        %v5303 = vpack.c.b16 %v5271, %v5271
        %v5304 = vpack.c.b16 %v5272, %v5272
        %v5305 = vpack.c.b16 %v5273, %v5273
        %v5306 = vpack.c.b16 %v5274, %v5274
        %v5307 = vpack.c.b16 %v5275, %v5275
        %v5308 = vpack.c.b16 %v5276, %v5276
        %v5309 = vpack.c.b16 %v5277, %v5277
        %v5310 = vpack.c.b16 %v5278, %v5278
        %v5311 = vpack.c.b16 %v5279, %v5279
        %v5312 = vpack.c.b16 %v5280, %v5280
        %v5313 = vpack.c.b16 %v5281, %v5281
        %v5314 = vpack.c.b16 %v5282, %v5282
        %v5315 = vpack.c.b16 %v5283, %v5283
        %v5316 = vpack.c.b16 %v5284, %v5284
        %v5317 = vpack.c.b16 %v5285, %v5285
        %v5318 = vpack.c.b16 %v5286, %v5286
        %v5319 = vpack.c.b16 %v5287, %v5287
        %v5320 = vpack.c.b16 %v5288, %v5288
        %v5321 = vpack.c.b16 %v5289, %v5289
        %v5322 = vpack.c.b16 %v5290, %v5290
        %v5323 = vpack.c.b16 %v5291, %v5291
        %v5324 = vpack.c.b16 %v5292, %v5292
        %v5325 = vpack.c.b16 %v5293, %v5293
        %v5326 = vpack.c.b16 %v5294, %v5294
        %v5327 = vpack.c.b16 %v5295, %v5295
        %v5328 = vpack.c.b16 %v5296, %v5296
        %v5329 = vpack.c.b16 %v5297, %v5297
        %v5330 = vpack.c.b16 %v5298, %v5298
        %v5331 = vpack.c.b16 %v5299, %v5299
        %v5332 = vpack.c.b16 %v5300, %v5300
        %v5333 = vpack.c.b16 %v5301, %v5301
        %v5334 = vpack.c.b16 %v5302, %v5302
        %5367 = vst [vmem:[%s276] sm:$0xf] %v5303
        %5368 = vst [vmem:[%s276 + $0x4] sm:$0xf] %v5304
        %5369 = vst [vmem:[%s276 + $0x8] sm:$0xf] %v5305
        %5370 = vst [vmem:[%s276 + $0xc] sm:$0xf] %v5306
        %5371 = vst [vmem:[%s276 + $0x10] sm:$0xf] %v5307
        %5372 = vst [vmem:[%s276 + $0x14] sm:$0xf] %v5308
        %5373 = vst [vmem:[%s276 + $0x18] sm:$0xf] %v5309
        %5374 = vst [vmem:[%s276 + $0x1c] sm:$0xf] %v5310
        %5375 = vst [vmem:[%s276 + $0x20] sm:$0xf] %v5311
        %5376 = vst [vmem:[%s276 + $0x24] sm:$0xf] %v5312
        %5377 = vst [vmem:[%s276 + $0x28] sm:$0xf] %v5313
        %5378 = vst [vmem:[%s276 + $0x2c] sm:$0xf] %v5314
        %5379 = vst [vmem:[%s276 + $0x30] sm:$0xf] %v5315
        %5380 = vst [vmem:[%s276 + $0x34] sm:$0xf] %v5316
        %5381 = vst [vmem:[%s276 + $0x38] sm:$0xf] %v5317
        %5382 = vst [vmem:[%s276 + $0x3c] sm:$0xf] %v5318
        %5383 = vst [vmem:[%s276 + $0x40] sm:$0xf] %v5319
        %5384 = vst [vmem:[%s276 + $0x44] sm:$0xf] %v5320
        %5385 = vst [vmem:[%s276 + $0x48] sm:$0xf] %v5321
        %5386 = vst [vmem:[%s276 + $0x4c] sm:$0xf] %v5322
        %5387 = vst [vmem:[%s276 + $0x50] sm:$0xf] %v5323
        %5388 = vst [vmem:[%s276 + $0x54] sm:$0xf] %v5324
        %5389 = vst [vmem:[%s276 + $0x58] sm:$0xf] %v5325
        %5390 = vst [vmem:[%s276 + $0x5c] sm:$0xf] %v5326
        %5391 = vst [vmem:[%s276 + $0x60] sm:$0xf] %v5327
        %5392 = vst [vmem:[%s276 + $0x64] sm:$0xf] %v5328
        %5393 = vst [vmem:[%s276 + $0x68] sm:$0xf] %v5329
        %5394 = vst [vmem:[%s276 + $0x6c] sm:$0xf] %v5330
        %5395 = vst [vmem:[%s276 + $0x70] sm:$0xf] %v5331
        %5396 = vst [vmem:[%s276 + $0x74] sm:$0xf] %v5332
        %5397 = vst [vmem:[%s276 + $0x78] sm:$0xf] %v5333
        %5398 = vst [vmem:[%s276 + $0x7c] sm:$0xf] %v5334
        %v5399 = vadd.f32 %v5207, %v5208
        %v5400 = vadd.f32 %v5399, %v5209
        %v5401 = vadd.f32 %v5400, %v5210
        %v5402 = vadd.f32 %v5401, %v5211
        %v5403 = vadd.f32 %v5402, %v5212
        %v5404 = vadd.f32 %v5403, %v5213
        %v5405 = vadd.f32 %v5404, %v5214
        %v5406 = vadd.f32 %v5405, %v5215
        %v5407 = vadd.f32 %v5406, %v5216
        %v5408 = vadd.f32 %v5407, %v5217
        %v5409 = vadd.f32 %v5408, %v5218
        %v5410 = vadd.f32 %v5409, %v5219
        %v5411 = vadd.f32 %v5410, %v5220
        %v5412 = vadd.f32 %v5411, %v5221
        %v5413 = vadd.f32 %v5412, %v5222
        %v5414 = vadd.f32 %v5413, %v5223
        %v5415 = vadd.f32 %v5414, %v5224
        %v5416 = vadd.f32 %v5415, %v5225
        %v5417 = vadd.f32 %v5416, %v5226
        %v5418 = vadd.f32 %v5417, %v5227
        %v5419 = vadd.f32 %v5418, %v5228
        %v5420 = vadd.f32 %v5419, %v5229
        %v5421 = vadd.f32 %v5420, %v5230
        %v5422 = vadd.f32 %v5421, %v5231
        %v5423 = vadd.f32 %v5422, %v5232
        %v5424 = vadd.f32 %v5423, %v5233
        %v5425 = vadd.f32 %v5424, %v5234
        %v5426 = vadd.f32 %v5425, %v5235
        %v5427 = vadd.f32 %v5426, %v5236
        %v5428 = vadd.f32 %v5427, %v5237
        %v5429 = vadd.f32 %v5428, %v5238
        %v5430 = vrot.slane %v5429, 4
        %v5431 = vadd.f32 %v5429, %v5430
        %v5432 = vrot.slane %v5431, 2
        %v5433 = vadd.f32 %v5431, %v5432
        %v5434 = vrot.slane %v5433, 1
        %v5435 = vadd.f32 %v5433, %v5434
        %v5436 = vmul.f32 %v5207, %v5207
        %v5437 = vmul.f32 %v5208, %v5208
        %v5438 = vmul.f32 %v5209, %v5209
        %v5439 = vmul.f32 %v5210, %v5210
        %v5440 = vmul.f32 %v5211, %v5211
        %v5441 = vmul.f32 %v5212, %v5212
        %v5442 = vmul.f32 %v5213, %v5213
        %v5443 = vmul.f32 %v5214, %v5214
        %v5444 = vmul.f32 %v5215, %v5215
        %v5445 = vmul.f32 %v5216, %v5216
        %v5446 = vmul.f32 %v5217, %v5217
        %v5447 = vmul.f32 %v5218, %v5218
        %v5448 = vmul.f32 %v5219, %v5219
        %v5449 = vmul.f32 %v5220, %v5220
        %v5450 = vmul.f32 %v5221, %v5221
        %v5451 = vmul.f32 %v5222, %v5222
        %v5452 = vmul.f32 %v5223, %v5223
        %v5453 = vmul.f32 %v5224, %v5224
        %v5454 = vmul.f32 %v5225, %v5225
        %v5455 = vmul.f32 %v5226, %v5226
        %v5456 = vmul.f32 %v5227, %v5227
        %v5457 = vmul.f32 %v5228, %v5228
        %v5458 = vmul.f32 %v5229, %v5229
        %v5459 = vmul.f32 %v5230, %v5230
        %v5460 = vmul.f32 %v5231, %v5231
        %v5461 = vmul.f32 %v5232, %v5232
        %v5462 = vmul.f32 %v5233, %v5233
        %v5463 = vmul.f32 %v5234, %v5234
        %v5464 = vmul.f32 %v5235, %v5235
        %v5465 = vmul.f32 %v5236, %v5236
        %v5466 = vmul.f32 %v5237, %v5237
        %v5467 = vmul.f32 %v5238, %v5238
        %v5468 = vadd.f32 %v5436, %v5437
        %v5469 = vadd.f32 %v5468, %v5438
        %v5470 = vadd.f32 %v5469, %v5439
        %v5471 = vadd.f32 %v5470, %v5440
        %v5472 = vadd.f32 %v5471, %v5441
        %v5473 = vadd.f32 %v5472, %v5442
        %v5474 = vadd.f32 %v5473, %v5443
        %v5475 = vadd.f32 %v5474, %v5444
        %v5476 = vadd.f32 %v5475, %v5445
        %v5477 = vadd.f32 %v5476, %v5446
        %v5478 = vadd.f32 %v5477, %v5447
        %v5479 = vadd.f32 %v5478, %v5448
        %v5480 = vadd.f32 %v5479, %v5449
        %v5481 = vadd.f32 %v5480, %v5450
        %v5482 = vadd.f32 %v5481, %v5451
        %v5483 = vadd.f32 %v5482, %v5452
        %v5484 = vadd.f32 %v5483, %v5453
        %v5485 = vadd.f32 %v5484, %v5454
        %v5486 = vadd.f32 %v5485, %v5455
        %v5487 = vadd.f32 %v5486, %v5456
        %v5488 = vadd.f32 %v5487, %v5457
        %v5489 = vadd.f32 %v5488, %v5458
        %v5490 = vadd.f32 %v5489, %v5459
        %v5491 = vadd.f32 %v5490, %v5460
        %v5492 = vadd.f32 %v5491, %v5461
        %v5493 = vadd.f32 %v5492, %v5462
        %v5494 = vadd.f32 %v5493, %v5463
        %v5495 = vadd.f32 %v5494, %v5464
        %v5496 = vadd.f32 %v5495, %v5465
        %v5497 = vadd.f32 %v5496, %v5466
        %v5498 = vadd.f32 %v5497, %v5467
        %v5499 = vrot.slane %v5498, 4
        %v5500 = vadd.f32 %v5498, %v5499
        %v5501 = vrot.slane %v5500, 2
        %v5502 = vadd.f32 %v5500, %v5501
        %v5503 = vrot.slane %v5502, 1
        %v5504 = vadd.f32 %v5502, %v5503
        %vm5505 = vcmask 1040384
        %v5506 = vsel %vm5505, %v5435, %v5504
        %5507 = vst [vmem:[%s283] sm:$0x3] %v5506
        %s5508 = sand.u32 %s125, 1
        %s5509 = scalar_lea.sflag [#allocation4], %s5508
        %s5510 = sand.u32 %s125, 1
        %s5511 = smul.addr %s5510, 128
        %s5512 = scalar_lea.vmem [#allocation3], %s5511
        %s5513 = sand.u32 %s153, 1
        %s5514 = scalar_lea.sflag [#allocation6], %s5513
        %s5515 = sand.u32 %s153, 1
        %s5516 = smul.addr %s5515, 2
        %s5517 = scalar_lea.vmem [#allocation5], %s5516
        // Predicated region
        $region33: #{tpu_custom_call.1} parent=31 // pred_check
          %p5518 = pneg %p135
        $region34: #{tpu_custom_call.1} parent=31 // pred_check_branch
          %5520 = sbr.rel (%p5518) target = $region36
        $region35: #{tpu_custom_call.1} parent=31 // pred_region
          %s5522 = ssub.s32 2048, 2048
          %5523 = vsyncadd %s5509, %s5522
          %s5524 = smul.addr %s27, 32
          %s5525 = smul.addr %s26, 32
          %s5526 = sadd.s32 %s5524, %s5525
          %s5527 = smul.addr %s5526, 64
          %s5528 = scalar_lea.hbm %s3, %s5527
          %s5529 = sshll.u32 %s5512, 4
          %s5530 = int_to_ptr.vmem [resolvable:$true] %s5529
          %5535 = dma.vmem_to_hbm [thread:$0]  %s5530, 2048, %s5528, %s5509, 64, 64, 4
        $region36: #{tpu_custom_call.1} parent=31 // pred_fallthru
          _
        // Predicated region
        $region37: #{tpu_custom_call.1} parent=31 // pred_check
          %p5536 = pneg %p163
        $region38: #{tpu_custom_call.1} parent=31 // pred_check_branch
          %5538 = sbr.rel (%p5536) target = $region40
        $region39: #{tpu_custom_call.1} parent=31 // pred_region
          %s5540 = ssub.s32 32, 32
          %5541 = vsyncadd %s5514, %s5540
          %s5542 = sadd.s32 %s27, %s26
          %s5543 = smul.addr %s5542, 32
          %s5544 = scalar_lea.hbm %s4, %s5543
          %s5546 = sshll.u32 %s5517, 4
          %s5547 = int_to_ptr.vmem [resolvable:$true] %s5546
          %5549 = dma.vmem_to_hbm [thread:$0]  %s5547, 32, %s5544, %s5514
        $region40: #{tpu_custom_call.1} parent=31 // pred_fallthru
          _
      $region32: #{tpu_custom_call.1} parent=5 // pred_fallthru
        _
      %p5550 = scmp.le.s32.totalorder 2, %s17
      // Predicated region
      $region41: #{tpu_custom_call.1} parent=5 // pred_check
        %p5551 = pneg %p5550
      $region42: #{tpu_custom_call.1} parent=5 // pred_check_branch
        %5553 = sbr.rel (%p5551) target = $region44
      $region43: #{tpu_custom_call.1} parent=5 // pred_region
        %s5554 = ssub.s32 %s17, 2
        // Predicated region
        $region45: #{tpu_custom_call.1} parent=43 // pred_check
          %p5555 = pneg %p141
        $region46: #{tpu_custom_call.1} parent=43 // pred_check_branch
          %5557 = sbr.rel (%p5555) target = $region48
        $region47: #{tpu_custom_call.1} parent=43 // pred_region
          %s5558 = sand.u32 %s126, 1
          %s5559 = scalar_lea.sflag [#allocation4], %s5558
          %s5560 = sand.u32 %s126, 1
          %s5561 = smul.addr %s5560, 128
          %s5562 = scalar_lea.vmem [#allocation3], %s5561
          %5563 = dma.done %s5559, 2048
        $region48: #{tpu_custom_call.1} parent=43 // pred_fallthru
          _
        // Predicated region
        $region49: #{tpu_custom_call.1} parent=43 // pred_check
          %p5564 = pneg %p169
        $region50: #{tpu_custom_call.1} parent=43 // pred_check_branch
          %5566 = sbr.rel (%p5564) target = $region52
        $region51: #{tpu_custom_call.1} parent=43 // pred_region
          %s5567 = sand.u32 %s154, 1
          %s5568 = scalar_lea.sflag [#allocation6], %s5567
          %s5569 = sand.u32 %s154, 1
          %s5570 = smul.addr %s5569, 2
          %s5571 = scalar_lea.vmem [#allocation5], %s5570
          %5572 = dma.done %s5568, 32
        $region52: #{tpu_custom_call.1} parent=43 // pred_fallthru
          _
      $region44: #{tpu_custom_call.1} parent=5 // pred_fallthru
        _
    $region6: #{tpu_custom_call.1} parent=1 // loop_footer
      %s21 = sadd.s32 1, %s17
    $region7: #{tpu_custom_call.1} parent=1 // loop_footer_branch
      %16 = sbr.rel target = $region3
    $region8: #{tpu_custom_call.1} parent=1 // loop_exit
      _
    %5573 = vsyncpa [#allocation4], 1
    %s5574 = scalar_lea.sflag [#allocation4], 1
    %5575 = vsyncpa %s5574, 1
    %5576 = vsyncpa [#allocation6], 1
    %s5577 = scalar_lea.sflag [#allocation6], 1
    %5578 = vsyncpa %s5577, 1

</llo_original>
